<compile_context>
chip_gen: v7x
topology: tpu7x:2x2x1
jax: 0.10.0
libtpu: 0.0.40
codegen_flags: <defaults>
</compile_context>

<pallas_src>
import functools

import jax
import jax.numpy as jnp
import numpy as np
from jax.experimental import pallas as pl
from jax.experimental.pallas import tpu as pltpu


def _lstm_fc_kernel(num_layers, hidden_pad, seq, batch,
                    x_ref, wih0_ref, b_ref, wrec_ref, fcw_ref, fcb_ref, out_ref):
    L, Hp, S, B = num_layers, hidden_pad, seq, batch
    G = 4 * Hp
    f32, bf16 = jnp.float32, jnp.bfloat16

    x = x_ref[...].astype(bf16)          # (B*S, In), batch-major rows (b*S + s)
    b_all = b_ref[...]                   # (L, G) f32, gate-prescaled biases
    wrec = wrec_ref[...]                 # (L*Hp, L*G) bf16, block-bidiagonal

    # Layer-0 input projection for every timestep at once (off the serial chain).
    xp = jnp.dot(x, wih0_ref[...], preferred_element_type=f32) + b_all[0:1, :]   # (B*S, G)
    # Gather per-step (B, G) rows; independent of the recurrence, hidden under slack.
    xp_t = [jnp.concatenate([xp[b * S + s:b * S + s + 1, :] for b in range(B)], axis=0)
            for s in range(S)]

    h = [jnp.zeros((B, Hp), f32) for _ in range(L)]
    c = [jnp.zeros((B, Hp), f32) for _ in range(L)]

    # Wavefront over (layer, step) anti-diagonals: wave w runs layer l at step s = w - l.
    for w in range(S + L - 1):
        lhs = (jnp.concatenate(h, axis=1) if L > 1 else h[0]).astype(bf16)    # (B, L*Hp)
        # One fused matmul per wave:
        #   z_all[:, l*G:(l+1)*G] = h[l-1] @ wih_l + h[l] @ whh_l   (all pre-scaled)
        z_all = jnp.dot(lhs, wrec, preferred_element_type=f32)                # (B, L*G)
        for l in range(L):
            s = w - l
            if not (0 <= s < S):
                continue
            z = z_all[:, l * G:(l + 1) * G] + (xp_t[s] if l == 0 else b_all[l:l + 1, :])
            # i/f/o columns hold x/2 (pre-scaled weights) -> sigmoid(x) = 0.5*tanh(x/2)+0.5.
            # One full-width tanh + tanh(c) are the only EUP ops on this chain.
            t = jnp.tanh(z)                                                    # (B, G)
            i_g = 0.5 * t[:, 0:Hp] + 0.5
            f_g = 0.5 * t[:, Hp:2 * Hp] + 0.5
            g_g = t[:, 2 * Hp:3 * Hp]
            o_g = 0.5 * t[:, 3 * Hp:4 * Hp] + 0.5
            c[l] = f_g * c[l] + i_g * g_g
            h[l] = o_g * jnp.tanh(c[l])

    # Final Linear on the last layer's last-step hidden state.
    # TODO(synk): pad/round num_keys to a multiple of 128 for a lane-dense store if the
    # head ever grows; at (2, 8) the masked store is negligible.
    out_ref[...] = (jnp.dot(h[L - 1].astype(bf16), fcw_ref[...],
                            preferred_element_type=f32)
                    + fcb_ref[...]).astype(out_ref.dtype)


def pack_params(params, *, hidden_size, num_layers, lane=128):
    """Build the lane-aligned, gate-prescaled, bf16 kernel operands (done once)."""
    H = hidden_size
    Hp = ((H + lane - 1) // lane) * lane
    G = 4 * Hp
    # Fold sigmoid(x) = 0.5*tanh(x/2)+0.5 pre-scale into the i/f/o gate columns.
    scale = np.concatenate([np.full(Hp, 0.5), np.full(Hp, 0.5),
                            np.ones(Hp), np.full(Hp, 0.5)]).astype(np.float32)

    def pad_gates(m):                      # (r, 4H) -> (r, G), gate blocks lane-aligned
        out = jnp.zeros((m.shape[0], G), jnp.float32)
        for g in range(4):
            out = out.at[:, g * Hp:g * Hp + H].set(m[:, g * H:(g + 1) * H])
        return out

    def pad_rows(m, rows):
        return jnp.zeros((rows, m.shape[1]), m.dtype).at[:m.shape[0], :].set(m)

    packed = {}
    packed["wih0"] = (pad_gates(params["wih_0"]) * scale).astype(jnp.bfloat16)      # (In, G)
    packed["b"] = jnp.stack([(pad_gates(params[f"b_{l}"]) * scale)[0]
                             for l in range(num_layers)])                           # (L, G)
    w_rec = jnp.zeros((num_layers * Hp, num_layers * G), jnp.float32)
    for l in range(num_layers):
        whh = pad_rows(pad_gates(params[f"whh_{l}"]) * scale, Hp)                   # (Hp, G)
        w_rec = w_rec.at[l * Hp:(l + 1) * Hp, l * G:(l + 1) * G].set(whh)
        if l + 1 < num_layers:
            wih_n = pad_rows(pad_gates(params[f"wih_{l + 1}"]) * scale, Hp)
            w_rec = w_rec.at[l * Hp:(l + 1) * Hp, (l + 1) * G:(l + 2) * G].set(wih_n)
    packed["w_rec"] = w_rec.astype(jnp.bfloat16)                                    # (L*Hp, L*G)
    packed["fc_w"] = pad_rows(params["fc_w"], Hp).astype(jnp.bfloat16)              # (Hp, K)
    packed["fc_b"] = params["fc_b"]                                                 # (1, K) f32
    return packed


def lstm_fc_forward(x, packed):
    """x: (batch, seq, input_size) f32 -> (batch, num_keys) f32."""
    B, S, In = x.shape
    L, G = packed["b"].shape
    Hp = packed["fc_w"].shape[0]
    K = packed["fc_b"].shape[1]
    x_flat = x.reshape(B * S, In)        # free reshape (no transpose dispatch)

    operands = [x_flat, packed["wih0"], packed["b"], packed["w_rec"],
                packed["fc_w"], packed["fc_b"]]
    in_specs = [pl.BlockSpec(a.shape, lambda i: (0, 0)) for a in operands]

    kernel = functools.partial(_lstm_fc_kernel, L, Hp, S, B)
    # TODO(synk): when batch grows, add a leading "parallel" batch grid axis so v7x's
    # second TensorCore splits the batch; at B=2 a single core is optimal.
    return pl.pallas_call(
        kernel,
        out_shape=jax.ShapeDtypeStruct((B, K), jnp.float32),
        grid_spec=pltpu.PrefetchScalarGridSpec(
            num_scalar_prefetch=0,
            grid=(1,),
            in_specs=in_specs,
            out_specs=pl.BlockSpec((B, K), lambda i: (0, 0))),
        compiler_params=pltpu.CompilerParams(
            dimension_semantics=("arbitrary",)),
    )(*operands)


def init_params(key, *, input_size, hidden_size, num_layers, num_keys):
    """PyTorch-style U(-1/sqrt(H), 1/sqrt(H)) init; gate-stacked [i, f, g, o] columns."""
    H = hidden_size
    k = 1.0 / np.sqrt(H)
    params = {}
    for l in range(num_layers):
        in_l = input_size if l == 0 else H
        key, k1, k2, k3, k4 = jax.random.split(key, 5)
        params[f"wih_{l}"] = jax.random.uniform(k1, (in_l, 4 * H), jnp.float32, -k, k)
        params[f"whh_{l}"] = jax.random.uniform(k2, (H, 4 * H), jnp.float32, -k, k)
        b_ih = jax.random.uniform(k3, (1, 4 * H), jnp.float32, -k, k)
        b_hh = jax.random.uniform(k4, (1, 4 * H), jnp.float32, -k, k)
        params[f"b_{l}"] = b_ih + b_hh          # PyTorch adds bias_ih + bias_hh
    key, k1, k2 = jax.random.split(key, 3)
    params["fc_w"] = jax.random.uniform(k1, (H, num_keys), jnp.float32, -k, k)
    params["fc_b"] = jax.random.uniform(k2, (1, num_keys), jnp.float32, -k, k)
    return params


def reference(x, params, *, num_layers, hidden_size):
    """Pure-JAX f32 reference of the stacked-LSTM + Linear forward."""
    B, S, _ = x.shape
    H = hidden_size
    h = [jnp.zeros((B, H), jnp.float32) for _ in range(num_layers)]
    c = [jnp.zeros((B, H), jnp.float32) for _ in range(num_layers)]
    inp = None
    for t in range(S):
        inp = x[:, t, :]
        for l in range(num_layers):
            z = inp @ params[f"wih_{l}"] + h[l] @ params[f"whh_{l}"] + params[f"b_{l}"]
            i_g = jax.nn.sigmoid(z[:, 0:H])
            f_g = jax.nn.sigmoid(z[:, H:2 * H])
            g_g = jnp.tanh(z[:, 2 * H:3 * H])
            o_g = jax.nn.sigmoid(z[:, 3 * H:4 * H])
            c[l] = f_g * c[l] + i_g * g_g
            h[l] = o_g * jnp.tanh(c[l])
            inp = h[l]
    return inp @ params["fc_w"] + params["fc_b"][0]


if __name__ == "__main__":
    # Model(input_size=16, hidden_size=32, num_layers=2, num_keys=8), x: (2, 8, 16)
    batch, seq, input_size = 2, 8, 16
    hidden_size, num_layers, num_keys = 32, 2, 8

    key = jax.random.PRNGKey(0)
    key, kx = jax.random.split(key)
    x = jax.random.normal(kx, (batch, seq, input_size), jnp.float32)
    params = init_params(key, input_size=input_size, hidden_size=hidden_size,
                         num_layers=num_layers, num_keys=num_keys)
    packed = pack_params(params, hidden_size=hidden_size, num_layers=num_layers)

    out = lstm_fc_forward(x, packed)
    out = jax.block_until_ready(out)

    ref = reference(x, params, num_layers=num_layers, hidden_size=hidden_size)
    # bf16 MXU operands (f32 accumulation / pointwise) -> loosened tolerance.
    np.testing.assert_allclose(np.asarray(out), np.asarray(ref), rtol=2e-2, atol=2e-2)

    print("KERNEL_OK")
</pallas_src>

<mosaic_0001>
module attributes {stable_mosaic.version = 11 : i64} {
  func.func @_lstm_fc_kernel(%arg0: i32, %arg1: memref<16x16xf32, #tpu.memory_space<vmem>>, %arg2: memref<16x512xbf16, #tpu.memory_space<vmem>>, %arg3: memref<2x512xf32, #tpu.memory_space<vmem>>, %arg4: memref<256x1024xbf16, #tpu.memory_space<vmem>>, %arg5: memref<128x8xbf16, #tpu.memory_space<vmem>>, %arg6: memref<1x8xf32, #tpu.memory_space<vmem>>, %arg7: memref<2x8xf32, #tpu.memory_space<vmem>>) attributes {dimension_semantics = [#tpu.dimension_semantics<arbitrary>], iteration_bounds = array<i64: 1>, scalar_prefetch = 0 : i64, scratch_operands = 0 : i64, tpu.core_type = #tpu.core_type<tc>, window_params = [{pipeline_mode = #tpu.pipeline_mode<synchronous>, transform_indices = @transform_0, window_bounds = array<i64: 16, 16>}, {pipeline_mode = #tpu.pipeline_mode<synchronous>, transform_indices = @transform_1, window_bounds = array<i64: 16, 512>}, {pipeline_mode = #tpu.pipeline_mode<synchronous>, transform_indices = @transform_2, window_bounds = array<i64: 2, 512>}, {pipeline_mode = #tpu.pipeline_mode<synchronous>, transform_indices = @transform_3, window_bounds = array<i64: 256, 1024>}, {pipeline_mode = #tpu.pipeline_mode<synchronous>, transform_indices = @transform_4, window_bounds = array<i64: 128, 8>}, {pipeline_mode = #tpu.pipeline_mode<synchronous>, transform_indices = @transform_5, window_bounds = array<i64: 1, 8>}, {pipeline_mode = #tpu.pipeline_mode<synchronous>, transform_indices = @transform_6, window_bounds = array<i64: 2, 8>}]} {
    %c0 = arith.constant 0 : index
    %c0_0 = arith.constant 0 : index
    %0 = vector.load %arg1[%c0, %c0_0] : memref<16x16xf32, #tpu.memory_space<vmem>>, vector<16x16xf32>
    %1 = arith.truncf %0 : vector<16x16xf32> to vector<16x16xbf16>
    %c0_1 = arith.constant 0 : index
    %c0_2 = arith.constant 0 : index
    %2 = vector.load %arg3[%c0_1, %c0_2] : memref<2x512xf32, #tpu.memory_space<vmem>>, vector<2x512xf32>
    %c0_3 = arith.constant 0 : index
    %c0_4 = arith.constant 0 : index
    %3 = vector.load %arg4[%c0_3, %c0_4] : memref<256x1024xbf16, #tpu.memory_space<vmem>>, vector<256x1024xbf16>
    %c0_5 = arith.constant 0 : index
    %c0_6 = arith.constant 0 : index
    %4 = vector.load %arg2[%c0_5, %c0_6] : memref<16x512xbf16, #tpu.memory_space<vmem>>, vector<16x512xbf16>
    %cst = arith.constant dense<0.000000e+00> : vector<16x512xf32>
    %5 = tpu.matmul %1, %4, %cst {dimension_numbers = #tpu.dot_dimension_numbers<[1], [0], [0], [1], [0, 0, 1, 1], [], []>} : vector<16x16xbf16>, vector<16x512xbf16>, vector<16x512xf32> -> vector<16x512xf32>
    %6 = vector.extract_strided_slice %2 {offsets = [0, 0], sizes = [1, 512], strides = [1, 1]} : vector<2x512xf32> to vector<1x512xf32>
    %7 = vector.broadcast %6 : vector<1x512xf32> to vector<16x512xf32>
    %8 = arith.addf %5, %7 : vector<16x512xf32>
    %9 = vector.extract_strided_slice %8 {offsets = [0, 0], sizes = [1, 512], strides = [1, 1]} : vector<16x512xf32> to vector<1x512xf32>
    %10 = vector.extract_strided_slice %8 {offsets = [8, 0], sizes = [1, 512], strides = [1, 1]} : vector<16x512xf32> to vector<1x512xf32>
    %11 = tpu.concatenate %9, %10 in 0 : vector<1x512xf32>, vector<1x512xf32> -> vector<2x512xf32>
    %12 = vector.extract_strided_slice %8 {offsets = [1, 0], sizes = [1, 512], strides = [1, 1]} : vector<16x512xf32> to vector<1x512xf32>
    %13 = vector.extract_strided_slice %8 {offsets = [9, 0], sizes = [1, 512], strides = [1, 1]} : vector<16x512xf32> to vector<1x512xf32>
    %14 = tpu.concatenate %12, %13 in 0 : vector<1x512xf32>, vector<1x512xf32> -> vector<2x512xf32>
    %15 = vector.extract_strided_slice %8 {offsets = [2, 0], sizes = [1, 512], strides = [1, 1]} : vector<16x512xf32> to vector<1x512xf32>
    %16 = vector.extract_strided_slice %8 {offsets = [10, 0], sizes = [1, 512], strides = [1, 1]} : vector<16x512xf32> to vector<1x512xf32>
    %17 = tpu.concatenate %15, %16 in 0 : vector<1x512xf32>, vector<1x512xf32> -> vector<2x512xf32>
    %18 = vector.extract_strided_slice %8 {offsets = [3, 0], sizes = [1, 512], strides = [1, 1]} : vector<16x512xf32> to vector<1x512xf32>
    %19 = vector.extract_strided_slice %8 {offsets = [11, 0], sizes = [1, 512], strides = [1, 1]} : vector<16x512xf32> to vector<1x512xf32>
    %20 = tpu.concatenate %18, %19 in 0 : vector<1x512xf32>, vector<1x512xf32> -> vector<2x512xf32>
    %21 = vector.extract_strided_slice %8 {offsets = [4, 0], sizes = [1, 512], strides = [1, 1]} : vector<16x512xf32> to vector<1x512xf32>
    %22 = vector.extract_strided_slice %8 {offsets = [12, 0], sizes = [1, 512], strides = [1, 1]} : vector<16x512xf32> to vector<1x512xf32>
    %23 = tpu.concatenate %21, %22 in 0 : vector<1x512xf32>, vector<1x512xf32> -> vector<2x512xf32>
    %24 = vector.extract_strided_slice %8 {offsets = [5, 0], sizes = [1, 512], strides = [1, 1]} : vector<16x512xf32> to vector<1x512xf32>
    %25 = vector.extract_strided_slice %8 {offsets = [13, 0], sizes = [1, 512], strides = [1, 1]} : vector<16x512xf32> to vector<1x512xf32>
    %26 = tpu.concatenate %24, %25 in 0 : vector<1x512xf32>, vector<1x512xf32> -> vector<2x512xf32>
    %27 = vector.extract_strided_slice %8 {offsets = [6, 0], sizes = [1, 512], strides = [1, 1]} : vector<16x512xf32> to vector<1x512xf32>
    %28 = vector.extract_strided_slice %8 {offsets = [14, 0], sizes = [1, 512], strides = [1, 1]} : vector<16x512xf32> to vector<1x512xf32>
    %29 = tpu.concatenate %27, %28 in 0 : vector<1x512xf32>, vector<1x512xf32> -> vector<2x512xf32>
    %30 = vector.extract_strided_slice %8 {offsets = [7, 0], sizes = [1, 512], strides = [1, 1]} : vector<16x512xf32> to vector<1x512xf32>
    %31 = vector.extract_strided_slice %8 {offsets = [15, 0], sizes = [1, 512], strides = [1, 1]} : vector<16x512xf32> to vector<1x512xf32>
    %32 = tpu.concatenate %30, %31 in 0 : vector<1x512xf32>, vector<1x512xf32> -> vector<2x512xf32>
    %cst_7 = arith.constant 0.000000e+00 : f32
    %33 = vector.broadcast %cst_7 : f32 to vector<2x128xf32>
    %cst_8 = arith.constant 0.000000e+00 : f32
    %34 = vector.broadcast %cst_8 : f32 to vector<2x128xf32>
    %cst_9 = arith.constant 0.000000e+00 : f32
    %35 = vector.broadcast %cst_9 : f32 to vector<2x128xf32>
    %cst_10 = arith.constant 0.000000e+00 : f32
    %36 = vector.broadcast %cst_10 : f32 to vector<2x128xf32>
    %37 = tpu.concatenate %33, %34 in 1 : vector<2x128xf32>, vector<2x128xf32> -> vector<2x256xf32>
    %38 = arith.truncf %37 : vector<2x256xf32> to vector<2x256xbf16>
    %cst_11 = arith.constant dense<0.000000e+00> : vector<2x1024xf32>
    %39 = tpu.matmul %38, %3, %cst_11 {dimension_numbers = #tpu.dot_dimension_numbers<[1], [0], [0], [1], [0, 0, 1, 1], [], []>} : vector<2x256xbf16>, vector<256x1024xbf16>, vector<2x1024xf32> -> vector<2x1024xf32>
    %40 = vector.extract_strided_slice %39 {offsets = [0, 0], sizes = [2, 512], strides = [1, 1]} : vector<2x1024xf32> to vector<2x512xf32>
    %41 = arith.addf %40, %11 : vector<2x512xf32>
    %42 = math.tanh %41 : vector<2x512xf32>
    %43 = vector.extract_strided_slice %42 {offsets = [0, 0], sizes = [2, 128], strides = [1, 1]} : vector<2x512xf32> to vector<2x128xf32>
    %cst_12 = arith.constant 5.000000e-01 : f32
    %44 = vector.broadcast %cst_12 : f32 to vector<2x128xf32>
    %45 = arith.mulf %44, %43 : vector<2x128xf32>
    %cst_13 = arith.constant 5.000000e-01 : f32
    %46 = vector.broadcast %cst_13 : f32 to vector<2x128xf32>
    %47 = arith.addf %45, %46 : vector<2x128xf32>
    %48 = vector.extract_strided_slice %42 {offsets = [0, 128], sizes = [2, 128], strides = [1, 1]} : vector<2x512xf32> to vector<2x128xf32>
    %cst_14 = arith.constant 5.000000e-01 : f32
    %49 = vector.broadcast %cst_14 : f32 to vector<2x128xf32>
    %50 = arith.mulf %49, %48 : vector<2x128xf32>
    %cst_15 = arith.constant 5.000000e-01 : f32
    %51 = vector.broadcast %cst_15 : f32 to vector<2x128xf32>
    %52 = arith.addf %50, %51 : vector<2x128xf32>
    %53 = vector.extract_strided_slice %42 {offsets = [0, 256], sizes = [2, 128], strides = [1, 1]} : vector<2x512xf32> to vector<2x128xf32>
    %54 = vector.extract_strided_slice %42 {offsets = [0, 384], sizes = [2, 128], strides = [1, 1]} : vector<2x512xf32> to vector<2x128xf32>
    %cst_16 = arith.constant 5.000000e-01 : f32
    %55 = vector.broadcast %cst_16 : f32 to vector<2x128xf32>
    %56 = arith.mulf %55, %54 : vector<2x128xf32>
    %cst_17 = arith.constant 5.000000e-01 : f32
    %57 = vector.broadcast %cst_17 : f32 to vector<2x128xf32>
    %58 = arith.addf %56, %57 : vector<2x128xf32>
    %59 = arith.mulf %52, %35 : vector<2x128xf32>
    %60 = arith.mulf %47, %53 : vector<2x128xf32>
    %61 = arith.addf %59, %60 : vector<2x128xf32>
    %62 = math.tanh %61 : vector<2x128xf32>
    %63 = arith.mulf %58, %62 : vector<2x128xf32>
    %64 = tpu.concatenate %63, %34 in 1 : vector<2x128xf32>, vector<2x128xf32> -> vector<2x256xf32>
    %65 = arith.truncf %64 : vector<2x256xf32> to vector<2x256xbf16>
    %cst_18 = arith.constant dense<0.000000e+00> : vector<2x1024xf32>
    %66 = tpu.matmul %65, %3, %cst_18 {dimension_numbers = #tpu.dot_dimension_numbers<[1], [0], [0], [1], [0, 0, 1, 1], [], []>} : vector<2x256xbf16>, vector<256x1024xbf16>, vector<2x1024xf32> -> vector<2x1024xf32>
    %67 = vector.extract_strided_slice %66 {offsets = [0, 0], sizes = [2, 512], strides = [1, 1]} : vector<2x1024xf32> to vector<2x512xf32>
    %68 = arith.addf %67, %14 : vector<2x512xf32>
    %69 = math.tanh %68 : vector<2x512xf32>
    %70 = vector.extract_strided_slice %69 {offsets = [0, 0], sizes = [2, 128], strides = [1, 1]} : vector<2x512xf32> to vector<2x128xf32>
    %cst_19 = arith.constant 5.000000e-01 : f32
    %71 = vector.broadcast %cst_19 : f32 to vector<2x128xf32>
    %72 = arith.mulf %71, %70 : vector<2x128xf32>
    %cst_20 = arith.constant 5.000000e-01 : f32
    %73 = vector.broadcast %cst_20 : f32 to vector<2x128xf32>
    %74 = arith.addf %72, %73 : vector<2x128xf32>
    %75 = vector.extract_strided_slice %69 {offsets = [0, 128], sizes = [2, 128], strides = [1, 1]} : vector<2x512xf32> to vector<2x128xf32>
    %cst_21 = arith.constant 5.000000e-01 : f32
    %76 = vector.broadcast %cst_21 : f32 to vector<2x128xf32>
    %77 = arith.mulf %76, %75 : vector<2x128xf32>
    %cst_22 = arith.constant 5.000000e-01 : f32
    %78 = vector.broadcast %cst_22 : f32 to vector<2x128xf32>
    %79 = arith.addf %77, %78 : vector<2x128xf32>
    %80 = vector.extract_strided_slice %69 {offsets = [0, 256], sizes = [2, 128], strides = [1, 1]} : vector<2x512xf32> to vector<2x128xf32>
    %81 = vector.extract_strided_slice %69 {offsets = [0, 384], sizes = [2, 128], strides = [1, 1]} : vector<2x512xf32> to vector<2x128xf32>
    %cst_23 = arith.constant 5.000000e-01 : f32
    %82 = vector.broadcast %cst_23 : f32 to vector<2x128xf32>
    %83 = arith.mulf %82, %81 : vector<2x128xf32>
    %cst_24 = arith.constant 5.000000e-01 : f32
    %84 = vector.broadcast %cst_24 : f32 to vector<2x128xf32>
    %85 = arith.addf %83, %84 : vector<2x128xf32>
    %86 = arith.mulf %79, %61 : vector<2x128xf32>
    %87 = arith.mulf %74, %80 : vector<2x128xf32>
    %88 = arith.addf %86, %87 : vector<2x128xf32>
    %89 = math.tanh %88 : vector<2x128xf32>
    %90 = arith.mulf %85, %89 : vector<2x128xf32>
    %91 = vector.extract_strided_slice %66 {offsets = [0, 512], sizes = [2, 512], strides = [1, 1]} : vector<2x1024xf32> to vector<2x512xf32>
    %92 = vector.extract_strided_slice %2 {offsets = [1, 0], sizes = [1, 512], strides = [1, 1]} : vector<2x512xf32> to vector<1x512xf32>
    %93 = vector.broadcast %92 : vector<1x512xf32> to vector<2x512xf32>
    %94 = arith.addf %91, %93 : vector<2x512xf32>
    %95 = math.tanh %94 : vector<2x512xf32>
    %96 = vector.extract_strided_slice %95 {offsets = [0, 0], sizes = [2, 128], strides = [1, 1]} : vector<2x512xf32> to vector<2x128xf32>
    %cst_25 = arith.constant 5.000000e-01 : f32
    %97 = vector.broadcast %cst_25 : f32 to vector<2x128xf32>
    %98 = arith.mulf %97, %96 : vector<2x128xf32>
    %cst_26 = arith.constant 5.000000e-01 : f32
    %99 = vector.broadcast %cst_26 : f32 to vector<2x128xf32>
    %100 = arith.addf %98, %99 : vector<2x128xf32>
    %101 = vector.extract_strided_slice %95 {offsets = [0, 128], sizes = [2, 128], strides = [1, 1]} : vector<2x512xf32> to vector<2x128xf32>
    %cst_27 = arith.constant 5.000000e-01 : f32
    %102 = vector.broadcast %cst_27 : f32 to vector<2x128xf32>
    %103 = arith.mulf %102, %101 : vector<2x128xf32>
    %cst_28 = arith.constant 5.000000e-01 : f32
    %104 = vector.broadcast %cst_28 : f32 to vector<2x128xf32>
    %105 = arith.addf %103, %104 : vector<2x128xf32>
    %106 = vector.extract_strided_slice %95 {offsets = [0, 256], sizes = [2, 128], strides = [1, 1]} : vector<2x512xf32> to vector<2x128xf32>
    %107 = vector.extract_strided_slice %95 {offsets = [0, 384], sizes = [2, 128], strides = [1, 1]} : vector<2x512xf32> to vector<2x128xf32>
    %cst_29 = arith.constant 5.000000e-01 : f32
    %108 = vector.broadcast %cst_29 : f32 to vector<2x128xf32>
    %109 = arith.mulf %108, %107 : vector<2x128xf32>
    %cst_30 = arith.constant 5.000000e-01 : f32
    %110 = vector.broadcast %cst_30 : f32 to vector<2x128xf32>
    %111 = arith.addf %109, %110 : vector<2x128xf32>
    %112 = arith.mulf %105, %36 : vector<2x128xf32>
    %113 = arith.mulf %100, %106 : vector<2x128xf32>
    %114 = arith.addf %112, %113 : vector<2x128xf32>
    %115 = math.tanh %114 : vector<2x128xf32>
    %116 = arith.mulf %111, %115 : vector<2x128xf32>
    %117 = tpu.concatenate %90, %116 in 1 : vector<2x128xf32>, vector<2x128xf32> -> vector<2x256xf32>
    %118 = arith.truncf %117 : vector<2x256xf32> to vector<2x256xbf16>
    %cst_31 = arith.constant dense<0.000000e+00> : vector<2x1024xf32>
    %119 = tpu.matmul %118, %3, %cst_31 {dimension_numbers = #tpu.dot_dimension_numbers<[1], [0], [0], [1], [0, 0, 1, 1], [], []>} : vector<2x256xbf16>, vector<256x1024xbf16>, vector<2x1024xf32> -> vector<2x1024xf32>
    %120 = vector.extract_strided_slice %119 {offsets = [0, 0], sizes = [2, 512], strides = [1, 1]} : vector<2x1024xf32> to vector<2x512xf32>
    %121 = arith.addf %120, %17 : vector<2x512xf32>
    %122 = math.tanh %121 : vector<2x512xf32>
    %123 = vector.extract_strided_slice %122 {offsets = [0, 0], sizes = [2, 128], strides = [1, 1]} : vector<2x512xf32> to vector<2x128xf32>
    %cst_32 = arith.constant 5.000000e-01 : f32
    %124 = vector.broadcast %cst_32 : f32 to vector<2x128xf32>
    %125 = arith.mulf %124, %123 : vector<2x128xf32>
    %cst_33 = arith.constant 5.000000e-01 : f32
    %126 = vector.broadcast %cst_33 : f32 to vector<2x128xf32>
    %127 = arith.addf %125, %126 : vector<2x128xf32>
    %128 = vector.extract_strided_slice %122 {offsets = [0, 128], sizes = [2, 128], strides = [1, 1]} : vector<2x512xf32> to vector<2x128xf32>
    %cst_34 = arith.constant 5.000000e-01 : f32
    %129 = vector.broadcast %cst_34 : f32 to vector<2x128xf32>
    %130 = arith.mulf %129, %128 : vector<2x128xf32>
    %cst_35 = arith.constant 5.000000e-01 : f32
    %131 = vector.broadcast %cst_35 : f32 to vector<2x128xf32>
    %132 = arith.addf %130, %131 : vector<2x128xf32>
    %133 = vector.extract_strided_slice %122 {offsets = [0, 256], sizes = [2, 128], strides = [1, 1]} : vector<2x512xf32> to vector<2x128xf32>
    %134 = vector.extract_strided_slice %122 {offsets = [0, 384], sizes = [2, 128], strides = [1, 1]} : vector<2x512xf32> to vector<2x128xf32>
    %cst_36 = arith.constant 5.000000e-01 : f32
    %135 = vector.broadcast %cst_36 : f32 to vector<2x128xf32>
    %136 = arith.mulf %135, %134 : vector<2x128xf32>
    %cst_37 = arith.constant 5.000000e-01 : f32
    %137 = vector.broadcast %cst_37 : f32 to vector<2x128xf32>
    %138 = arith.addf %136, %137 : vector<2x128xf32>
    %139 = arith.mulf %132, %88 : vector<2x128xf32>
    %140 = arith.mulf %127, %133 : vector<2x128xf32>
    %141 = arith.addf %139, %140 : vector<2x128xf32>
    %142 = math.tanh %141 : vector<2x128xf32>
    %143 = arith.mulf %138, %142 : vector<2x128xf32>
    %144 = vector.extract_strided_slice %119 {offsets = [0, 512], sizes = [2, 512], strides = [1, 1]} : vector<2x1024xf32> to vector<2x512xf32>
    %145 = vector.extract_strided_slice %2 {offsets = [1, 0], sizes = [1, 512], strides = [1, 1]} : vector<2x512xf32> to vector<1x512xf32>
    %146 = vector.broadcast %145 : vector<1x512xf32> to vector<2x512xf32>
    %147 = arith.addf %144, %146 : vector<2x512xf32>
    %148 = math.tanh %147 : vector<2x512xf32>
    %149 = vector.extract_strided_slice %148 {offsets = [0, 0], sizes = [2, 128], strides = [1, 1]} : vector<2x512xf32> to vector<2x128xf32>
    %cst_38 = arith.constant 5.000000e-01 : f32
    %150 = vector.broadcast %cst_38 : f32 to vector<2x128xf32>
    %151 = arith.mulf %150, %149 : vector<2x128xf32>
    %cst_39 = arith.constant 5.000000e-01 : f32
    %152 = vector.broadcast %cst_39 : f32 to vector<2x128xf32>
    %153 = arith.addf %151, %152 : vector<2x128xf32>
    %154 = vector.extract_strided_slice %148 {offsets = [0, 128], sizes = [2, 128], strides = [1, 1]} : vector<2x512xf32> to vector<2x128xf32>
    %cst_40 = arith.constant 5.000000e-01 : f32
    %155 = vector.broadcast %cst_40 : f32 to vector<2x128xf32>
    %156 = arith.mulf %155, %154 : vector<2x128xf32>
    %cst_41 = arith.constant 5.000000e-01 : f32
    %157 = vector.broadcast %cst_41 : f32 to vector<2x128xf32>
    %158 = arith.addf %156, %157 : vector<2x128xf32>
    %159 = vector.extract_strided_slice %148 {offsets = [0, 256], sizes = [2, 128], strides = [1, 1]} : vector<2x512xf32> to vector<2x128xf32>
    %160 = vector.extract_strided_slice %148 {offsets = [0, 384], sizes = [2, 128], strides = [1, 1]} : vector<2x512xf32> to vector<2x128xf32>
    %cst_42 = arith.constant 5.000000e-01 : f32
    %161 = vector.broadcast %cst_42 : f32 to vector<2x128xf32>
    %162 = arith.mulf %161, %160 : vector<2x128xf32>
    %cst_43 = arith.constant 5.000000e-01 : f32
    %163 = vector.broadcast %cst_43 : f32 to vector<2x128xf32>
    %164 = arith.addf %162, %163 : vector<2x128xf32>
    %165 = arith.mulf %158, %114 : vector<2x128xf32>
    %166 = arith.mulf %153, %159 : vector<2x128xf32>
    %167 = arith.addf %165, %166 : vector<2x128xf32>
    %168 = math.tanh %167 : vector<2x128xf32>
    %169 = arith.mulf %164, %168 : vector<2x128xf32>
    %170 = tpu.concatenate %143, %169 in 1 : vector<2x128xf32>, vector<2x128xf32> -> vector<2x256xf32>
    %171 = arith.truncf %170 : vector<2x256xf32> to vector<2x256xbf16>
    %cst_44 = arith.constant dense<0.000000e+00> : vector<2x1024xf32>
    %172 = tpu.matmul %171, %3, %cst_44 {dimension_numbers = #tpu.dot_dimension_numbers<[1], [0], [0], [1], [0, 0, 1, 1], [], []>} : vector<2x256xbf16>, vector<256x1024xbf16>, vector<2x1024xf32> -> vector<2x1024xf32>
    %173 = vector.extract_strided_slice %172 {offsets = [0, 0], sizes = [2, 512], strides = [1, 1]} : vector<2x1024xf32> to vector<2x512xf32>
    %174 = arith.addf %173, %20 : vector<2x512xf32>
    %175 = math.tanh %174 : vector<2x512xf32>
    %176 = vector.extract_strided_slice %175 {offsets = [0, 0], sizes = [2, 128], strides = [1, 1]} : vector<2x512xf32> to vector<2x128xf32>
    %cst_45 = arith.constant 5.000000e-01 : f32
    %177 = vector.broadcast %cst_45 : f32 to vector<2x128xf32>
    %178 = arith.mulf %177, %176 : vector<2x128xf32>
    %cst_46 = arith.constant 5.000000e-01 : f32
    %179 = vector.broadcast %cst_46 : f32 to vector<2x128xf32>
    %180 = arith.addf %178, %179 : vector<2x128xf32>
    %181 = vector.extract_strided_slice %175 {offsets = [0, 128], sizes = [2, 128], strides = [1, 1]} : vector<2x512xf32> to vector<2x128xf32>
    %cst_47 = arith.constant 5.000000e-01 : f32
    %182 = vector.broadcast %cst_47 : f32 to vector<2x128xf32>
    %183 = arith.mulf %182, %181 : vector<2x128xf32>
    %cst_48 = arith.constant 5.000000e-01 : f32
    %184 = vector.broadcast %cst_48 : f32 to vector<2x128xf32>
    %185 = arith.addf %183, %184 : vector<2x128xf32>
    %186 = vector.extract_strided_slice %175 {offsets = [0, 256], sizes = [2, 128], strides = [1, 1]} : vector<2x512xf32> to vector<2x128xf32>
    %187 = vector.extract_strided_slice %175 {offsets = [0, 384], sizes = [2, 128], strides = [1, 1]} : vector<2x512xf32> to vector<2x128xf32>
    %cst_49 = arith.constant 5.000000e-01 : f32
    %188 = vector.broadcast %cst_49 : f32 to vector<2x128xf32>
    %189 = arith.mulf %188, %187 : vector<2x128xf32>
    %cst_50 = arith.constant 5.000000e-01 : f32
    %190 = vector.broadcast %cst_50 : f32 to vector<2x128xf32>
    %191 = arith.addf %189, %190 : vector<2x128xf32>
    %192 = arith.mulf %185, %141 : vector<2x128xf32>
    %193 = arith.mulf %180, %186 : vector<2x128xf32>
    %194 = arith.addf %192, %193 : vector<2x128xf32>
    %195 = math.tanh %194 : vector<2x128xf32>
    %196 = arith.mulf %191, %195 : vector<2x128xf32>
    %197 = vector.extract_strided_slice %172 {offsets = [0, 512], sizes = [2, 512], strides = [1, 1]} : vector<2x1024xf32> to vector<2x512xf32>
    %198 = vector.extract_strided_slice %2 {offsets = [1, 0], sizes = [1, 512], strides = [1, 1]} : vector<2x512xf32> to vector<1x512xf32>
    %199 = vector.broadcast %198 : vector<1x512xf32> to vector<2x512xf32>
    %200 = arith.addf %197, %199 : vector<2x512xf32>
    %201 = math.tanh %200 : vector<2x512xf32>
    %202 = vector.extract_strided_slice %201 {offsets = [0, 0], sizes = [2, 128], strides = [1, 1]} : vector<2x512xf32> to vector<2x128xf32>
    %cst_51 = arith.constant 5.000000e-01 : f32
    %203 = vector.broadcast %cst_51 : f32 to vector<2x128xf32>
    %204 = arith.mulf %203, %202 : vector<2x128xf32>
    %cst_52 = arith.constant 5.000000e-01 : f32
    %205 = vector.broadcast %cst_52 : f32 to vector<2x128xf32>
    %206 = arith.addf %204, %205 : vector<2x128xf32>
    %207 = vector.extract_strided_slice %201 {offsets = [0, 128], sizes = [2, 128], strides = [1, 1]} : vector<2x512xf32> to vector<2x128xf32>
    %cst_53 = arith.constant 5.000000e-01 : f32
    %208 = vector.broadcast %cst_53 : f32 to vector<2x128xf32>
    %209 = arith.mulf %208, %207 : vector<2x128xf32>
    %cst_54 = arith.constant 5.000000e-01 : f32
    %210 = vector.broadcast %cst_54 : f32 to vector<2x128xf32>
    %211 = arith.addf %209, %210 : vector<2x128xf32>
    %212 = vector.extract_strided_slice %201 {offsets = [0, 256], sizes = [2, 128], strides = [1, 1]} : vector<2x512xf32> to vector<2x128xf32>
    %213 = vector.extract_strided_slice %201 {offsets = [0, 384], sizes = [2, 128], strides = [1, 1]} : vector<2x512xf32> to vector<2x128xf32>
    %cst_55 = arith.constant 5.000000e-01 : f32
    %214 = vector.broadcast %cst_55 : f32 to vector<2x128xf32>
    %215 = arith.mulf %214, %213 : vector<2x128xf32>
    %cst_56 = arith.constant 5.000000e-01 : f32
    %216 = vector.broadcast %cst_56 : f32 to vector<2x128xf32>
    %217 = arith.addf %215, %216 : vector<2x128xf32>
    %218 = arith.mulf %211, %167 : vector<2x128xf32>
    %219 = arith.mulf %206, %212 : vector<2x128xf32>
    %220 = arith.addf %218, %219 : vector<2x128xf32>
    %221 = math.tanh %220 : vector<2x128xf32>
    %222 = arith.mulf %217, %221 : vector<2x128xf32>
    %223 = tpu.concatenate %196, %222 in 1 : vector<2x128xf32>, vector<2x128xf32> -> vector<2x256xf32>
    %224 = arith.truncf %223 : vector<2x256xf32> to vector<2x256xbf16>
    %cst_57 = arith.constant dense<0.000000e+00> : vector<2x1024xf32>
    %225 = tpu.matmul %224, %3, %cst_57 {dimension_numbers = #tpu.dot_dimension_numbers<[1], [0], [0], [1], [0, 0, 1, 1], [], []>} : vector<2x256xbf16>, vector<256x1024xbf16>, vector<2x1024xf32> -> vector<2x1024xf32>
    %226 = vector.extract_strided_slice %225 {offsets = [0, 0], sizes = [2, 512], strides = [1, 1]} : vector<2x1024xf32> to vector<2x512xf32>
    %227 = arith.addf %226, %23 : vector<2x512xf32>
    %228 = math.tanh %227 : vector<2x512xf32>
    %229 = vector.extract_strided_slice %228 {offsets = [0, 0], sizes = [2, 128], strides = [1, 1]} : vector<2x512xf32> to vector<2x128xf32>
    %cst_58 = arith.constant 5.000000e-01 : f32
    %230 = vector.broadcast %cst_58 : f32 to vector<2x128xf32>
    %231 = arith.mulf %230, %229 : vector<2x128xf32>
    %cst_59 = arith.constant 5.000000e-01 : f32
    %232 = vector.broadcast %cst_59 : f32 to vector<2x128xf32>
    %233 = arith.addf %231, %232 : vector<2x128xf32>
    %234 = vector.extract_strided_slice %228 {offsets = [0, 128], sizes = [2, 128], strides = [1, 1]} : vector<2x512xf32> to vector<2x128xf32>
    %cst_60 = arith.constant 5.000000e-01 : f32
    %235 = vector.broadcast %cst_60 : f32 to vector<2x128xf32>
    %236 = arith.mulf %235, %234 : vector<2x128xf32>
    %cst_61 = arith.constant 5.000000e-01 : f32
    %237 = vector.broadcast %cst_61 : f32 to vector<2x128xf32>
    %238 = arith.addf %236, %237 : vector<2x128xf32>
    %239 = vector.extract_strided_slice %228 {offsets = [0, 256], sizes = [2, 128], strides = [1, 1]} : vector<2x512xf32> to vector<2x128xf32>
    %240 = vector.extract_strided_slice %228 {offsets = [0, 384], sizes = [2, 128], strides = [1, 1]} : vector<2x512xf32> to vector<2x128xf32>
    %cst_62 = arith.constant 5.000000e-01 : f32
    %241 = vector.broadcast %cst_62 : f32 to vector<2x128xf32>
    %242 = arith.mulf %241, %240 : vector<2x128xf32>
    %cst_63 = arith.constant 5.000000e-01 : f32
    %243 = vector.broadcast %cst_63 : f32 to vector<2x128xf32>
    %244 = arith.addf %242, %243 : vector<2x128xf32>
    %245 = arith.mulf %238, %194 : vector<2x128xf32>
    %246 = arith.mulf %233, %239 : vector<2x128xf32>
    %247 = arith.addf %245, %246 : vector<2x128xf32>
    %248 = math.tanh %247 : vector<2x128xf32>
    %249 = arith.mulf %244, %248 : vector<2x128xf32>
    %250 = vector.extract_strided_slice %225 {offsets = [0, 512], sizes = [2, 512], strides = [1, 1]} : vector<2x1024xf32> to vector<2x512xf32>
    %251 = vector.extract_strided_slice %2 {offsets = [1, 0], sizes = [1, 512], strides = [1, 1]} : vector<2x512xf32> to vector<1x512xf32>
    %252 = vector.broadcast %251 : vector<1x512xf32> to vector<2x512xf32>
    %253 = arith.addf %250, %252 : vector<2x512xf32>
    %254 = math.tanh %253 : vector<2x512xf32>
    %255 = vector.extract_strided_slice %254 {offsets = [0, 0], sizes = [2, 128], strides = [1, 1]} : vector<2x512xf32> to vector<2x128xf32>
    %cst_64 = arith.constant 5.000000e-01 : f32
    %256 = vector.broadcast %cst_64 : f32 to vector<2x128xf32>
    %257 = arith.mulf %256, %255 : vector<2x128xf32>
    %cst_65 = arith.constant 5.000000e-01 : f32
    %258 = vector.broadcast %cst_65 : f32 to vector<2x128xf32>
    %259 = arith.addf %257, %258 : vector<2x128xf32>
    %260 = vector.extract_strided_slice %254 {offsets = [0, 128], sizes = [2, 128], strides = [1, 1]} : vector<2x512xf32> to vector<2x128xf32>
    %cst_66 = arith.constant 5.000000e-01 : f32
    %261 = vector.broadcast %cst_66 : f32 to vector<2x128xf32>
    %262 = arith.mulf %261, %260 : vector<2x128xf32>
    %cst_67 = arith.constant 5.000000e-01 : f32
    %263 = vector.broadcast %cst_67 : f32 to vector<2x128xf32>
    %264 = arith.addf %262, %263 : vector<2x128xf32>
    %265 = vector.extract_strided_slice %254 {offsets = [0, 256], sizes = [2, 128], strides = [1, 1]} : vector<2x512xf32> to vector<2x128xf32>
    %266 = vector.extract_strided_slice %254 {offsets = [0, 384], sizes = [2, 128], strides = [1, 1]} : vector<2x512xf32> to vector<2x128xf32>
    %cst_68 = arith.constant 5.000000e-01 : f32
    %267 = vector.broadcast %cst_68 : f32 to vector<2x128xf32>
    %268 = arith.mulf %267, %266 : vector<2x128xf32>
    %cst_69 = arith.constant 5.000000e-01 : f32
    %269 = vector.broadcast %cst_69 : f32 to vector<2x128xf32>
    %270 = arith.addf %268, %269 : vector<2x128xf32>
    %271 = arith.mulf %264, %220 : vector<2x128xf32>
    %272 = arith.mulf %259, %265 : vector<2x128xf32>
    %273 = arith.addf %271, %272 : vector<2x128xf32>
    %274 = math.tanh %273 : vector<2x128xf32>
    %275 = arith.mulf %270, %274 : vector<2x128xf32>
    %276 = tpu.concatenate %249, %275 in 1 : vector<2x128xf32>, vector<2x128xf32> -> vector<2x256xf32>
    %277 = arith.truncf %276 : vector<2x256xf32> to vector<2x256xbf16>
    %cst_70 = arith.constant dense<0.000000e+00> : vector<2x1024xf32>
    %278 = tpu.matmul %277, %3, %cst_70 {dimension_numbers = #tpu.dot_dimension_numbers<[1], [0], [0], [1], [0, 0, 1, 1], [], []>} : vector<2x256xbf16>, vector<256x1024xbf16>, vector<2x1024xf32> -> vector<2x1024xf32>
    %279 = vector.extract_strided_slice %278 {offsets = [0, 0], sizes = [2, 512], strides = [1, 1]} : vector<2x1024xf32> to vector<2x512xf32>
    %280 = arith.addf %279, %26 : vector<2x512xf32>
    %281 = math.tanh %280 : vector<2x512xf32>
    %282 = vector.extract_strided_slice %281 {offsets = [0, 0], sizes = [2, 128], strides = [1, 1]} : vector<2x512xf32> to vector<2x128xf32>
    %cst_71 = arith.constant 5.000000e-01 : f32
    %283 = vector.broadcast %cst_71 : f32 to vector<2x128xf32>
    %284 = arith.mulf %283, %282 : vector<2x128xf32>
    %cst_72 = arith.constant 5.000000e-01 : f32
    %285 = vector.broadcast %cst_72 : f32 to vector<2x128xf32>
    %286 = arith.addf %284, %285 : vector<2x128xf32>
    %287 = vector.extract_strided_slice %281 {offsets = [0, 128], sizes = [2, 128], strides = [1, 1]} : vector<2x512xf32> to vector<2x128xf32>
    %cst_73 = arith.constant 5.000000e-01 : f32
    %288 = vector.broadcast %cst_73 : f32 to vector<2x128xf32>
    %289 = arith.mulf %288, %287 : vector<2x128xf32>
    %cst_74 = arith.constant 5.000000e-01 : f32
    %290 = vector.broadcast %cst_74 : f32 to vector<2x128xf32>
    %291 = arith.addf %289, %290 : vector<2x128xf32>
    %292 = vector.extract_strided_slice %281 {offsets = [0, 256], sizes = [2, 128], strides = [1, 1]} : vector<2x512xf32> to vector<2x128xf32>
    %293 = vector.extract_strided_slice %281 {offsets = [0, 384], sizes = [2, 128], strides = [1, 1]} : vector<2x512xf32> to vector<2x128xf32>
    %cst_75 = arith.constant 5.000000e-01 : f32
    %294 = vector.broadcast %cst_75 : f32 to vector<2x128xf32>
    %295 = arith.mulf %294, %293 : vector<2x128xf32>
    %cst_76 = arith.constant 5.000000e-01 : f32
    %296 = vector.broadcast %cst_76 : f32 to vector<2x128xf32>
    %297 = arith.addf %295, %296 : vector<2x128xf32>
    %298 = arith.mulf %291, %247 : vector<2x128xf32>
    %299 = arith.mulf %286, %292 : vector<2x128xf32>
    %300 = arith.addf %298, %299 : vector<2x128xf32>
    %301 = math.tanh %300 : vector<2x128xf32>
    %302 = arith.mulf %297, %301 : vector<2x128xf32>
    %303 = vector.extract_strided_slice %278 {offsets = [0, 512], sizes = [2, 512], strides = [1, 1]} : vector<2x1024xf32> to vector<2x512xf32>
    %304 = vector.extract_strided_slice %2 {offsets = [1, 0], sizes = [1, 512], strides = [1, 1]} : vector<2x512xf32> to vector<1x512xf32>
    %305 = vector.broadcast %304 : vector<1x512xf32> to vector<2x512xf32>
    %306 = arith.addf %303, %305 : vector<2x512xf32>
    %307 = math.tanh %306 : vector<2x512xf32>
    %308 = vector.extract_strided_slice %307 {offsets = [0, 0], sizes = [2, 128], strides = [1, 1]} : vector<2x512xf32> to vector<2x128xf32>
    %cst_77 = arith.constant 5.000000e-01 : f32
    %309 = vector.broadcast %cst_77 : f32 to vector<2x128xf32>
    %310 = arith.mulf %309, %308 : vector<2x128xf32>
    %cst_78 = arith.constant 5.000000e-01 : f32
    %311 = vector.broadcast %cst_78 : f32 to vector<2x128xf32>
    %312 = arith.addf %310, %311 : vector<2x128xf32>
    %313 = vector.extract_strided_slice %307 {offsets = [0, 128], sizes = [2, 128], strides = [1, 1]} : vector<2x512xf32> to vector<2x128xf32>
    %cst_79 = arith.constant 5.000000e-01 : f32
    %314 = vector.broadcast %cst_79 : f32 to vector<2x128xf32>
    %315 = arith.mulf %314, %313 : vector<2x128xf32>
    %cst_80 = arith.constant 5.000000e-01 : f32
    %316 = vector.broadcast %cst_80 : f32 to vector<2x128xf32>
    %317 = arith.addf %315, %316 : vector<2x128xf32>
    %318 = vector.extract_strided_slice %307 {offsets = [0, 256], sizes = [2, 128], strides = [1, 1]} : vector<2x512xf32> to vector<2x128xf32>
    %319 = vector.extract_strided_slice %307 {offsets = [0, 384], sizes = [2, 128], strides = [1, 1]} : vector<2x512xf32> to vector<2x128xf32>
    %cst_81 = arith.constant 5.000000e-01 : f32
    %320 = vector.broadcast %cst_81 : f32 to vector<2x128xf32>
    %321 = arith.mulf %320, %319 : vector<2x128xf32>
    %cst_82 = arith.constant 5.000000e-01 : f32
    %322 = vector.broadcast %cst_82 : f32 to vector<2x128xf32>
    %323 = arith.addf %321, %322 : vector<2x128xf32>
    %324 = arith.mulf %317, %273 : vector<2x128xf32>
    %325 = arith.mulf %312, %318 : vector<2x128xf32>
    %326 = arith.addf %324, %325 : vector<2x128xf32>
    %327 = math.tanh %326 : vector<2x128xf32>
    %328 = arith.mulf %323, %327 : vector<2x128xf32>
    %329 = tpu.concatenate %302, %328 in 1 : vector<2x128xf32>, vector<2x128xf32> -> vector<2x256xf32>
    %330 = arith.truncf %329 : vector<2x256xf32> to vector<2x256xbf16>
    %cst_83 = arith.constant dense<0.000000e+00> : vector<2x1024xf32>
    %331 = tpu.matmul %330, %3, %cst_83 {dimension_numbers = #tpu.dot_dimension_numbers<[1], [0], [0], [1], [0, 0, 1, 1], [], []>} : vector<2x256xbf16>, vector<256x1024xbf16>, vector<2x1024xf32> -> vector<2x1024xf32>
    %332 = vector.extract_strided_slice %331 {offsets = [0, 0], sizes = [2, 512], strides = [1, 1]} : vector<2x1024xf32> to vector<2x512xf32>
    %333 = arith.addf %332, %29 : vector<2x512xf32>
    %334 = math.tanh %333 : vector<2x512xf32>
    %335 = vector.extract_strided_slice %334 {offsets = [0, 0], sizes = [2, 128], strides = [1, 1]} : vector<2x512xf32> to vector<2x128xf32>
    %cst_84 = arith.constant 5.000000e-01 : f32
    %336 = vector.broadcast %cst_84 : f32 to vector<2x128xf32>
    %337 = arith.mulf %336, %335 : vector<2x128xf32>
    %cst_85 = arith.constant 5.000000e-01 : f32
    %338 = vector.broadcast %cst_85 : f32 to vector<2x128xf32>
    %339 = arith.addf %337, %338 : vector<2x128xf32>
    %340 = vector.extract_strided_slice %334 {offsets = [0, 128], sizes = [2, 128], strides = [1, 1]} : vector<2x512xf32> to vector<2x128xf32>
    %cst_86 = arith.constant 5.000000e-01 : f32
    %341 = vector.broadcast %cst_86 : f32 to vector<2x128xf32>
    %342 = arith.mulf %341, %340 : vector<2x128xf32>
    %cst_87 = arith.constant 5.000000e-01 : f32
    %343 = vector.broadcast %cst_87 : f32 to vector<2x128xf32>
    %344 = arith.addf %342, %343 : vector<2x128xf32>
    %345 = vector.extract_strided_slice %334 {offsets = [0, 256], sizes = [2, 128], strides = [1, 1]} : vector<2x512xf32> to vector<2x128xf32>
    %346 = vector.extract_strided_slice %334 {offsets = [0, 384], sizes = [2, 128], strides = [1, 1]} : vector<2x512xf32> to vector<2x128xf32>
    %cst_88 = arith.constant 5.000000e-01 : f32
    %347 = vector.broadcast %cst_88 : f32 to vector<2x128xf32>
    %348 = arith.mulf %347, %346 : vector<2x128xf32>
    %cst_89 = arith.constant 5.000000e-01 : f32
    %349 = vector.broadcast %cst_89 : f32 to vector<2x128xf32>
    %350 = arith.addf %348, %349 : vector<2x128xf32>
    %351 = arith.mulf %344, %300 : vector<2x128xf32>
    %352 = arith.mulf %339, %345 : vector<2x128xf32>
    %353 = arith.addf %351, %352 : vector<2x128xf32>
    %354 = math.tanh %353 : vector<2x128xf32>
    %355 = arith.mulf %350, %354 : vector<2x128xf32>
    %356 = vector.extract_strided_slice %331 {offsets = [0, 512], sizes = [2, 512], strides = [1, 1]} : vector<2x1024xf32> to vector<2x512xf32>
    %357 = vector.extract_strided_slice %2 {offsets = [1, 0], sizes = [1, 512], strides = [1, 1]} : vector<2x512xf32> to vector<1x512xf32>
    %358 = vector.broadcast %357 : vector<1x512xf32> to vector<2x512xf32>
    %359 = arith.addf %356, %358 : vector<2x512xf32>
    %360 = math.tanh %359 : vector<2x512xf32>
    %361 = vector.extract_strided_slice %360 {offsets = [0, 0], sizes = [2, 128], strides = [1, 1]} : vector<2x512xf32> to vector<2x128xf32>
    %cst_90 = arith.constant 5.000000e-01 : f32
    %362 = vector.broadcast %cst_90 : f32 to vector<2x128xf32>
    %363 = arith.mulf %362, %361 : vector<2x128xf32>
    %cst_91 = arith.constant 5.000000e-01 : f32
    %364 = vector.broadcast %cst_91 : f32 to vector<2x128xf32>
    %365 = arith.addf %363, %364 : vector<2x128xf32>
    %366 = vector.extract_strided_slice %360 {offsets = [0, 128], sizes = [2, 128], strides = [1, 1]} : vector<2x512xf32> to vector<2x128xf32>
    %cst_92 = arith.constant 5.000000e-01 : f32
    %367 = vector.broadcast %cst_92 : f32 to vector<2x128xf32>
    %368 = arith.mulf %367, %366 : vector<2x128xf32>
    %cst_93 = arith.constant 5.000000e-01 : f32
    %369 = vector.broadcast %cst_93 : f32 to vector<2x128xf32>
    %370 = arith.addf %368, %369 : vector<2x128xf32>
    %371 = vector.extract_strided_slice %360 {offsets = [0, 256], sizes = [2, 128], strides = [1, 1]} : vector<2x512xf32> to vector<2x128xf32>
    %372 = vector.extract_strided_slice %360 {offsets = [0, 384], sizes = [2, 128], strides = [1, 1]} : vector<2x512xf32> to vector<2x128xf32>
    %cst_94 = arith.constant 5.000000e-01 : f32
    %373 = vector.broadcast %cst_94 : f32 to vector<2x128xf32>
    %374 = arith.mulf %373, %372 : vector<2x128xf32>
    %cst_95 = arith.constant 5.000000e-01 : f32
    %375 = vector.broadcast %cst_95 : f32 to vector<2x128xf32>
    %376 = arith.addf %374, %375 : vector<2x128xf32>
    %377 = arith.mulf %370, %326 : vector<2x128xf32>
    %378 = arith.mulf %365, %371 : vector<2x128xf32>
    %379 = arith.addf %377, %378 : vector<2x128xf32>
    %380 = math.tanh %379 : vector<2x128xf32>
    %381 = arith.mulf %376, %380 : vector<2x128xf32>
    %382 = tpu.concatenate %355, %381 in 1 : vector<2x128xf32>, vector<2x128xf32> -> vector<2x256xf32>
    %383 = arith.truncf %382 : vector<2x256xf32> to vector<2x256xbf16>
    %cst_96 = arith.constant dense<0.000000e+00> : vector<2x1024xf32>
    %384 = tpu.matmul %383, %3, %cst_96 {dimension_numbers = #tpu.dot_dimension_numbers<[1], [0], [0], [1], [0, 0, 1, 1], [], []>} : vector<2x256xbf16>, vector<256x1024xbf16>, vector<2x1024xf32> -> vector<2x1024xf32>
    %385 = vector.extract_strided_slice %384 {offsets = [0, 0], sizes = [2, 512], strides = [1, 1]} : vector<2x1024xf32> to vector<2x512xf32>
    %386 = arith.addf %385, %32 : vector<2x512xf32>
    %387 = math.tanh %386 : vector<2x512xf32>
    %388 = vector.extract_strided_slice %387 {offsets = [0, 0], sizes = [2, 128], strides = [1, 1]} : vector<2x512xf32> to vector<2x128xf32>
    %cst_97 = arith.constant 5.000000e-01 : f32
    %389 = vector.broadcast %cst_97 : f32 to vector<2x128xf32>
    %390 = arith.mulf %389, %388 : vector<2x128xf32>
    %cst_98 = arith.constant 5.000000e-01 : f32
    %391 = vector.broadcast %cst_98 : f32 to vector<2x128xf32>
    %392 = arith.addf %390, %391 : vector<2x128xf32>
    %393 = vector.extract_strided_slice %387 {offsets = [0, 128], sizes = [2, 128], strides = [1, 1]} : vector<2x512xf32> to vector<2x128xf32>
    %cst_99 = arith.constant 5.000000e-01 : f32
    %394 = vector.broadcast %cst_99 : f32 to vector<2x128xf32>
    %395 = arith.mulf %394, %393 : vector<2x128xf32>
    %cst_100 = arith.constant 5.000000e-01 : f32
    %396 = vector.broadcast %cst_100 : f32 to vector<2x128xf32>
    %397 = arith.addf %395, %396 : vector<2x128xf32>
    %398 = vector.extract_strided_slice %387 {offsets = [0, 256], sizes = [2, 128], strides = [1, 1]} : vector<2x512xf32> to vector<2x128xf32>
    %399 = vector.extract_strided_slice %387 {offsets = [0, 384], sizes = [2, 128], strides = [1, 1]} : vector<2x512xf32> to vector<2x128xf32>
    %cst_101 = arith.constant 5.000000e-01 : f32
    %400 = vector.broadcast %cst_101 : f32 to vector<2x128xf32>
    %401 = arith.mulf %400, %399 : vector<2x128xf32>
    %cst_102 = arith.constant 5.000000e-01 : f32
    %402 = vector.broadcast %cst_102 : f32 to vector<2x128xf32>
    %403 = arith.addf %401, %402 : vector<2x128xf32>
    %404 = arith.mulf %397, %353 : vector<2x128xf32>
    %405 = arith.mulf %392, %398 : vector<2x128xf32>
    %406 = arith.addf %404, %405 : vector<2x128xf32>
    %407 = math.tanh %406 : vector<2x128xf32>
    %408 = arith.mulf %403, %407 : vector<2x128xf32>
    %409 = vector.extract_strided_slice %384 {offsets = [0, 512], sizes = [2, 512], strides = [1, 1]} : vector<2x1024xf32> to vector<2x512xf32>
    %410 = vector.extract_strided_slice %2 {offsets = [1, 0], sizes = [1, 512], strides = [1, 1]} : vector<2x512xf32> to vector<1x512xf32>
    %411 = vector.broadcast %410 : vector<1x512xf32> to vector<2x512xf32>
    %412 = arith.addf %409, %411 : vector<2x512xf32>
    %413 = math.tanh %412 : vector<2x512xf32>
    %414 = vector.extract_strided_slice %413 {offsets = [0, 0], sizes = [2, 128], strides = [1, 1]} : vector<2x512xf32> to vector<2x128xf32>
    %cst_103 = arith.constant 5.000000e-01 : f32
    %415 = vector.broadcast %cst_103 : f32 to vector<2x128xf32>
    %416 = arith.mulf %415, %414 : vector<2x128xf32>
    %cst_104 = arith.constant 5.000000e-01 : f32
    %417 = vector.broadcast %cst_104 : f32 to vector<2x128xf32>
    %418 = arith.addf %416, %417 : vector<2x128xf32>
    %419 = vector.extract_strided_slice %413 {offsets = [0, 128], sizes = [2, 128], strides = [1, 1]} : vector<2x512xf32> to vector<2x128xf32>
    %cst_105 = arith.constant 5.000000e-01 : f32
    %420 = vector.broadcast %cst_105 : f32 to vector<2x128xf32>
    %421 = arith.mulf %420, %419 : vector<2x128xf32>
    %cst_106 = arith.constant 5.000000e-01 : f32
    %422 = vector.broadcast %cst_106 : f32 to vector<2x128xf32>
    %423 = arith.addf %421, %422 : vector<2x128xf32>
    %424 = vector.extract_strided_slice %413 {offsets = [0, 256], sizes = [2, 128], strides = [1, 1]} : vector<2x512xf32> to vector<2x128xf32>
    %425 = vector.extract_strided_slice %413 {offsets = [0, 384], sizes = [2, 128], strides = [1, 1]} : vector<2x512xf32> to vector<2x128xf32>
    %cst_107 = arith.constant 5.000000e-01 : f32
    %426 = vector.broadcast %cst_107 : f32 to vector<2x128xf32>
    %427 = arith.mulf %426, %425 : vector<2x128xf32>
    %cst_108 = arith.constant 5.000000e-01 : f32
    %428 = vector.broadcast %cst_108 : f32 to vector<2x128xf32>
    %429 = arith.addf %427, %428 : vector<2x128xf32>
    %430 = arith.mulf %423, %379 : vector<2x128xf32>
    %431 = arith.mulf %418, %424 : vector<2x128xf32>
    %432 = arith.addf %430, %431 : vector<2x128xf32>
    %433 = math.tanh %432 : vector<2x128xf32>
    %434 = arith.mulf %429, %433 : vector<2x128xf32>
    %435 = tpu.concatenate %408, %434 in 1 : vector<2x128xf32>, vector<2x128xf32> -> vector<2x256xf32>
    %436 = arith.truncf %435 : vector<2x256xf32> to vector<2x256xbf16>
    %cst_109 = arith.constant dense<0.000000e+00> : vector<2x1024xf32>
    %437 = tpu.matmul %436, %3, %cst_109 {dimension_numbers = #tpu.dot_dimension_numbers<[1], [0], [0], [1], [0, 0, 1, 1], [], []>} : vector<2x256xbf16>, vector<256x1024xbf16>, vector<2x1024xf32> -> vector<2x1024xf32>
    %438 = vector.extract_strided_slice %437 {offsets = [0, 512], sizes = [2, 512], strides = [1, 1]} : vector<2x1024xf32> to vector<2x512xf32>
    %439 = vector.extract_strided_slice %2 {offsets = [1, 0], sizes = [1, 512], strides = [1, 1]} : vector<2x512xf32> to vector<1x512xf32>
    %440 = vector.broadcast %439 : vector<1x512xf32> to vector<2x512xf32>
    %441 = arith.addf %438, %440 : vector<2x512xf32>
    %442 = math.tanh %441 : vector<2x512xf32>
    %443 = vector.extract_strided_slice %442 {offsets = [0, 0], sizes = [2, 128], strides = [1, 1]} : vector<2x512xf32> to vector<2x128xf32>
    %cst_110 = arith.constant 5.000000e-01 : f32
    %444 = vector.broadcast %cst_110 : f32 to vector<2x128xf32>
    %445 = arith.mulf %444, %443 : vector<2x128xf32>
    %cst_111 = arith.constant 5.000000e-01 : f32
    %446 = vector.broadcast %cst_111 : f32 to vector<2x128xf32>
    %447 = arith.addf %445, %446 : vector<2x128xf32>
    %448 = vector.extract_strided_slice %442 {offsets = [0, 128], sizes = [2, 128], strides = [1, 1]} : vector<2x512xf32> to vector<2x128xf32>
    %cst_112 = arith.constant 5.000000e-01 : f32
    %449 = vector.broadcast %cst_112 : f32 to vector<2x128xf32>
    %450 = arith.mulf %449, %448 : vector<2x128xf32>
    %cst_113 = arith.constant 5.000000e-01 : f32
    %451 = vector.broadcast %cst_113 : f32 to vector<2x128xf32>
    %452 = arith.addf %450, %451 : vector<2x128xf32>
    %453 = vector.extract_strided_slice %442 {offsets = [0, 256], sizes = [2, 128], strides = [1, 1]} : vector<2x512xf32> to vector<2x128xf32>
    %454 = vector.extract_strided_slice %442 {offsets = [0, 384], sizes = [2, 128], strides = [1, 1]} : vector<2x512xf32> to vector<2x128xf32>
    %cst_114 = arith.constant 5.000000e-01 : f32
    %455 = vector.broadcast %cst_114 : f32 to vector<2x128xf32>
    %456 = arith.mulf %455, %454 : vector<2x128xf32>
    %cst_115 = arith.constant 5.000000e-01 : f32
    %457 = vector.broadcast %cst_115 : f32 to vector<2x128xf32>
    %458 = arith.addf %456, %457 : vector<2x128xf32>
    %459 = arith.mulf %452, %432 : vector<2x128xf32>
    %460 = arith.mulf %447, %453 : vector<2x128xf32>
    %461 = arith.addf %459, %460 : vector<2x128xf32>
    %462 = math.tanh %461 : vector<2x128xf32>
    %463 = arith.mulf %458, %462 : vector<2x128xf32>
    %464 = arith.truncf %463 : vector<2x128xf32> to vector<2x128xbf16>
    %c0_116 = arith.constant 0 : index
    %c0_117 = arith.constant 0 : index
    %465 = vector.load %arg5[%c0_116, %c0_117] : memref<128x8xbf16, #tpu.memory_space<vmem>>, vector<128x8xbf16>
    %cst_118 = arith.constant dense<0.000000e+00> : vector<2x8xf32>
    %466 = tpu.matmul %464, %465, %cst_118 {dimension_numbers = #tpu.dot_dimension_numbers<[1], [0], [0], [1], [0, 0, 1, 1], [], []>} : vector<2x128xbf16>, vector<128x8xbf16>, vector<2x8xf32> -> vector<2x8xf32>
    %c0_119 = arith.constant 0 : index
    %c0_120 = arith.constant 0 : index
    %467 = vector.load %arg6[%c0_119, %c0_120] : memref<1x8xf32, #tpu.memory_space<vmem>>, vector<1x8xf32>
    %468 = vector.broadcast %467 : vector<1x8xf32> to vector<2x8xf32>
    %469 = arith.addf %466, %468 : vector<2x8xf32>
    %c0_121 = arith.constant 0 : index
    %c0_122 = arith.constant 0 : index
    %470 = vector.load %arg7[%c0_121, %c0_122] : memref<2x8xf32, #tpu.memory_space<vmem>>, vector<2x8xf32>
    tpu.vector_store %arg7[%c0_121, %c0_122], %469 {strides = array<i32>} : memref<2x8xf32, #tpu.memory_space<vmem>>, vector<2x8xf32>,
    return
  }
  func.func @transform_0(%arg0: i32) -> (i32, i32) {
    %c0_i32 = arith.constant 0 : i32
    %c0_i32_0 = arith.constant 0 : i32
    %c0_i32_1 = arith.constant 0 : i32
    return %c0_i32, %c0_i32_0 : i32, i32
  }
  func.func @transform_1(%arg0: i32) -> (i32, i32) {
    %c0_i32 = arith.constant 0 : i32
    %c0_i32_0 = arith.constant 0 : i32
    %c0_i32_1 = arith.constant 0 : i32
    return %c0_i32, %c0_i32_0 : i32, i32
  }
  func.func @transform_2(%arg0: i32) -> (i32, i32) {
    %c0_i32 = arith.constant 0 : i32
    %c0_i32_0 = arith.constant 0 : i32
    %c0_i32_1 = arith.constant 0 : i32
    return %c0_i32, %c0_i32_0 : i32, i32
  }
  func.func @transform_3(%arg0: i32) -> (i32, i32) {
    %c0_i32 = arith.constant 0 : i32
    %c0_i32_0 = arith.constant 0 : i32
    %c0_i32_1 = arith.constant 0 : i32
    return %c0_i32, %c0_i32_0 : i32, i32
  }
  func.func @transform_4(%arg0: i32) -> (i32, i32) {
    %c0_i32 = arith.constant 0 : i32
    %c0_i32_0 = arith.constant 0 : i32
    %c0_i32_1 = arith.constant 0 : i32
    return %c0_i32, %c0_i32_0 : i32, i32
  }
  func.func @transform_5(%arg0: i32) -> (i32, i32) {
    %c0_i32 = arith.constant 0 : i32
    %c0_i32_0 = arith.constant 0 : i32
    %c0_i32_1 = arith.constant 0 : i32
    return %c0_i32, %c0_i32_0 : i32, i32
  }
  func.func @transform_6(%arg0: i32) -> (i32, i32) {
    %c0_i32 = arith.constant 0 : i32
    %c0_i32_0 = arith.constant 0 : i32
    %c0_i32_1 = arith.constant 0 : i32
    return %c0_i32, %c0_i32_0 : i32, i32
  }
}

</mosaic_0001>

<llo_original>
// kernel: tpu_custom_call.1
$region0: #{tpu_custom_call.1}
  #allocation0 [shape = 'u32[]', space=smem, size = 0x4, offset = 0x4, fixed_abs, tag = 'smem constant byte address 0x4 - core index']
  #allocation1 [shape = 'u32[144,128]{1,0:T(1,128)}', space=vmem, size = 0x12000, scoped, tag = 'internal scratch']
  %s0 = inlined_call_operand.vmem [shape: f32[16,16], index: 0, kind: input, shape index: {}]
  %s1 = inlined_call_operand.vmem [shape: bf16[16,512], index: 1, kind: input, shape index: {}]
  %s2 = inlined_call_operand.vmem [shape: f32[2,512], index: 2, kind: input, shape index: {}]
  %s3 = inlined_call_operand.hbm [shape: bf16[256,1024], index: 3, kind: input, shape index: {}]
  %s4 = inlined_call_operand.vmem [shape: bf16[128,8], index: 4, kind: input, shape index: {}]
  %s5 = inlined_call_operand.vmem [shape: f32[1,8], index: 5, kind: input, shape index: {}]
  %s6 = inlined_call_operand.hbm [shape: f32[2,8], index: 6, kind: output, shape index: {}]
  %s7 = sld [smem:[#allocation0]]
  $region38: #{tpu_custom_call.1} parent=0
    _
  %s9 = ssub.s32 1, %s7
  %s10 = scalar_select 0, %s9, %s7
  $region1: #{tpu_custom_call.1} parent=0
    #allocation2 [shape = 'u8[524288]{0}', space=vmem, size = 0x80000, scoped, tag = 'input window, operand 3, single buffered']
    #allocation3 [shape = 's32[1]{0}', space=sflag, size = 0x4, scoped, tag = 'scoped memory for tpu_custom_call.1']
    #allocation4 [shape = 's32[1]{0}', space=sflag, size = 0x4, scoped, tag = 'scoped memory for tpu_custom_call.1']
    #allocation5 [shape = 'u8[1024]{0}', space=vmem, size = 0x400, scoped, tag = 'output window, operand 0, single buffered']
    %11 = vsyncpa [#allocation3], 0
    %12 = vsyncpa [#allocation4], 0
    // Predicated region
    $region2: #{tpu_custom_call.1} parent=1 // pred_check
      _
    $region3: #{tpu_custom_call.1} parent=1 // pred_check_branch
      %14 = sbr.rel (0) target = $region5
    $region4: #{tpu_custom_call.1} parent=1 // pred_region
      _
    $region5: #{tpu_custom_call.1} parent=1 // pred_fallthru
      _
    // Predicated region
    $region6: #{tpu_custom_call.1} parent=1 // pred_check
      _
    $region7: #{tpu_custom_call.1} parent=1 // pred_check_branch
      %16 = sbr.rel (0) target = $region9
    $region8: #{tpu_custom_call.1} parent=1 // pred_region
      _
    $region9: #{tpu_custom_call.1} parent=1 // pred_fallthru
      _
    // Predicated region
    $region10: #{tpu_custom_call.1} parent=1 // pred_check
      _
    $region11: #{tpu_custom_call.1} parent=1 // pred_check_branch
      %18 = sbr.rel (0) target = $region13
    $region12: #{tpu_custom_call.1} parent=1 // pred_region
      _
    $region13: #{tpu_custom_call.1} parent=1 // pred_fallthru
      _
    // Predicated region
    $region14: #{tpu_custom_call.1} parent=1 // pred_check
      _
    $region15: #{tpu_custom_call.1} parent=1 // pred_check_branch
      %20 = sbr.rel (0) target = $region17
    $region16: #{tpu_custom_call.1} parent=1 // pred_region
      %s22 = ssub.s32 16384, 16384
      %23 = vsyncadd [#allocation3], %s22
      %s24 = sshll.u32 [#allocation2], 4
      %s25 = int_to_ptr.vmem [resolvable:$true] %s24
      %30 = dma.hbm_to_vmem [thread:$0]  %s3, 16384, %s25, [#allocation3], 512, 512, 32
    $region17: #{tpu_custom_call.1} parent=1 // pred_fallthru
      _
    // Predicated region
    $region18: #{tpu_custom_call.1} parent=1 // pred_check
      _
    $region19: #{tpu_custom_call.1} parent=1 // pred_check_branch
      %32 = sbr.rel (0) target = $region21
    $region20: #{tpu_custom_call.1} parent=1 // pred_region
      _
    $region21: #{tpu_custom_call.1} parent=1 // pred_fallthru
      _
    // Predicated region
    $region22: #{tpu_custom_call.1} parent=1 // pred_check
      _
    $region23: #{tpu_custom_call.1} parent=1 // pred_check_branch
      %34 = sbr.rel (0) target = $region25
    $region24: #{tpu_custom_call.1} parent=1 // pred_region
      _
    $region25: #{tpu_custom_call.1} parent=1 // pred_fallthru
      _
    // Predicated region
    $region26: #{tpu_custom_call.1} parent=1 // pred_check
      _
    $region27: #{tpu_custom_call.1} parent=1 // pred_check_branch
      %36 = sbr.rel (0) target = $region29
    $region28: #{tpu_custom_call.1} parent=1 // pred_region
      %37 = dma.done [#allocation3], 16384
    $region29: #{tpu_custom_call.1} parent=1 // pred_fallthru
      _
    %v39 = vld [vmem:[%s0] sm:$0xff]
    %v40 = vld [vmem:[%s0 + $0x8] sm:$0xff]
    %v41 = vpack.c.bf16 %v40, %v39
    %v42 = vld [vmem:[%s2] sm:$0xff]
    %v43 = vld [vmem:[#allocation2] sm:$0xff]
    %v44 = vld [vmem:[#allocation2 + $0x8] sm:$0xff]
    %v45 = vld [vmem:[#allocation2 + $0x10] sm:$0xff]
    %v46 = vld [vmem:[#allocation2 + $0x18] sm:$0xff]
    %v47 = vld [vmem:[#allocation2 + $0x20] sm:$0xff]
    %v48 = vld [vmem:[#allocation2 + $0x28] sm:$0xff]
    %v49 = vld [vmem:[#allocation2 + $0x30] sm:$0xff]
    %v50 = vld [vmem:[#allocation2 + $0x38] sm:$0xff]
    %v51 = vld [vmem:[#allocation2 + $0x40] sm:$0xff]
    %v52 = vld [vmem:[#allocation2 + $0x48] sm:$0xff]
    %v53 = vld [vmem:[#allocation2 + $0x50] sm:$0xff]
    %v54 = vld [vmem:[#allocation2 + $0x58] sm:$0xff]
    %v55 = vld [vmem:[#allocation2 + $0x60] sm:$0xff]
    %v56 = vld [vmem:[#allocation2 + $0x68] sm:$0xff]
    %v57 = vld [vmem:[#allocation2 + $0x70] sm:$0xff]
    %v58 = vld [vmem:[#allocation2 + $0x78] sm:$0xff]
    %v59 = vld [vmem:[#allocation2 + $0x80] sm:$0xff]
    %v60 = vld [vmem:[#allocation2 + $0x88] sm:$0xff]
    %v61 = vld [vmem:[#allocation2 + $0x90] sm:$0xff]
    %v62 = vld [vmem:[#allocation2 + $0x98] sm:$0xff]
    %v63 = vld [vmem:[#allocation2 + $0xa0] sm:$0xff]
    %v64 = vld [vmem:[#allocation2 + $0xa8] sm:$0xff]
    %v65 = vld [vmem:[#allocation2 + $0xb0] sm:$0xff]
    %v66 = vld [vmem:[#allocation2 + $0xb8] sm:$0xff]
    %v67 = vld [vmem:[#allocation2 + $0xc0] sm:$0xff]
    %v68 = vld [vmem:[#allocation2 + $0xc8] sm:$0xff]
    %v69 = vld [vmem:[#allocation2 + $0xd0] sm:$0xff]
    %v70 = vld [vmem:[#allocation2 + $0xd8] sm:$0xff]
    %v71 = vld [vmem:[#allocation2 + $0xe0] sm:$0xff]
    %v72 = vld [vmem:[#allocation2 + $0xe8] sm:$0xff]
    %v73 = vld [vmem:[#allocation2 + $0xf0] sm:$0xff]
    %v74 = vld [vmem:[#allocation2 + $0xf8] sm:$0xff]
    %v75 = vld [vmem:[#allocation2 + $0x100] sm:$0xff]
    %v76 = vld [vmem:[#allocation2 + $0x108] sm:$0xff]
    %v77 = vld [vmem:[#allocation2 + $0x110] sm:$0xff]
    %v78 = vld [vmem:[#allocation2 + $0x118] sm:$0xff]
    %v79 = vld [vmem:[#allocation2 + $0x120] sm:$0xff]
    %v80 = vld [vmem:[#allocation2 + $0x128] sm:$0xff]
    %v81 = vld [vmem:[#allocation2 + $0x130] sm:$0xff]
    %v82 = vld [vmem:[#allocation2 + $0x138] sm:$0xff]
    %v83 = vld [vmem:[#allocation2 + $0x140] sm:$0xff]
    %v84 = vld [vmem:[#allocation2 + $0x148] sm:$0xff]
    %v85 = vld [vmem:[#allocation2 + $0x150] sm:$0xff]
    %v86 = vld [vmem:[#allocation2 + $0x158] sm:$0xff]
    %v87 = vld [vmem:[#allocation2 + $0x160] sm:$0xff]
    %v88 = vld [vmem:[#allocation2 + $0x168] sm:$0xff]
    %v89 = vld [vmem:[#allocation2 + $0x170] sm:$0xff]
    %v90 = vld [vmem:[#allocation2 + $0x178] sm:$0xff]
    %v91 = vld [vmem:[#allocation2 + $0x180] sm:$0xff]
    %v92 = vld [vmem:[#allocation2 + $0x188] sm:$0xff]
    %v93 = vld [vmem:[#allocation2 + $0x190] sm:$0xff]
    %v94 = vld [vmem:[#allocation2 + $0x198] sm:$0xff]
    %v95 = vld [vmem:[#allocation2 + $0x1a0] sm:$0xff]
    %v96 = vld [vmem:[#allocation2 + $0x1a8] sm:$0xff]
    %v97 = vld [vmem:[#allocation2 + $0x1b0] sm:$0xff]
    %v98 = vld [vmem:[#allocation2 + $0x1b8] sm:$0xff]
    %v99 = vld [vmem:[#allocation2 + $0x1c0] sm:$0xff]
    %v100 = vld [vmem:[#allocation2 + $0x1c8] sm:$0xff]
    %v101 = vld [vmem:[#allocation2 + $0x1d0] sm:$0xff]
    %v102 = vld [vmem:[#allocation2 + $0x1d8] sm:$0xff]
    %v103 = vld [vmem:[#allocation2 + $0x1e0] sm:$0xff]
    %v104 = vld [vmem:[#allocation2 + $0x1e8] sm:$0xff]
    %v105 = vld [vmem:[#allocation2 + $0x1f0] sm:$0xff]
    %v106 = vld [vmem:[#allocation2 + $0x1f8] sm:$0xff]
    %v107 = vld [vmem:[#allocation2 + $0x200] sm:$0xff]
    %v108 = vld [vmem:[#allocation2 + $0x208] sm:$0xff]
    %v109 = vld [vmem:[#allocation2 + $0x210] sm:$0xff]
    %v110 = vld [vmem:[#allocation2 + $0x218] sm:$0xff]
    %v111 = vld [vmem:[#allocation2 + $0x220] sm:$0xff]
    %v112 = vld [vmem:[#allocation2 + $0x228] sm:$0xff]
    %v113 = vld [vmem:[#allocation2 + $0x230] sm:$0xff]
    %v114 = vld [vmem:[#allocation2 + $0x238] sm:$0xff]
    %v115 = vld [vmem:[#allocation2 + $0x240] sm:$0xff]
    %v116 = vld [vmem:[#allocation2 + $0x248] sm:$0xff]
    %v117 = vld [vmem:[#allocation2 + $0x250] sm:$0xff]
    %v118 = vld [vmem:[#allocation2 + $0x258] sm:$0xff]
    %v119 = vld [vmem:[#allocation2 + $0x260] sm:$0xff]
    %v120 = vld [vmem:[#allocation2 + $0x268] sm:$0xff]
    %v121 = vld [vmem:[#allocation2 + $0x270] sm:$0xff]
    %v122 = vld [vmem:[#allocation2 + $0x278] sm:$0xff]
    %v123 = vld [vmem:[#allocation2 + $0x280] sm:$0xff]
    %v124 = vld [vmem:[#allocation2 + $0x288] sm:$0xff]
    %v125 = vld [vmem:[#allocation2 + $0x290] sm:$0xff]
    %v126 = vld [vmem:[#allocation2 + $0x298] sm:$0xff]
    %v127 = vld [vmem:[#allocation2 + $0x2a0] sm:$0xff]
    %v128 = vld [vmem:[#allocation2 + $0x2a8] sm:$0xff]
    %v129 = vld [vmem:[#allocation2 + $0x2b0] sm:$0xff]
    %v130 = vld [vmem:[#allocation2 + $0x2b8] sm:$0xff]
    %v131 = vld [vmem:[#allocation2 + $0x2c0] sm:$0xff]
    %v132 = vld [vmem:[#allocation2 + $0x2c8] sm:$0xff]
    %v133 = vld [vmem:[#allocation2 + $0x2d0] sm:$0xff]
    %v134 = vld [vmem:[#allocation2 + $0x2d8] sm:$0xff]
    %v135 = vld [vmem:[#allocation2 + $0x2e0] sm:$0xff]
    %v136 = vld [vmem:[#allocation2 + $0x2e8] sm:$0xff]
    %v137 = vld [vmem:[#allocation2 + $0x2f0] sm:$0xff]
    %v138 = vld [vmem:[#allocation2 + $0x2f8] sm:$0xff]
    %v139 = vld [vmem:[#allocation2 + $0x300] sm:$0xff]
    %v140 = vld [vmem:[#allocation2 + $0x308] sm:$0xff]
    %v141 = vld [vmem:[#allocation2 + $0x310] sm:$0xff]
    %v142 = vld [vmem:[#allocation2 + $0x318] sm:$0xff]
    %v143 = vld [vmem:[#allocation2 + $0x320] sm:$0xff]
    %v144 = vld [vmem:[#allocation2 + $0x328] sm:$0xff]
    %v145 = vld [vmem:[#allocation2 + $0x330] sm:$0xff]
    %v146 = vld [vmem:[#allocation2 + $0x338] sm:$0xff]
    %v147 = vld [vmem:[#allocation2 + $0x340] sm:$0xff]
    %v148 = vld [vmem:[#allocation2 + $0x348] sm:$0xff]
    %v149 = vld [vmem:[#allocation2 + $0x350] sm:$0xff]
    %v150 = vld [vmem:[#allocation2 + $0x358] sm:$0xff]
    %v151 = vld [vmem:[#allocation2 + $0x360] sm:$0xff]
    %v152 = vld [vmem:[#allocation2 + $0x368] sm:$0xff]
    %v153 = vld [vmem:[#allocation2 + $0x370] sm:$0xff]
    %v154 = vld [vmem:[#allocation2 + $0x378] sm:$0xff]
    %v155 = vld [vmem:[#allocation2 + $0x380] sm:$0xff]
    %v156 = vld [vmem:[#allocation2 + $0x388] sm:$0xff]
    %v157 = vld [vmem:[#allocation2 + $0x390] sm:$0xff]
    %v158 = vld [vmem:[#allocation2 + $0x398] sm:$0xff]
    %v159 = vld [vmem:[#allocation2 + $0x3a0] sm:$0xff]
    %v160 = vld [vmem:[#allocation2 + $0x3a8] sm:$0xff]
    %v161 = vld [vmem:[#allocation2 + $0x3b0] sm:$0xff]
    %v162 = vld [vmem:[#allocation2 + $0x3b8] sm:$0xff]
    %v163 = vld [vmem:[#allocation2 + $0x3c0] sm:$0xff]
    %v164 = vld [vmem:[#allocation2 + $0x3c8] sm:$0xff]
    %v165 = vld [vmem:[#allocation2 + $0x3d0] sm:$0xff]
    %v166 = vld [vmem:[#allocation2 + $0x3d8] sm:$0xff]
    %v167 = vld [vmem:[#allocation2 + $0x3e0] sm:$0xff]
    %v168 = vld [vmem:[#allocation2 + $0x3e8] sm:$0xff]
    %v169 = vld [vmem:[#allocation2 + $0x3f0] sm:$0xff]
    %v170 = vld [vmem:[#allocation2 + $0x3f8] sm:$0xff]
    %v171 = vld [vmem:[%s1] sm:$0xff]
    %v172 = vld [vmem:[%s1 + $0x8] sm:$0xff]
    %v173 = vld [vmem:[%s1 + $0x10] sm:$0xff]
    %v174 = vld [vmem:[%s1 + $0x18] sm:$0xff]
    %v176 = vlaneseq
    %v177 = vshrl.u32 %v176, 7
    %v178 = vsub.s32 0, %v177
    %v179 = vrot.slane %v42, %v178
    %v180 = vlaneseq
    %v181 = vshrl.u32 %v180, 7
    %v182 = vsub.s32 2, %v181
    %v183 = vrot.slane %v42, %v182
    %v184 = vlaneseq
    %v185 = vshrl.u32 %v184, 7
    %v186 = vsub.s32 4, %v185
    %v187 = vrot.slane %v42, %v186
    %v188 = vlaneseq
    %v189 = vshrl.u32 %v188, 7
    %v190 = vsub.s32 6, %v189
    %v191 = vrot.slane %v42, %v190
    %v196 = vlaneseq
    %v197 = vshrl.u32 %v196, 7
    %v198 = vsub.s32 0, %v197
    %v199 = vrot.slane %v179, %v198
    %v200 = vlaneseq
    %v201 = vshrl.u32 %v200, 7
    %v202 = vsub.s32 0, %v201
    %v203 = vrot.slane %v183, %v202
    %v204 = vlaneseq
    %v205 = vshrl.u32 %v204, 7
    %v206 = vsub.s32 0, %v205
    %v207 = vrot.slane %v187, %v206
    %v208 = vlaneseq
    %v209 = vshrl.u32 %v208, 7
    %v210 = vsub.s32 0, %v209
    %v211 = vrot.slane %v191, %v210
    %v216 = vunpack.c.l.b16 %v171
    %v217 = vunpack.c.h.b16 %v171
    %v218 = vunpack.c.l.b16 %v172
    %v219 = vunpack.c.h.b16 %v172
    %v220 = vunpack.c.l.b16 %v173
    %v221 = vunpack.c.h.b16 %v173
    %v222 = vunpack.c.l.b16 %v174
    %v223 = vunpack.c.h.b16 %v174
    %v224 = vpack.c.b16 %v220, %v216
    %v225 = vpack.c.b16 %v221, %v217
    %v226 = vpack.c.b16 %v222, %v218
    %v227 = vpack.c.b16 %v223, %v219
    %vm232 = vcmask 130048
    %v234 = vsel %vm232, %v41, 0
    %236 = vmatprep.subr.bf16.mxu0 %v225
    %237 = vmatpush1.bf16.msra.mxu0 %v224
    %238 = vmatprep.subr.bf16.mxu0 0
    %239 = vmatpush1.bf16.msra.mxu0 0
    %240 = vmatprep.subr.bf16.mxu0 0
    %241 = vmatpush1.bf16.msra.mxu0 0
    %242 = vmatprep.subr.bf16.mxu0 0
    %243 = vmatpush1.bf16.msra.mxu0 0
    %244 = vmatprep.subr.bf16.mxu0 0
    %245 = vmatpush1.bf16.msra.mxu0 0
    %246 = vmatprep.subr.bf16.mxu0 0
    %247 = vmatpush1.bf16.msra.mxu0 0
    %248 = vmatprep.subr.bf16.mxu0 0
    %249 = vmatpush1.bf16.msra.mxu0 0
    %250 = vmatprep.subr.bf16.mxu0 0
    %251 = vmatpush1.bf16.msra.mxu0 0
    %252 = vmatprep.subr.bf16.mxu0 0
    %253 = vmatpush1.bf16.msra.mxu0 0
    %254 = vmatprep.subr.bf16.mxu0 0
    %255 = vmatpush1.bf16.msra.mxu0 0
    %256 = vmatprep.subr.bf16.mxu0 0
    %257 = vmatpush1.bf16.msra.mxu0 0
    %258 = vmatprep.subr.bf16.mxu0 0
    %259 = vmatpush1.bf16.msra.mxu0 0
    %260 = vmatprep.subr.bf16.mxu0 0
    %261 = vmatpush1.bf16.msra.mxu0 0
    %262 = vmatprep.subr.bf16.mxu0 0
    %263 = vmatpush1.bf16.msra.mxu0 0
    %264 = vmatprep.subr.bf16.mxu0 0
    %265 = vmatpush1.bf16.msra.mxu0 0
    %266 = vmatprep.subr.bf16.mxu0 0
    %267 = vmatpush1.bf16.msra.mxu0 0
    %268 = vmatprep.mubr.bf16.mxu0 0
    %269 = vmatmul.mubr.bf16.gmra.mrb[0].mxu0 %v234
    %v270 = vpop.f32.mrb[0].mxu0
    %v271 = vadd.f32 %v199, %v270
    %v272 = vpop.f32.mrb[0].mxu0
    %v273 = vadd.f32 %v203, %v272
    %v274 = vpop.f32.mrb[0].mxu0
    %v275 = vadd.f32 %v199, %v274
    %v276 = vpop.f32.mrb[0].mxu0
    %v277 = vadd.f32 %v203, %v276
    %278 = vdwg.mxu0
    %279 = vmatprep.subr.bf16.mxu0 %v227
    %280 = vmatpush1.bf16.msra.mxu0 %v226
    %281 = vmatprep.subr.bf16.mxu0 0
    %282 = vmatpush1.bf16.msra.mxu0 0
    %283 = vmatprep.subr.bf16.mxu0 0
    %284 = vmatpush1.bf16.msra.mxu0 0
    %285 = vmatprep.subr.bf16.mxu0 0
    %286 = vmatpush1.bf16.msra.mxu0 0
    %287 = vmatprep.subr.bf16.mxu0 0
    %288 = vmatpush1.bf16.msra.mxu0 0
    %289 = vmatprep.subr.bf16.mxu0 0
    %290 = vmatpush1.bf16.msra.mxu0 0
    %291 = vmatprep.subr.bf16.mxu0 0
    %292 = vmatpush1.bf16.msra.mxu0 0
    %293 = vmatprep.subr.bf16.mxu0 0
    %294 = vmatpush1.bf16.msra.mxu0 0
    %295 = vmatprep.subr.bf16.mxu0 0
    %296 = vmatpush1.bf16.msra.mxu0 0
    %297 = vmatprep.subr.bf16.mxu0 0
    %298 = vmatpush1.bf16.msra.mxu0 0
    %299 = vmatprep.subr.bf16.mxu0 0
    %300 = vmatpush1.bf16.msra.mxu0 0
    %301 = vmatprep.subr.bf16.mxu0 0
    %302 = vmatpush1.bf16.msra.mxu0 0
    %303 = vmatprep.subr.bf16.mxu0 0
    %304 = vmatpush1.bf16.msra.mxu0 0
    %305 = vmatprep.subr.bf16.mxu0 0
    %306 = vmatpush1.bf16.msra.mxu0 0
    %307 = vmatprep.subr.bf16.mxu0 0
    %308 = vmatpush1.bf16.msra.mxu0 0
    %309 = vmatprep.subr.bf16.mxu0 0
    %310 = vmatpush1.bf16.msra.mxu0 0
    %311 = vmatprep.mubr.bf16.mxu0 0
    %312 = vmatmul.mubr.bf16.gmra.mrb[0].mxu0 %v234
    %v313 = vpop.f32.mrb[0].mxu0
    %v314 = vadd.f32 %v207, %v313
    %v315 = vpop.f32.mrb[0].mxu0
    %v316 = vadd.f32 %v211, %v315
    %v317 = vpop.f32.mrb[0].mxu0
    %v318 = vadd.f32 %v207, %v317
    %v319 = vpop.f32.mrb[0].mxu0
    %v320 = vadd.f32 %v211, %v319
    %321 = vdwg.mxu0
    %v326 = vrot.slane %v275, 7
    %v327 = vrot.slane %v277, 7
    %v328 = vrot.slane %v318, 7
    %v329 = vrot.slane %v320, 7
    %vm334 = vcmask 1040384
    %v335 = vsel %vm334, %v271, %v326
    %v336 = vsel %vm334, %v273, %v327
    %v337 = vsel %vm334, %v314, %v328
    %v338 = vsel %vm334, %v316, %v329
    %v343 = vrot.slane %v271, 1
    %v344 = vrot.slane %v273, 1
    %v345 = vrot.slane %v314, 1
    %v346 = vrot.slane %v316, 1
    %v351 = vsel %vm334, %v343, %v275
    %v352 = vsel %vm334, %v344, %v277
    %v353 = vsel %vm334, %v345, %v318
    %v354 = vsel %vm334, %v346, %v320
    %v355 = vrot.slane %v271, 2
    %v356 = vrot.slane %v273, 2
    %v357 = vrot.slane %v314, 2
    %v358 = vrot.slane %v316, 2
    %v363 = vrot.slane %v275, 1
    %v364 = vrot.slane %v277, 1
    %v365 = vrot.slane %v318, 1
    %v366 = vrot.slane %v320, 1
    %v371 = vsel %vm334, %v355, %v363
    %v372 = vsel %vm334, %v356, %v364
    %v373 = vsel %vm334, %v357, %v365
    %v374 = vsel %vm334, %v358, %v366
    %v375 = vrot.slane %v271, 3
    %v376 = vrot.slane %v273, 3
    %v377 = vrot.slane %v314, 3
    %v378 = vrot.slane %v316, 3
    %v383 = vrot.slane %v275, 2
    %v384 = vrot.slane %v277, 2
    %v385 = vrot.slane %v318, 2
    %v386 = vrot.slane %v320, 2
    %v391 = vsel %vm334, %v375, %v383
    %v392 = vsel %vm334, %v376, %v384
    %v393 = vsel %vm334, %v377, %v385
    %v394 = vsel %vm334, %v378, %v386
    %v395 = vrot.slane %v271, 4
    %v396 = vrot.slane %v273, 4
    %v397 = vrot.slane %v314, 4
    %v398 = vrot.slane %v316, 4
    %v403 = vrot.slane %v275, 3
    %v404 = vrot.slane %v277, 3
    %v405 = vrot.slane %v318, 3
    %v406 = vrot.slane %v320, 3
    %v411 = vsel %vm334, %v395, %v403
    %v412 = vsel %vm334, %v396, %v404
    %v413 = vsel %vm334, %v397, %v405
    %v414 = vsel %vm334, %v398, %v406
    %v415 = vrot.slane %v271, 5
    %v416 = vrot.slane %v273, 5
    %v417 = vrot.slane %v314, 5
    %v418 = vrot.slane %v316, 5
    %v423 = vrot.slane %v275, 4
    %v424 = vrot.slane %v277, 4
    %v425 = vrot.slane %v318, 4
    %v426 = vrot.slane %v320, 4
    %v431 = vsel %vm334, %v415, %v423
    %v432 = vsel %vm334, %v416, %v424
    %v433 = vsel %vm334, %v417, %v425
    %v434 = vsel %vm334, %v418, %v426
    %v435 = vrot.slane %v271, 6
    %v436 = vrot.slane %v273, 6
    %v437 = vrot.slane %v314, 6
    %v438 = vrot.slane %v316, 6
    %v443 = vrot.slane %v275, 5
    %v444 = vrot.slane %v277, 5
    %v445 = vrot.slane %v318, 5
    %v446 = vrot.slane %v320, 5
    %v451 = vsel %vm334, %v435, %v443
    %v452 = vsel %vm334, %v436, %v444
    %v453 = vsel %vm334, %v437, %v445
    %v454 = vsel %vm334, %v438, %v446
    %v455 = vrot.slane %v271, 7
    %v456 = vrot.slane %v273, 7
    %v457 = vrot.slane %v314, 7
    %v458 = vrot.slane %v316, 7
    %v463 = vrot.slane %v275, 6
    %v464 = vrot.slane %v277, 6
    %v465 = vrot.slane %v318, 6
    %v466 = vrot.slane %v320, 6
    %v471 = vsel %vm334, %v455, %v463
    %v472 = vsel %vm334, %v456, %v464
    %v473 = vsel %vm334, %v457, %v465
    %v474 = vsel %vm334, %v458, %v466
    %v475 = vpack.c.bf16 0.0, 0.0
    %v540 = vunpack.c.l.b16 %v43
    %v541 = vunpack.c.h.b16 %v43
    %v542 = vunpack.c.l.b16 %v44
    %v543 = vunpack.c.h.b16 %v44
    %v544 = vunpack.c.l.b16 %v47
    %v545 = vunpack.c.h.b16 %v47
    %v546 = vunpack.c.l.b16 %v48
    %v547 = vunpack.c.h.b16 %v48
    %v548 = vunpack.c.l.b16 %v51
    %v549 = vunpack.c.h.b16 %v51
    %v550 = vunpack.c.l.b16 %v52
    %v551 = vunpack.c.h.b16 %v52
    %v552 = vunpack.c.l.b16 %v55
    %v553 = vunpack.c.h.b16 %v55
    %v554 = vunpack.c.l.b16 %v56
    %v555 = vunpack.c.h.b16 %v56
    %v556 = vunpack.c.l.b16 %v59
    %v557 = vunpack.c.h.b16 %v59
    %v558 = vunpack.c.l.b16 %v60
    %v559 = vunpack.c.h.b16 %v60
    %v560 = vunpack.c.l.b16 %v63
    %v561 = vunpack.c.h.b16 %v63
    %v562 = vunpack.c.l.b16 %v64
    %v563 = vunpack.c.h.b16 %v64
    %v564 = vunpack.c.l.b16 %v67
    %v565 = vunpack.c.h.b16 %v67
    %v566 = vunpack.c.l.b16 %v68
    %v567 = vunpack.c.h.b16 %v68
    %v568 = vunpack.c.l.b16 %v71
    %v569 = vunpack.c.h.b16 %v71
    %v570 = vunpack.c.l.b16 %v72
    %v571 = vunpack.c.h.b16 %v72
    %v572 = vunpack.c.l.b16 %v75
    %v573 = vunpack.c.h.b16 %v75
    %v574 = vunpack.c.l.b16 %v76
    %v575 = vunpack.c.h.b16 %v76
    %v576 = vunpack.c.l.b16 %v79
    %v577 = vunpack.c.h.b16 %v79
    %v578 = vunpack.c.l.b16 %v80
    %v579 = vunpack.c.h.b16 %v80
    %v580 = vunpack.c.l.b16 %v83
    %v581 = vunpack.c.h.b16 %v83
    %v582 = vunpack.c.l.b16 %v84
    %v583 = vunpack.c.h.b16 %v84
    %v584 = vunpack.c.l.b16 %v87
    %v585 = vunpack.c.h.b16 %v87
    %v586 = vunpack.c.l.b16 %v88
    %v587 = vunpack.c.h.b16 %v88
    %v588 = vunpack.c.l.b16 %v91
    %v589 = vunpack.c.h.b16 %v91
    %v590 = vunpack.c.l.b16 %v92
    %v591 = vunpack.c.h.b16 %v92
    %v592 = vunpack.c.l.b16 %v95
    %v593 = vunpack.c.h.b16 %v95
    %v594 = vunpack.c.l.b16 %v96
    %v595 = vunpack.c.h.b16 %v96
    %v596 = vunpack.c.l.b16 %v99
    %v597 = vunpack.c.h.b16 %v99
    %v598 = vunpack.c.l.b16 %v100
    %v599 = vunpack.c.h.b16 %v100
    %v600 = vunpack.c.l.b16 %v103
    %v601 = vunpack.c.h.b16 %v103
    %v602 = vunpack.c.l.b16 %v104
    %v603 = vunpack.c.h.b16 %v104
    %v604 = vunpack.c.l.b16 %v107
    %v605 = vunpack.c.h.b16 %v107
    %v606 = vunpack.c.l.b16 %v108
    %v607 = vunpack.c.h.b16 %v108
    %v608 = vunpack.c.l.b16 %v111
    %v609 = vunpack.c.h.b16 %v111
    %v610 = vunpack.c.l.b16 %v112
    %v611 = vunpack.c.h.b16 %v112
    %v612 = vunpack.c.l.b16 %v115
    %v613 = vunpack.c.h.b16 %v115
    %v614 = vunpack.c.l.b16 %v116
    %v615 = vunpack.c.h.b16 %v116
    %v616 = vunpack.c.l.b16 %v119
    %v617 = vunpack.c.h.b16 %v119
    %v618 = vunpack.c.l.b16 %v120
    %v619 = vunpack.c.h.b16 %v120
    %v620 = vunpack.c.l.b16 %v123
    %v621 = vunpack.c.h.b16 %v123
    %v622 = vunpack.c.l.b16 %v124
    %v623 = vunpack.c.h.b16 %v124
    %v624 = vunpack.c.l.b16 %v127
    %v625 = vunpack.c.h.b16 %v127
    %v626 = vunpack.c.l.b16 %v128
    %v627 = vunpack.c.h.b16 %v128
    %v628 = vunpack.c.l.b16 %v131
    %v629 = vunpack.c.h.b16 %v131
    %v630 = vunpack.c.l.b16 %v132
    %v631 = vunpack.c.h.b16 %v132
    %v632 = vunpack.c.l.b16 %v135
    %v633 = vunpack.c.h.b16 %v135
    %v634 = vunpack.c.l.b16 %v136
    %v635 = vunpack.c.h.b16 %v136
    %v636 = vunpack.c.l.b16 %v139
    %v637 = vunpack.c.h.b16 %v139
    %v638 = vunpack.c.l.b16 %v140
    %v639 = vunpack.c.h.b16 %v140
    %v640 = vunpack.c.l.b16 %v143
    %v641 = vunpack.c.h.b16 %v143
    %v642 = vunpack.c.l.b16 %v144
    %v643 = vunpack.c.h.b16 %v144
    %v644 = vunpack.c.l.b16 %v147
    %v645 = vunpack.c.h.b16 %v147
    %v646 = vunpack.c.l.b16 %v148
    %v647 = vunpack.c.h.b16 %v148
    %v648 = vunpack.c.l.b16 %v151
    %v649 = vunpack.c.h.b16 %v151
    %v650 = vunpack.c.l.b16 %v152
    %v651 = vunpack.c.h.b16 %v152
    %v652 = vunpack.c.l.b16 %v155
    %v653 = vunpack.c.h.b16 %v155
    %v654 = vunpack.c.l.b16 %v156
    %v655 = vunpack.c.h.b16 %v156
    %v656 = vunpack.c.l.b16 %v159
    %v657 = vunpack.c.h.b16 %v159
    %v658 = vunpack.c.l.b16 %v160
    %v659 = vunpack.c.h.b16 %v160
    %v660 = vunpack.c.l.b16 %v163
    %v661 = vunpack.c.h.b16 %v163
    %v662 = vunpack.c.l.b16 %v164
    %v663 = vunpack.c.h.b16 %v164
    %v664 = vunpack.c.l.b16 %v167
    %v665 = vunpack.c.h.b16 %v167
    %v666 = vunpack.c.l.b16 %v168
    %v667 = vunpack.c.h.b16 %v168
    %v668 = vpack.c.b16 %v544, %v540
    %v669 = vpack.c.b16 %v545, %v541
    %v670 = vpack.c.b16 %v546, %v542
    %v671 = vpack.c.b16 %v547, %v543
    %v672 = vpack.c.b16 %v552, %v548
    %v673 = vpack.c.b16 %v553, %v549
    %v674 = vpack.c.b16 %v554, %v550
    %v675 = vpack.c.b16 %v555, %v551
    %v676 = vpack.c.b16 %v560, %v556
    %v677 = vpack.c.b16 %v561, %v557
    %v678 = vpack.c.b16 %v562, %v558
    %v679 = vpack.c.b16 %v563, %v559
    %v680 = vpack.c.b16 %v568, %v564
    %v681 = vpack.c.b16 %v569, %v565
    %v682 = vpack.c.b16 %v570, %v566
    %v683 = vpack.c.b16 %v571, %v567
    %v684 = vpack.c.b16 %v576, %v572
    %v685 = vpack.c.b16 %v577, %v573
    %v686 = vpack.c.b16 %v578, %v574
    %v687 = vpack.c.b16 %v579, %v575
    %v688 = vpack.c.b16 %v584, %v580
    %v689 = vpack.c.b16 %v585, %v581
    %v690 = vpack.c.b16 %v586, %v582
    %v691 = vpack.c.b16 %v587, %v583
    %v692 = vpack.c.b16 %v592, %v588
    %v693 = vpack.c.b16 %v593, %v589
    %v694 = vpack.c.b16 %v594, %v590
    %v695 = vpack.c.b16 %v595, %v591
    %v696 = vpack.c.b16 %v600, %v596
    %v697 = vpack.c.b16 %v601, %v597
    %v698 = vpack.c.b16 %v602, %v598
    %v699 = vpack.c.b16 %v603, %v599
    %v700 = vpack.c.b16 %v608, %v604
    %v701 = vpack.c.b16 %v609, %v605
    %v702 = vpack.c.b16 %v610, %v606
    %v703 = vpack.c.b16 %v611, %v607
    %v704 = vpack.c.b16 %v616, %v612
    %v705 = vpack.c.b16 %v617, %v613
    %v706 = vpack.c.b16 %v618, %v614
    %v707 = vpack.c.b16 %v619, %v615
    %v708 = vpack.c.b16 %v624, %v620
    %v709 = vpack.c.b16 %v625, %v621
    %v710 = vpack.c.b16 %v626, %v622
    %v711 = vpack.c.b16 %v627, %v623
    %v712 = vpack.c.b16 %v632, %v628
    %v713 = vpack.c.b16 %v633, %v629
    %v714 = vpack.c.b16 %v634, %v630
    %v715 = vpack.c.b16 %v635, %v631
    %v716 = vpack.c.b16 %v640, %v636
    %v717 = vpack.c.b16 %v641, %v637
    %v718 = vpack.c.b16 %v642, %v638
    %v719 = vpack.c.b16 %v643, %v639
    %v720 = vpack.c.b16 %v648, %v644
    %v721 = vpack.c.b16 %v649, %v645
    %v722 = vpack.c.b16 %v650, %v646
    %v723 = vpack.c.b16 %v651, %v647
    %v724 = vpack.c.b16 %v656, %v652
    %v725 = vpack.c.b16 %v657, %v653
    %v726 = vpack.c.b16 %v658, %v654
    %v727 = vpack.c.b16 %v659, %v655
    %v728 = vpack.c.b16 %v664, %v660
    %v729 = vpack.c.b16 %v665, %v661
    %v730 = vpack.c.b16 %v666, %v662
    %v731 = vpack.c.b16 %v667, %v663
    %796 = vmatprep.subr.bf16.mxu0 %v669
    %797 = vmatpush1.bf16.msra.mxu0 %v668
    %798 = vmatprep.subr.bf16.mxu0 %v673
    %799 = vmatpush1.bf16.msra.mxu0 %v672
    %800 = vmatprep.subr.bf16.mxu0 %v677
    %801 = vmatpush1.bf16.msra.mxu0 %v676
    %802 = vmatprep.subr.bf16.mxu0 %v681
    %803 = vmatpush1.bf16.msra.mxu0 %v680
    %804 = vmatprep.subr.bf16.mxu0 %v685
    %805 = vmatpush1.bf16.msra.mxu0 %v684
    %806 = vmatprep.subr.bf16.mxu0 %v689
    %807 = vmatpush1.bf16.msra.mxu0 %v688
    %808 = vmatprep.subr.bf16.mxu0 %v693
    %809 = vmatpush1.bf16.msra.mxu0 %v692
    %810 = vmatprep.subr.bf16.mxu0 %v697
    %811 = vmatpush1.bf16.msra.mxu0 %v696
    %812 = vmatprep.subr.bf16.mxu0 %v701
    %813 = vmatpush1.bf16.msra.mxu0 %v700
    %814 = vmatprep.subr.bf16.mxu0 %v705
    %815 = vmatpush1.bf16.msra.mxu0 %v704
    %816 = vmatprep.subr.bf16.mxu0 %v709
    %817 = vmatpush1.bf16.msra.mxu0 %v708
    %818 = vmatprep.subr.bf16.mxu0 %v713
    %819 = vmatpush1.bf16.msra.mxu0 %v712
    %820 = vmatprep.subr.bf16.mxu0 %v717
    %821 = vmatpush1.bf16.msra.mxu0 %v716
    %822 = vmatprep.subr.bf16.mxu0 %v721
    %823 = vmatpush1.bf16.msra.mxu0 %v720
    %824 = vmatprep.subr.bf16.mxu0 %v725
    %825 = vmatpush1.bf16.msra.mxu0 %v724
    %826 = vmatprep.subr.bf16.mxu0 %v729
    %827 = vmatpush1.bf16.msra.mxu0 %v728
    %828 = vmatprep.mubr.bf16.mxu0 %v475
    %829 = vmatmul.mubr.bf16.gmra.mrb[0].mxu0 %v475
    %v830 = vpop.f32.mrb[0].mxu0
    %v831 = vadd.f32 0.0, %v830
    %v832 = vpop.f32.mrb[0].mxu0
    %v833 = vadd.f32 0.0, %v832
    %v834 = vpop.f32.mrb[0].mxu0
    %v835 = vpop.f32.mrb[0].mxu0
    %836 = vdwg.mxu0
    %837 = vmatprep.subr.bf16.mxu0 %v671
    %838 = vmatpush1.bf16.msra.mxu0 %v670
    %839 = vmatprep.subr.bf16.mxu0 %v675
    %840 = vmatpush1.bf16.msra.mxu0 %v674
    %841 = vmatprep.subr.bf16.mxu0 %v679
    %842 = vmatpush1.bf16.msra.mxu0 %v678
    %843 = vmatprep.subr.bf16.mxu0 %v683
    %844 = vmatpush1.bf16.msra.mxu0 %v682
    %845 = vmatprep.subr.bf16.mxu0 %v687
    %846 = vmatpush1.bf16.msra.mxu0 %v686
    %847 = vmatprep.subr.bf16.mxu0 %v691
    %848 = vmatpush1.bf16.msra.mxu0 %v690
    %849 = vmatprep.subr.bf16.mxu0 %v695
    %850 = vmatpush1.bf16.msra.mxu0 %v694
    %851 = vmatprep.subr.bf16.mxu0 %v699
    %852 = vmatpush1.bf16.msra.mxu0 %v698
    %853 = vmatprep.subr.bf16.mxu0 %v703
    %854 = vmatpush1.bf16.msra.mxu0 %v702
    %855 = vmatprep.subr.bf16.mxu0 %v707
    %856 = vmatpush1.bf16.msra.mxu0 %v706
    %857 = vmatprep.subr.bf16.mxu0 %v711
    %858 = vmatpush1.bf16.msra.mxu0 %v710
    %859 = vmatprep.subr.bf16.mxu0 %v715
    %860 = vmatpush1.bf16.msra.mxu0 %v714
    %861 = vmatprep.subr.bf16.mxu0 %v719
    %862 = vmatpush1.bf16.msra.mxu0 %v718
    %863 = vmatprep.subr.bf16.mxu0 %v723
    %864 = vmatpush1.bf16.msra.mxu0 %v722
    %865 = vmatprep.subr.bf16.mxu0 %v727
    %866 = vmatpush1.bf16.msra.mxu0 %v726
    %867 = vmatprep.subr.bf16.mxu0 %v731
    %868 = vmatpush1.bf16.msra.mxu0 %v730
    %869 = vmatprep.mubr.bf16.mxu0 %v475
    %870 = vmatmul.mubr.bf16.gmra.mrb[0].mxu0 %v475
    %v871 = vpop.f32.mrb[0].mxu0
    %v872 = vadd.f32 0.0, %v871
    %v873 = vpop.f32.mrb[0].mxu0
    %v874 = vadd.f32 0.0, %v873
    %v875 = vpop.f32.mrb[0].mxu0
    %v876 = vpop.f32.mrb[0].mxu0
    %877 = vdwg.mxu0
    %v878 = vadd.f32 %v831, %v335
    %v879 = vadd.f32 %v833, %v336
    %v880 = vadd.f32 %v872, %v337
    %v881 = vadd.f32 %v874, %v338
    %v882 = vtanh.pop %v878
    %v883 = vtanh.pop %v879
    %v884 = vtanh.pop %v880
    %v885 = vtanh.pop %v881
    %v886 = vmul.f32 %v882, 0.5
    %v887 = vadd.f32 %v886, 0.5
    %v888 = vmul.f32 %v883, 0.5
    %v889 = vadd.f32 %v888, 0.5
    %v890 = vmul.f32 %v885, 0.5
    %v891 = vadd.f32 %v890, 0.5
    %v892 = vmul.f32 %v889, 0.0
    %v893 = vmul.f32 %v887, %v884
    %v894 = vadd.f32 %v892, %v893
    %v895 = vtanh.pop %v894
    %v896 = vmul.f32 %v891, %v895
    %v897 = vpack.c.bf16 %v896, %v896
    %v962 = vunpack.c.l.b16 %v45
    %v963 = vunpack.c.h.b16 %v45
    %v964 = vunpack.c.l.b16 %v46
    %v965 = vunpack.c.h.b16 %v46
    %v966 = vunpack.c.l.b16 %v49
    %v967 = vunpack.c.h.b16 %v49
    %v968 = vunpack.c.l.b16 %v50
    %v969 = vunpack.c.h.b16 %v50
    %v970 = vunpack.c.l.b16 %v53
    %v971 = vunpack.c.h.b16 %v53
    %v972 = vunpack.c.l.b16 %v54
    %v973 = vunpack.c.h.b16 %v54
    %v974 = vunpack.c.l.b16 %v57
    %v975 = vunpack.c.h.b16 %v57
    %v976 = vunpack.c.l.b16 %v58
    %v977 = vunpack.c.h.b16 %v58
    %v978 = vunpack.c.l.b16 %v61
    %v979 = vunpack.c.h.b16 %v61
    %v980 = vunpack.c.l.b16 %v62
    %v981 = vunpack.c.h.b16 %v62
    %v982 = vunpack.c.l.b16 %v65
    %v983 = vunpack.c.h.b16 %v65
    %v984 = vunpack.c.l.b16 %v66
    %v985 = vunpack.c.h.b16 %v66
    %v986 = vunpack.c.l.b16 %v69
    %v987 = vunpack.c.h.b16 %v69
    %v988 = vunpack.c.l.b16 %v70
    %v989 = vunpack.c.h.b16 %v70
    %v990 = vunpack.c.l.b16 %v73
    %v991 = vunpack.c.h.b16 %v73
    %v992 = vunpack.c.l.b16 %v74
    %v993 = vunpack.c.h.b16 %v74
    %v994 = vunpack.c.l.b16 %v77
    %v995 = vunpack.c.h.b16 %v77
    %v996 = vunpack.c.l.b16 %v78
    %v997 = vunpack.c.h.b16 %v78
    %v998 = vunpack.c.l.b16 %v81
    %v999 = vunpack.c.h.b16 %v81
    %v1000 = vunpack.c.l.b16 %v82
    %v1001 = vunpack.c.h.b16 %v82
    %v1002 = vunpack.c.l.b16 %v85
    %v1003 = vunpack.c.h.b16 %v85
    %v1004 = vunpack.c.l.b16 %v86
    %v1005 = vunpack.c.h.b16 %v86
    %v1006 = vunpack.c.l.b16 %v89
    %v1007 = vunpack.c.h.b16 %v89
    %v1008 = vunpack.c.l.b16 %v90
    %v1009 = vunpack.c.h.b16 %v90
    %v1010 = vunpack.c.l.b16 %v93
    %v1011 = vunpack.c.h.b16 %v93
    %v1012 = vunpack.c.l.b16 %v94
    %v1013 = vunpack.c.h.b16 %v94
    %v1014 = vunpack.c.l.b16 %v97
    %v1015 = vunpack.c.h.b16 %v97
    %v1016 = vunpack.c.l.b16 %v98
    %v1017 = vunpack.c.h.b16 %v98
    %v1018 = vunpack.c.l.b16 %v101
    %v1019 = vunpack.c.h.b16 %v101
    %v1020 = vunpack.c.l.b16 %v102
    %v1021 = vunpack.c.h.b16 %v102
    %v1022 = vunpack.c.l.b16 %v105
    %v1023 = vunpack.c.h.b16 %v105
    %v1024 = vunpack.c.l.b16 %v106
    %v1025 = vunpack.c.h.b16 %v106
    %v1026 = vunpack.c.l.b16 %v109
    %v1027 = vunpack.c.h.b16 %v109
    %v1028 = vunpack.c.l.b16 %v110
    %v1029 = vunpack.c.h.b16 %v110
    %v1030 = vunpack.c.l.b16 %v113
    %v1031 = vunpack.c.h.b16 %v113
    %v1032 = vunpack.c.l.b16 %v114
    %v1033 = vunpack.c.h.b16 %v114
    %v1034 = vunpack.c.l.b16 %v117
    %v1035 = vunpack.c.h.b16 %v117
    %v1036 = vunpack.c.l.b16 %v118
    %v1037 = vunpack.c.h.b16 %v118
    %v1038 = vunpack.c.l.b16 %v121
    %v1039 = vunpack.c.h.b16 %v121
    %v1040 = vunpack.c.l.b16 %v122
    %v1041 = vunpack.c.h.b16 %v122
    %v1042 = vunpack.c.l.b16 %v125
    %v1043 = vunpack.c.h.b16 %v125
    %v1044 = vunpack.c.l.b16 %v126
    %v1045 = vunpack.c.h.b16 %v126
    %v1046 = vunpack.c.l.b16 %v129
    %v1047 = vunpack.c.h.b16 %v129
    %v1048 = vunpack.c.l.b16 %v130
    %v1049 = vunpack.c.h.b16 %v130
    %v1050 = vunpack.c.l.b16 %v133
    %v1051 = vunpack.c.h.b16 %v133
    %v1052 = vunpack.c.l.b16 %v134
    %v1053 = vunpack.c.h.b16 %v134
    %v1054 = vunpack.c.l.b16 %v137
    %v1055 = vunpack.c.h.b16 %v137
    %v1056 = vunpack.c.l.b16 %v138
    %v1057 = vunpack.c.h.b16 %v138
    %v1058 = vunpack.c.l.b16 %v141
    %v1059 = vunpack.c.h.b16 %v141
    %v1060 = vunpack.c.l.b16 %v142
    %v1061 = vunpack.c.h.b16 %v142
    %v1062 = vunpack.c.l.b16 %v145
    %v1063 = vunpack.c.h.b16 %v145
    %v1064 = vunpack.c.l.b16 %v146
    %v1065 = vunpack.c.h.b16 %v146
    %v1066 = vunpack.c.l.b16 %v149
    %v1067 = vunpack.c.h.b16 %v149
    %v1068 = vunpack.c.l.b16 %v150
    %v1069 = vunpack.c.h.b16 %v150
    %v1070 = vunpack.c.l.b16 %v153
    %v1071 = vunpack.c.h.b16 %v153
    %v1072 = vunpack.c.l.b16 %v154
    %v1073 = vunpack.c.h.b16 %v154
    %v1074 = vunpack.c.l.b16 %v157
    %v1075 = vunpack.c.h.b16 %v157
    %v1076 = vunpack.c.l.b16 %v158
    %v1077 = vunpack.c.h.b16 %v158
    %v1078 = vunpack.c.l.b16 %v161
    %v1079 = vunpack.c.h.b16 %v161
    %v1080 = vunpack.c.l.b16 %v162
    %v1081 = vunpack.c.h.b16 %v162
    %v1082 = vunpack.c.l.b16 %v165
    %v1083 = vunpack.c.h.b16 %v165
    %v1084 = vunpack.c.l.b16 %v166
    %v1085 = vunpack.c.h.b16 %v166
    %v1086 = vunpack.c.l.b16 %v169
    %v1087 = vunpack.c.h.b16 %v169
    %v1088 = vunpack.c.l.b16 %v170
    %v1089 = vunpack.c.h.b16 %v170
    %v1090 = vpack.c.b16 %v966, %v962
    %v1091 = vpack.c.b16 %v967, %v963
    %v1092 = vpack.c.b16 %v968, %v964
    %v1093 = vpack.c.b16 %v969, %v965
    %v1094 = vpack.c.b16 %v974, %v970
    %v1095 = vpack.c.b16 %v975, %v971
    %v1096 = vpack.c.b16 %v976, %v972
    %v1097 = vpack.c.b16 %v977, %v973
    %v1098 = vpack.c.b16 %v982, %v978
    %v1099 = vpack.c.b16 %v983, %v979
    %v1100 = vpack.c.b16 %v984, %v980
    %v1101 = vpack.c.b16 %v985, %v981
    %v1102 = vpack.c.b16 %v990, %v986
    %v1103 = vpack.c.b16 %v991, %v987
    %v1104 = vpack.c.b16 %v992, %v988
    %v1105 = vpack.c.b16 %v993, %v989
    %v1106 = vpack.c.b16 %v998, %v994
    %v1107 = vpack.c.b16 %v999, %v995
    %v1108 = vpack.c.b16 %v1000, %v996
    %v1109 = vpack.c.b16 %v1001, %v997
    %v1110 = vpack.c.b16 %v1006, %v1002
    %v1111 = vpack.c.b16 %v1007, %v1003
    %v1112 = vpack.c.b16 %v1008, %v1004
    %v1113 = vpack.c.b16 %v1009, %v1005
    %v1114 = vpack.c.b16 %v1014, %v1010
    %v1115 = vpack.c.b16 %v1015, %v1011
    %v1116 = vpack.c.b16 %v1016, %v1012
    %v1117 = vpack.c.b16 %v1017, %v1013
    %v1118 = vpack.c.b16 %v1022, %v1018
    %v1119 = vpack.c.b16 %v1023, %v1019
    %v1120 = vpack.c.b16 %v1024, %v1020
    %v1121 = vpack.c.b16 %v1025, %v1021
    %v1122 = vpack.c.b16 %v1030, %v1026
    %v1123 = vpack.c.b16 %v1031, %v1027
    %v1124 = vpack.c.b16 %v1032, %v1028
    %v1125 = vpack.c.b16 %v1033, %v1029
    %v1126 = vpack.c.b16 %v1038, %v1034
    %v1127 = vpack.c.b16 %v1039, %v1035
    %v1128 = vpack.c.b16 %v1040, %v1036
    %v1129 = vpack.c.b16 %v1041, %v1037
    %v1130 = vpack.c.b16 %v1046, %v1042
    %v1131 = vpack.c.b16 %v1047, %v1043
    %v1132 = vpack.c.b16 %v1048, %v1044
    %v1133 = vpack.c.b16 %v1049, %v1045
    %v1134 = vpack.c.b16 %v1054, %v1050
    %v1135 = vpack.c.b16 %v1055, %v1051
    %v1136 = vpack.c.b16 %v1056, %v1052
    %v1137 = vpack.c.b16 %v1057, %v1053
    %v1138 = vpack.c.b16 %v1062, %v1058
    %v1139 = vpack.c.b16 %v1063, %v1059
    %v1140 = vpack.c.b16 %v1064, %v1060
    %v1141 = vpack.c.b16 %v1065, %v1061
    %v1142 = vpack.c.b16 %v1070, %v1066
    %v1143 = vpack.c.b16 %v1071, %v1067
    %v1144 = vpack.c.b16 %v1072, %v1068
    %v1145 = vpack.c.b16 %v1073, %v1069
    %v1146 = vpack.c.b16 %v1078, %v1074
    %v1147 = vpack.c.b16 %v1079, %v1075
    %v1148 = vpack.c.b16 %v1080, %v1076
    %v1149 = vpack.c.b16 %v1081, %v1077
    %v1150 = vpack.c.b16 %v1086, %v1082
    %v1151 = vpack.c.b16 %v1087, %v1083
    %v1152 = vpack.c.b16 %v1088, %v1084
    %v1153 = vpack.c.b16 %v1089, %v1085
    %1218 = vmatprep.subr.bf16.mxu0 %v669
    %1219 = vmatpush1.bf16.msra.mxu0 %v668
    %1220 = vmatprep.subr.bf16.mxu0 %v673
    %1221 = vmatpush1.bf16.msra.mxu0 %v672
    %1222 = vmatprep.subr.bf16.mxu0 %v677
    %1223 = vmatpush1.bf16.msra.mxu0 %v676
    %1224 = vmatprep.subr.bf16.mxu0 %v681
    %1225 = vmatpush1.bf16.msra.mxu0 %v680
    %1226 = vmatprep.subr.bf16.mxu0 %v685
    %1227 = vmatpush1.bf16.msra.mxu0 %v684
    %1228 = vmatprep.subr.bf16.mxu0 %v689
    %1229 = vmatpush1.bf16.msra.mxu0 %v688
    %1230 = vmatprep.subr.bf16.mxu0 %v693
    %1231 = vmatpush1.bf16.msra.mxu0 %v692
    %1232 = vmatprep.subr.bf16.mxu0 %v697
    %1233 = vmatpush1.bf16.msra.mxu0 %v696
    %1234 = vmatprep.subr.bf16.mxu0 %v701
    %1235 = vmatpush1.bf16.msra.mxu0 %v700
    %1236 = vmatprep.subr.bf16.mxu0 %v705
    %1237 = vmatpush1.bf16.msra.mxu0 %v704
    %1238 = vmatprep.subr.bf16.mxu0 %v709
    %1239 = vmatpush1.bf16.msra.mxu0 %v708
    %1240 = vmatprep.subr.bf16.mxu0 %v713
    %1241 = vmatpush1.bf16.msra.mxu0 %v712
    %1242 = vmatprep.subr.bf16.mxu0 %v717
    %1243 = vmatpush1.bf16.msra.mxu0 %v716
    %1244 = vmatprep.subr.bf16.mxu0 %v721
    %1245 = vmatpush1.bf16.msra.mxu0 %v720
    %1246 = vmatprep.subr.bf16.mxu0 %v725
    %1247 = vmatpush1.bf16.msra.mxu0 %v724
    %1248 = vmatprep.subr.bf16.mxu0 %v729
    %1249 = vmatpush1.bf16.msra.mxu0 %v728
    %1250 = vmatprep.mubr.bf16.mxu0 %v475
    %1251 = vmatmul.mubr.bf16.gmra.mrb[0].mxu0 %v897
    %v1252 = vpop.f32.mrb[0].mxu0
    %v1253 = vadd.f32 0.0, %v1252
    %v1254 = vpop.f32.mrb[0].mxu0
    %v1255 = vadd.f32 0.0, %v1254
    %v1256 = vpop.f32.mrb[0].mxu0
    %v1257 = vpop.f32.mrb[0].mxu0
    %1258 = vdwg.mxu0
    %1259 = vmatprep.subr.bf16.mxu0 %v671
    %1260 = vmatpush1.bf16.msra.mxu0 %v670
    %1261 = vmatprep.subr.bf16.mxu0 %v675
    %1262 = vmatpush1.bf16.msra.mxu0 %v674
    %1263 = vmatprep.subr.bf16.mxu0 %v679
    %1264 = vmatpush1.bf16.msra.mxu0 %v678
    %1265 = vmatprep.subr.bf16.mxu0 %v683
    %1266 = vmatpush1.bf16.msra.mxu0 %v682
    %1267 = vmatprep.subr.bf16.mxu0 %v687
    %1268 = vmatpush1.bf16.msra.mxu0 %v686
    %1269 = vmatprep.subr.bf16.mxu0 %v691
    %1270 = vmatpush1.bf16.msra.mxu0 %v690
    %1271 = vmatprep.subr.bf16.mxu0 %v695
    %1272 = vmatpush1.bf16.msra.mxu0 %v694
    %1273 = vmatprep.subr.bf16.mxu0 %v699
    %1274 = vmatpush1.bf16.msra.mxu0 %v698
    %1275 = vmatprep.subr.bf16.mxu0 %v703
    %1276 = vmatpush1.bf16.msra.mxu0 %v702
    %1277 = vmatprep.subr.bf16.mxu0 %v707
    %1278 = vmatpush1.bf16.msra.mxu0 %v706
    %1279 = vmatprep.subr.bf16.mxu0 %v711
    %1280 = vmatpush1.bf16.msra.mxu0 %v710
    %1281 = vmatprep.subr.bf16.mxu0 %v715
    %1282 = vmatpush1.bf16.msra.mxu0 %v714
    %1283 = vmatprep.subr.bf16.mxu0 %v719
    %1284 = vmatpush1.bf16.msra.mxu0 %v718
    %1285 = vmatprep.subr.bf16.mxu0 %v723
    %1286 = vmatpush1.bf16.msra.mxu0 %v722
    %1287 = vmatprep.subr.bf16.mxu0 %v727
    %1288 = vmatpush1.bf16.msra.mxu0 %v726
    %1289 = vmatprep.subr.bf16.mxu0 %v731
    %1290 = vmatpush1.bf16.msra.mxu0 %v730
    %1291 = vmatprep.mubr.bf16.mxu0 %v475
    %1292 = vmatmul.mubr.bf16.gmra.mrb[0].mxu0 %v897
    %v1293 = vpop.f32.mrb[0].mxu0
    %v1294 = vadd.f32 0.0, %v1293
    %v1295 = vpop.f32.mrb[0].mxu0
    %v1296 = vadd.f32 0.0, %v1295
    %v1297 = vpop.f32.mrb[0].mxu0
    %v1298 = vpop.f32.mrb[0].mxu0
    %1299 = vdwg.mxu0
    %1300 = vmatprep.subr.bf16.mxu0 %v1091
    %1301 = vmatpush1.bf16.msra.mxu0 %v1090
    %1302 = vmatprep.subr.bf16.mxu0 %v1095
    %1303 = vmatpush1.bf16.msra.mxu0 %v1094
    %1304 = vmatprep.subr.bf16.mxu0 %v1099
    %1305 = vmatpush1.bf16.msra.mxu0 %v1098
    %1306 = vmatprep.subr.bf16.mxu0 %v1103
    %1307 = vmatpush1.bf16.msra.mxu0 %v1102
    %1308 = vmatprep.subr.bf16.mxu0 %v1107
    %1309 = vmatpush1.bf16.msra.mxu0 %v1106
    %1310 = vmatprep.subr.bf16.mxu0 %v1111
    %1311 = vmatpush1.bf16.msra.mxu0 %v1110
    %1312 = vmatprep.subr.bf16.mxu0 %v1115
    %1313 = vmatpush1.bf16.msra.mxu0 %v1114
    %1314 = vmatprep.subr.bf16.mxu0 %v1119
    %1315 = vmatpush1.bf16.msra.mxu0 %v1118
    %1316 = vmatprep.subr.bf16.mxu0 %v1123
    %1317 = vmatpush1.bf16.msra.mxu0 %v1122
    %1318 = vmatprep.subr.bf16.mxu0 %v1127
    %1319 = vmatpush1.bf16.msra.mxu0 %v1126
    %1320 = vmatprep.subr.bf16.mxu0 %v1131
    %1321 = vmatpush1.bf16.msra.mxu0 %v1130
    %1322 = vmatprep.subr.bf16.mxu0 %v1135
    %1323 = vmatpush1.bf16.msra.mxu0 %v1134
    %1324 = vmatprep.subr.bf16.mxu0 %v1139
    %1325 = vmatpush1.bf16.msra.mxu0 %v1138
    %1326 = vmatprep.subr.bf16.mxu0 %v1143
    %1327 = vmatpush1.bf16.msra.mxu0 %v1142
    %1328 = vmatprep.subr.bf16.mxu0 %v1147
    %1329 = vmatpush1.bf16.msra.mxu0 %v1146
    %1330 = vmatprep.subr.bf16.mxu0 %v1151
    %1331 = vmatpush1.bf16.msra.mxu0 %v1150
    %1332 = vmatprep.mubr.bf16.mxu0 %v475
    %1333 = vmatmul.mubr.bf16.gmra.mrb[0].mxu0 %v897
    %v1334 = vpop.f32.mrb[0].mxu0
    %v1335 = vadd.f32 0.0, %v1334
    %v1336 = vpop.f32.mrb[0].mxu0
    %v1337 = vadd.f32 0.0, %v1336
    %v1338 = vpop.f32.mrb[0].mxu0
    %v1339 = vpop.f32.mrb[0].mxu0
    %1340 = vdwg.mxu0
    %1341 = vmatprep.subr.bf16.mxu0 %v1093
    %1342 = vmatpush1.bf16.msra.mxu0 %v1092
    %1343 = vmatprep.subr.bf16.mxu0 %v1097
    %1344 = vmatpush1.bf16.msra.mxu0 %v1096
    %1345 = vmatprep.subr.bf16.mxu0 %v1101
    %1346 = vmatpush1.bf16.msra.mxu0 %v1100
    %1347 = vmatprep.subr.bf16.mxu0 %v1105
    %1348 = vmatpush1.bf16.msra.mxu0 %v1104
    %1349 = vmatprep.subr.bf16.mxu0 %v1109
    %1350 = vmatpush1.bf16.msra.mxu0 %v1108
    %1351 = vmatprep.subr.bf16.mxu0 %v1113
    %1352 = vmatpush1.bf16.msra.mxu0 %v1112
    %1353 = vmatprep.subr.bf16.mxu0 %v1117
    %1354 = vmatpush1.bf16.msra.mxu0 %v1116
    %1355 = vmatprep.subr.bf16.mxu0 %v1121
    %1356 = vmatpush1.bf16.msra.mxu0 %v1120
    %1357 = vmatprep.subr.bf16.mxu0 %v1125
    %1358 = vmatpush1.bf16.msra.mxu0 %v1124
    %1359 = vmatprep.subr.bf16.mxu0 %v1129
    %1360 = vmatpush1.bf16.msra.mxu0 %v1128
    %1361 = vmatprep.subr.bf16.mxu0 %v1133
    %1362 = vmatpush1.bf16.msra.mxu0 %v1132
    %1363 = vmatprep.subr.bf16.mxu0 %v1137
    %1364 = vmatpush1.bf16.msra.mxu0 %v1136
    %1365 = vmatprep.subr.bf16.mxu0 %v1141
    %1366 = vmatpush1.bf16.msra.mxu0 %v1140
    %1367 = vmatprep.subr.bf16.mxu0 %v1145
    %1368 = vmatpush1.bf16.msra.mxu0 %v1144
    %1369 = vmatprep.subr.bf16.mxu0 %v1149
    %1370 = vmatpush1.bf16.msra.mxu0 %v1148
    %1371 = vmatprep.subr.bf16.mxu0 %v1153
    %1372 = vmatpush1.bf16.msra.mxu0 %v1152
    %1373 = vmatprep.mubr.bf16.mxu0 %v475
    %1374 = vmatmul.mubr.bf16.gmra.mrb[0].mxu0 %v897
    %v1375 = vpop.f32.mrb[0].mxu0
    %v1376 = vadd.f32 0.0, %v1375
    %v1377 = vpop.f32.mrb[0].mxu0
    %v1378 = vadd.f32 0.0, %v1377
    %v1379 = vpop.f32.mrb[0].mxu0
    %v1380 = vpop.f32.mrb[0].mxu0
    %1381 = vdwg.mxu0
    %v1382 = vadd.f32 %v1253, %v351
    %v1383 = vadd.f32 %v1255, %v352
    %v1384 = vadd.f32 %v1294, %v353
    %v1385 = vadd.f32 %v1296, %v354
    %v1386 = vtanh.pop %v1382
    %v1387 = vtanh.pop %v1383
    %v1388 = vtanh.pop %v1384
    %v1389 = vtanh.pop %v1385
    %v1390 = vmul.f32 %v1386, 0.5
    %v1391 = vadd.f32 %v1390, 0.5
    %v1392 = vmul.f32 %v1387, 0.5
    %v1393 = vadd.f32 %v1392, 0.5
    %v1394 = vmul.f32 %v1389, 0.5
    %v1395 = vadd.f32 %v1394, 0.5
    %v1396 = vmul.f32 %v1393, %v894
    %v1397 = vmul.f32 %v1391, %v1388
    %v1398 = vadd.f32 %v1396, %v1397
    %v1399 = vtanh.pop %v1398
    %v1400 = vmul.f32 %v1395, %v1399
    %v1401 = vlaneseq
    %v1402 = vshrl.u32 %v1401, 7
    %v1403 = vsub.s32 1, %v1402
    %v1404 = vrot.slane %v42, %v1403
    %v1405 = vlaneseq
    %v1406 = vshrl.u32 %v1405, 7
    %v1407 = vsub.s32 3, %v1406
    %v1408 = vrot.slane %v42, %v1407
    %v1409 = vlaneseq
    %v1410 = vshrl.u32 %v1409, 7
    %v1411 = vsub.s32 5, %v1410
    %v1412 = vrot.slane %v42, %v1411
    %v1413 = vlaneseq
    %v1414 = vshrl.u32 %v1413, 7
    %v1415 = vsub.s32 7, %v1414
    %v1416 = vrot.slane %v42, %v1415
    %v1421 = vlaneseq
    %v1422 = vshrl.u32 %v1421, 7
    %v1423 = vsub.s32 1, %v1422
    %v1424 = vrot.slane %v1404, %v1423
    %v1425 = vlaneseq
    %v1426 = vshrl.u32 %v1425, 7
    %v1427 = vsub.s32 1, %v1426
    %v1428 = vrot.slane %v1408, %v1427
    %v1429 = vlaneseq
    %v1430 = vshrl.u32 %v1429, 7
    %v1431 = vsub.s32 1, %v1430
    %v1432 = vrot.slane %v1412, %v1431
    %v1433 = vlaneseq
    %v1434 = vshrl.u32 %v1433, 7
    %v1435 = vsub.s32 1, %v1434
    %v1436 = vrot.slane %v1416, %v1435
    %v1437 = vadd.f32 %v1335, %v1424
    %v1438 = vadd.f32 %v1337, %v1428
    %v1439 = vadd.f32 %v1376, %v1432
    %v1440 = vadd.f32 %v1378, %v1436
    %v1441 = vtanh.pop %v1437
    %v1442 = vtanh.pop %v1438
    %v1443 = vtanh.pop %v1439
    %v1444 = vtanh.pop %v1440
    %v1445 = vmul.f32 %v1441, 0.5
    %v1446 = vadd.f32 %v1445, 0.5
    %v1447 = vmul.f32 %v1442, 0.5
    %v1448 = vadd.f32 %v1447, 0.5
    %v1449 = vmul.f32 %v1444, 0.5
    %v1450 = vadd.f32 %v1449, 0.5
    %v1451 = vmul.f32 %v1448, 0.0
    %v1452 = vmul.f32 %v1446, %v1443
    %v1453 = vadd.f32 %v1451, %v1452
    %v1454 = vtanh.pop %v1453
    %v1455 = vmul.f32 %v1450, %v1454
    %v1456 = vpack.c.bf16 %v1400, %v1400
    %v1457 = vpack.c.bf16 %v1455, %v1455
    %1458 = vmatprep.subr.bf16.mxu0 %v669
    %1459 = vmatpush1.bf16.msra.mxu0 %v668
    %1460 = vmatprep.subr.bf16.mxu0 %v673
    %1461 = vmatpush1.bf16.msra.mxu0 %v672
    %1462 = vmatprep.subr.bf16.mxu0 %v677
    %1463 = vmatpush1.bf16.msra.mxu0 %v676
    %1464 = vmatprep.subr.bf16.mxu0 %v681
    %1465 = vmatpush1.bf16.msra.mxu0 %v680
    %1466 = vmatprep.subr.bf16.mxu0 %v685
    %1467 = vmatpush1.bf16.msra.mxu0 %v684
    %1468 = vmatprep.subr.bf16.mxu0 %v689
    %1469 = vmatpush1.bf16.msra.mxu0 %v688
    %1470 = vmatprep.subr.bf16.mxu0 %v693
    %1471 = vmatpush1.bf16.msra.mxu0 %v692
    %1472 = vmatprep.subr.bf16.mxu0 %v697
    %1473 = vmatpush1.bf16.msra.mxu0 %v696
    %1474 = vmatprep.subr.bf16.mxu0 %v701
    %1475 = vmatpush1.bf16.msra.mxu0 %v700
    %1476 = vmatprep.subr.bf16.mxu0 %v705
    %1477 = vmatpush1.bf16.msra.mxu0 %v704
    %1478 = vmatprep.subr.bf16.mxu0 %v709
    %1479 = vmatpush1.bf16.msra.mxu0 %v708
    %1480 = vmatprep.subr.bf16.mxu0 %v713
    %1481 = vmatpush1.bf16.msra.mxu0 %v712
    %1482 = vmatprep.subr.bf16.mxu0 %v717
    %1483 = vmatpush1.bf16.msra.mxu0 %v716
    %1484 = vmatprep.subr.bf16.mxu0 %v721
    %1485 = vmatpush1.bf16.msra.mxu0 %v720
    %1486 = vmatprep.subr.bf16.mxu0 %v725
    %1487 = vmatpush1.bf16.msra.mxu0 %v724
    %1488 = vmatprep.subr.bf16.mxu0 %v729
    %1489 = vmatpush1.bf16.msra.mxu0 %v728
    %1490 = vmatprep.mubr.bf16.mxu0 %v1457
    %1491 = vmatmul.mubr.bf16.gmra.mrb[0].mxu0 %v1456
    %v1492 = vpop.f32.mrb[0].mxu0
    %v1493 = vadd.f32 0.0, %v1492
    %v1494 = vpop.f32.mrb[0].mxu0
    %v1495 = vadd.f32 0.0, %v1494
    %v1496 = vpop.f32.mrb[0].mxu0
    %v1497 = vpop.f32.mrb[0].mxu0
    %1498 = vdwg.mxu0
    %1499 = vmatprep.subr.bf16.mxu0 %v671
    %1500 = vmatpush1.bf16.msra.mxu0 %v670
    %1501 = vmatprep.subr.bf16.mxu0 %v675
    %1502 = vmatpush1.bf16.msra.mxu0 %v674
    %1503 = vmatprep.subr.bf16.mxu0 %v679
    %1504 = vmatpush1.bf16.msra.mxu0 %v678
    %1505 = vmatprep.subr.bf16.mxu0 %v683
    %1506 = vmatpush1.bf16.msra.mxu0 %v682
    %1507 = vmatprep.subr.bf16.mxu0 %v687
    %1508 = vmatpush1.bf16.msra.mxu0 %v686
    %1509 = vmatprep.subr.bf16.mxu0 %v691
    %1510 = vmatpush1.bf16.msra.mxu0 %v690
    %1511 = vmatprep.subr.bf16.mxu0 %v695
    %1512 = vmatpush1.bf16.msra.mxu0 %v694
    %1513 = vmatprep.subr.bf16.mxu0 %v699
    %1514 = vmatpush1.bf16.msra.mxu0 %v698
    %1515 = vmatprep.subr.bf16.mxu0 %v703
    %1516 = vmatpush1.bf16.msra.mxu0 %v702
    %1517 = vmatprep.subr.bf16.mxu0 %v707
    %1518 = vmatpush1.bf16.msra.mxu0 %v706
    %1519 = vmatprep.subr.bf16.mxu0 %v711
    %1520 = vmatpush1.bf16.msra.mxu0 %v710
    %1521 = vmatprep.subr.bf16.mxu0 %v715
    %1522 = vmatpush1.bf16.msra.mxu0 %v714
    %1523 = vmatprep.subr.bf16.mxu0 %v719
    %1524 = vmatpush1.bf16.msra.mxu0 %v718
    %1525 = vmatprep.subr.bf16.mxu0 %v723
    %1526 = vmatpush1.bf16.msra.mxu0 %v722
    %1527 = vmatprep.subr.bf16.mxu0 %v727
    %1528 = vmatpush1.bf16.msra.mxu0 %v726
    %1529 = vmatprep.subr.bf16.mxu0 %v731
    %1530 = vmatpush1.bf16.msra.mxu0 %v730
    %1531 = vmatprep.mubr.bf16.mxu0 %v1457
    %1532 = vmatmul.mubr.bf16.gmra.mrb[0].mxu0 %v1456
    %v1533 = vpop.f32.mrb[0].mxu0
    %v1534 = vadd.f32 0.0, %v1533
    %v1535 = vpop.f32.mrb[0].mxu0
    %v1536 = vadd.f32 0.0, %v1535
    %v1537 = vpop.f32.mrb[0].mxu0
    %v1538 = vpop.f32.mrb[0].mxu0
    %1539 = vdwg.mxu0
    %1540 = vmatprep.subr.bf16.mxu0 %v1091
    %1541 = vmatpush1.bf16.msra.mxu0 %v1090
    %1542 = vmatprep.subr.bf16.mxu0 %v1095
    %1543 = vmatpush1.bf16.msra.mxu0 %v1094
    %1544 = vmatprep.subr.bf16.mxu0 %v1099
    %1545 = vmatpush1.bf16.msra.mxu0 %v1098
    %1546 = vmatprep.subr.bf16.mxu0 %v1103
    %1547 = vmatpush1.bf16.msra.mxu0 %v1102
    %1548 = vmatprep.subr.bf16.mxu0 %v1107
    %1549 = vmatpush1.bf16.msra.mxu0 %v1106
    %1550 = vmatprep.subr.bf16.mxu0 %v1111
    %1551 = vmatpush1.bf16.msra.mxu0 %v1110
    %1552 = vmatprep.subr.bf16.mxu0 %v1115
    %1553 = vmatpush1.bf16.msra.mxu0 %v1114
    %1554 = vmatprep.subr.bf16.mxu0 %v1119
    %1555 = vmatpush1.bf16.msra.mxu0 %v1118
    %1556 = vmatprep.subr.bf16.mxu0 %v1123
    %1557 = vmatpush1.bf16.msra.mxu0 %v1122
    %1558 = vmatprep.subr.bf16.mxu0 %v1127
    %1559 = vmatpush1.bf16.msra.mxu0 %v1126
    %1560 = vmatprep.subr.bf16.mxu0 %v1131
    %1561 = vmatpush1.bf16.msra.mxu0 %v1130
    %1562 = vmatprep.subr.bf16.mxu0 %v1135
    %1563 = vmatpush1.bf16.msra.mxu0 %v1134
    %1564 = vmatprep.subr.bf16.mxu0 %v1139
    %1565 = vmatpush1.bf16.msra.mxu0 %v1138
    %1566 = vmatprep.subr.bf16.mxu0 %v1143
    %1567 = vmatpush1.bf16.msra.mxu0 %v1142
    %1568 = vmatprep.subr.bf16.mxu0 %v1147
    %1569 = vmatpush1.bf16.msra.mxu0 %v1146
    %1570 = vmatprep.subr.bf16.mxu0 %v1151
    %1571 = vmatpush1.bf16.msra.mxu0 %v1150
    %1572 = vmatprep.mubr.bf16.mxu0 %v1457
    %1573 = vmatmul.mubr.bf16.gmra.mrb[0].mxu0 %v1456
    %v1574 = vpop.f32.mrb[0].mxu0
    %v1575 = vadd.f32 0.0, %v1574
    %v1576 = vpop.f32.mrb[0].mxu0
    %v1577 = vadd.f32 0.0, %v1576
    %v1578 = vpop.f32.mrb[0].mxu0
    %v1579 = vpop.f32.mrb[0].mxu0
    %1580 = vdwg.mxu0
    %1581 = vmatprep.subr.bf16.mxu0 %v1093
    %1582 = vmatpush1.bf16.msra.mxu0 %v1092
    %1583 = vmatprep.subr.bf16.mxu0 %v1097
    %1584 = vmatpush1.bf16.msra.mxu0 %v1096
    %1585 = vmatprep.subr.bf16.mxu0 %v1101
    %1586 = vmatpush1.bf16.msra.mxu0 %v1100
    %1587 = vmatprep.subr.bf16.mxu0 %v1105
    %1588 = vmatpush1.bf16.msra.mxu0 %v1104
    %1589 = vmatprep.subr.bf16.mxu0 %v1109
    %1590 = vmatpush1.bf16.msra.mxu0 %v1108
    %1591 = vmatprep.subr.bf16.mxu0 %v1113
    %1592 = vmatpush1.bf16.msra.mxu0 %v1112
    %1593 = vmatprep.subr.bf16.mxu0 %v1117
    %1594 = vmatpush1.bf16.msra.mxu0 %v1116
    %1595 = vmatprep.subr.bf16.mxu0 %v1121
    %1596 = vmatpush1.bf16.msra.mxu0 %v1120
    %1597 = vmatprep.subr.bf16.mxu0 %v1125
    %1598 = vmatpush1.bf16.msra.mxu0 %v1124
    %1599 = vmatprep.subr.bf16.mxu0 %v1129
    %1600 = vmatpush1.bf16.msra.mxu0 %v1128
    %1601 = vmatprep.subr.bf16.mxu0 %v1133
    %1602 = vmatpush1.bf16.msra.mxu0 %v1132
    %1603 = vmatprep.subr.bf16.mxu0 %v1137
    %1604 = vmatpush1.bf16.msra.mxu0 %v1136
    %1605 = vmatprep.subr.bf16.mxu0 %v1141
    %1606 = vmatpush1.bf16.msra.mxu0 %v1140
    %1607 = vmatprep.subr.bf16.mxu0 %v1145
    %1608 = vmatpush1.bf16.msra.mxu0 %v1144
    %1609 = vmatprep.subr.bf16.mxu0 %v1149
    %1610 = vmatpush1.bf16.msra.mxu0 %v1148
    %1611 = vmatprep.subr.bf16.mxu0 %v1153
    %1612 = vmatpush1.bf16.msra.mxu0 %v1152
    %1613 = vmatprep.mubr.bf16.mxu0 %v1457
    %1614 = vmatmul.mubr.bf16.gmra.mrb[0].mxu0 %v1456
    %v1615 = vpop.f32.mrb[0].mxu0
    %v1616 = vadd.f32 0.0, %v1615
    %v1617 = vpop.f32.mrb[0].mxu0
    %v1618 = vadd.f32 0.0, %v1617
    %v1619 = vpop.f32.mrb[0].mxu0
    %v1620 = vpop.f32.mrb[0].mxu0
    %1621 = vdwg.mxu0
    %v1622 = vadd.f32 %v1493, %v371
    %v1623 = vadd.f32 %v1495, %v372
    %v1624 = vadd.f32 %v1534, %v373
    %v1625 = vadd.f32 %v1536, %v374
    %v1626 = vtanh.pop %v1622
    %v1627 = vtanh.pop %v1623
    %v1628 = vtanh.pop %v1624
    %v1629 = vtanh.pop %v1625
    %v1630 = vmul.f32 %v1626, 0.5
    %v1631 = vadd.f32 %v1630, 0.5
    %v1632 = vmul.f32 %v1627, 0.5
    %v1633 = vadd.f32 %v1632, 0.5
    %v1634 = vmul.f32 %v1629, 0.5
    %v1635 = vadd.f32 %v1634, 0.5
    %v1636 = vmul.f32 %v1633, %v1398
    %v1637 = vmul.f32 %v1631, %v1628
    %v1638 = vadd.f32 %v1636, %v1637
    %v1639 = vtanh.pop %v1638
    %v1640 = vmul.f32 %v1635, %v1639
    %v1641 = vadd.f32 %v1575, %v1424
    %v1642 = vadd.f32 %v1577, %v1428
    %v1643 = vadd.f32 %v1616, %v1432
    %v1644 = vadd.f32 %v1618, %v1436
    %v1645 = vtanh.pop %v1641
    %v1646 = vtanh.pop %v1642
    %v1647 = vtanh.pop %v1643
    %v1648 = vtanh.pop %v1644
    %v1649 = vmul.f32 %v1645, 0.5
    %v1650 = vadd.f32 %v1649, 0.5
    %v1651 = vmul.f32 %v1646, 0.5
    %v1652 = vadd.f32 %v1651, 0.5
    %v1653 = vmul.f32 %v1648, 0.5
    %v1654 = vadd.f32 %v1653, 0.5
    %v1655 = vmul.f32 %v1652, %v1453
    %v1656 = vmul.f32 %v1650, %v1647
    %v1657 = vadd.f32 %v1655, %v1656
    %v1658 = vtanh.pop %v1657
    %v1659 = vmul.f32 %v1654, %v1658
    %v1660 = vpack.c.bf16 %v1640, %v1640
    %v1661 = vpack.c.bf16 %v1659, %v1659
    %1662 = vmatprep.subr.bf16.mxu0 %v669
    %1663 = vmatpush1.bf16.msra.mxu0 %v668
    %1664 = vmatprep.subr.bf16.mxu0 %v673
    %1665 = vmatpush1.bf16.msra.mxu0 %v672
    %1666 = vmatprep.subr.bf16.mxu0 %v677
    %1667 = vmatpush1.bf16.msra.mxu0 %v676
    %1668 = vmatprep.subr.bf16.mxu0 %v681
    %1669 = vmatpush1.bf16.msra.mxu0 %v680
    %1670 = vmatprep.subr.bf16.mxu0 %v685
    %1671 = vmatpush1.bf16.msra.mxu0 %v684
    %1672 = vmatprep.subr.bf16.mxu0 %v689
    %1673 = vmatpush1.bf16.msra.mxu0 %v688
    %1674 = vmatprep.subr.bf16.mxu0 %v693
    %1675 = vmatpush1.bf16.msra.mxu0 %v692
    %1676 = vmatprep.subr.bf16.mxu0 %v697
    %1677 = vmatpush1.bf16.msra.mxu0 %v696
    %1678 = vmatprep.subr.bf16.mxu0 %v701
    %1679 = vmatpush1.bf16.msra.mxu0 %v700
    %1680 = vmatprep.subr.bf16.mxu0 %v705
    %1681 = vmatpush1.bf16.msra.mxu0 %v704
    %1682 = vmatprep.subr.bf16.mxu0 %v709
    %1683 = vmatpush1.bf16.msra.mxu0 %v708
    %1684 = vmatprep.subr.bf16.mxu0 %v713
    %1685 = vmatpush1.bf16.msra.mxu0 %v712
    %1686 = vmatprep.subr.bf16.mxu0 %v717
    %1687 = vmatpush1.bf16.msra.mxu0 %v716
    %1688 = vmatprep.subr.bf16.mxu0 %v721
    %1689 = vmatpush1.bf16.msra.mxu0 %v720
    %1690 = vmatprep.subr.bf16.mxu0 %v725
    %1691 = vmatpush1.bf16.msra.mxu0 %v724
    %1692 = vmatprep.subr.bf16.mxu0 %v729
    %1693 = vmatpush1.bf16.msra.mxu0 %v728
    %1694 = vmatprep.mubr.bf16.mxu0 %v1661
    %1695 = vmatmul.mubr.bf16.gmra.mrb[0].mxu0 %v1660
    %v1696 = vpop.f32.mrb[0].mxu0
    %v1697 = vadd.f32 0.0, %v1696
    %v1698 = vpop.f32.mrb[0].mxu0
    %v1699 = vadd.f32 0.0, %v1698
    %v1700 = vpop.f32.mrb[0].mxu0
    %v1701 = vpop.f32.mrb[0].mxu0
    %1702 = vdwg.mxu0
    %1703 = vmatprep.subr.bf16.mxu0 %v671
    %1704 = vmatpush1.bf16.msra.mxu0 %v670
    %1705 = vmatprep.subr.bf16.mxu0 %v675
    %1706 = vmatpush1.bf16.msra.mxu0 %v674
    %1707 = vmatprep.subr.bf16.mxu0 %v679
    %1708 = vmatpush1.bf16.msra.mxu0 %v678
    %1709 = vmatprep.subr.bf16.mxu0 %v683
    %1710 = vmatpush1.bf16.msra.mxu0 %v682
    %1711 = vmatprep.subr.bf16.mxu0 %v687
    %1712 = vmatpush1.bf16.msra.mxu0 %v686
    %1713 = vmatprep.subr.bf16.mxu0 %v691
    %1714 = vmatpush1.bf16.msra.mxu0 %v690
    %1715 = vmatprep.subr.bf16.mxu0 %v695
    %1716 = vmatpush1.bf16.msra.mxu0 %v694
    %1717 = vmatprep.subr.bf16.mxu0 %v699
    %1718 = vmatpush1.bf16.msra.mxu0 %v698
    %1719 = vmatprep.subr.bf16.mxu0 %v703
    %1720 = vmatpush1.bf16.msra.mxu0 %v702
    %1721 = vmatprep.subr.bf16.mxu0 %v707
    %1722 = vmatpush1.bf16.msra.mxu0 %v706
    %1723 = vmatprep.subr.bf16.mxu0 %v711
    %1724 = vmatpush1.bf16.msra.mxu0 %v710
    %1725 = vmatprep.subr.bf16.mxu0 %v715
    %1726 = vmatpush1.bf16.msra.mxu0 %v714
    %1727 = vmatprep.subr.bf16.mxu0 %v719
    %1728 = vmatpush1.bf16.msra.mxu0 %v718
    %1729 = vmatprep.subr.bf16.mxu0 %v723
    %1730 = vmatpush1.bf16.msra.mxu0 %v722
    %1731 = vmatprep.subr.bf16.mxu0 %v727
    %1732 = vmatpush1.bf16.msra.mxu0 %v726
    %1733 = vmatprep.subr.bf16.mxu0 %v731
    %1734 = vmatpush1.bf16.msra.mxu0 %v730
    %1735 = vmatprep.mubr.bf16.mxu0 %v1661
    %1736 = vmatmul.mubr.bf16.gmra.mrb[0].mxu0 %v1660
    %v1737 = vpop.f32.mrb[0].mxu0
    %v1738 = vadd.f32 0.0, %v1737
    %v1739 = vpop.f32.mrb[0].mxu0
    %v1740 = vadd.f32 0.0, %v1739
    %v1741 = vpop.f32.mrb[0].mxu0
    %v1742 = vpop.f32.mrb[0].mxu0
    %1743 = vdwg.mxu0
    %1744 = vmatprep.subr.bf16.mxu0 %v1091
    %1745 = vmatpush1.bf16.msra.mxu0 %v1090
    %1746 = vmatprep.subr.bf16.mxu0 %v1095
    %1747 = vmatpush1.bf16.msra.mxu0 %v1094
    %1748 = vmatprep.subr.bf16.mxu0 %v1099
    %1749 = vmatpush1.bf16.msra.mxu0 %v1098
    %1750 = vmatprep.subr.bf16.mxu0 %v1103
    %1751 = vmatpush1.bf16.msra.mxu0 %v1102
    %1752 = vmatprep.subr.bf16.mxu0 %v1107
    %1753 = vmatpush1.bf16.msra.mxu0 %v1106
    %1754 = vmatprep.subr.bf16.mxu0 %v1111
    %1755 = vmatpush1.bf16.msra.mxu0 %v1110
    %1756 = vmatprep.subr.bf16.mxu0 %v1115
    %1757 = vmatpush1.bf16.msra.mxu0 %v1114
    %1758 = vmatprep.subr.bf16.mxu0 %v1119
    %1759 = vmatpush1.bf16.msra.mxu0 %v1118
    %1760 = vmatprep.subr.bf16.mxu0 %v1123
    %1761 = vmatpush1.bf16.msra.mxu0 %v1122
    %1762 = vmatprep.subr.bf16.mxu0 %v1127
    %1763 = vmatpush1.bf16.msra.mxu0 %v1126
    %1764 = vmatprep.subr.bf16.mxu0 %v1131
    %1765 = vmatpush1.bf16.msra.mxu0 %v1130
    %1766 = vmatprep.subr.bf16.mxu0 %v1135
    %1767 = vmatpush1.bf16.msra.mxu0 %v1134
    %1768 = vmatprep.subr.bf16.mxu0 %v1139
    %1769 = vmatpush1.bf16.msra.mxu0 %v1138
    %1770 = vmatprep.subr.bf16.mxu0 %v1143
    %1771 = vmatpush1.bf16.msra.mxu0 %v1142
    %1772 = vmatprep.subr.bf16.mxu0 %v1147
    %1773 = vmatpush1.bf16.msra.mxu0 %v1146
    %1774 = vmatprep.subr.bf16.mxu0 %v1151
    %1775 = vmatpush1.bf16.msra.mxu0 %v1150
    %1776 = vmatprep.mubr.bf16.mxu0 %v1661
    %1777 = vmatmul.mubr.bf16.gmra.mrb[0].mxu0 %v1660
    %v1778 = vpop.f32.mrb[0].mxu0
    %v1779 = vadd.f32 0.0, %v1778
    %v1780 = vpop.f32.mrb[0].mxu0
    %v1781 = vadd.f32 0.0, %v1780
    %v1782 = vpop.f32.mrb[0].mxu0
    %v1783 = vpop.f32.mrb[0].mxu0
    %1784 = vdwg.mxu0
    %1785 = vmatprep.subr.bf16.mxu0 %v1093
    %1786 = vmatpush1.bf16.msra.mxu0 %v1092
    %1787 = vmatprep.subr.bf16.mxu0 %v1097
    %1788 = vmatpush1.bf16.msra.mxu0 %v1096
    %1789 = vmatprep.subr.bf16.mxu0 %v1101
    %1790 = vmatpush1.bf16.msra.mxu0 %v1100
    %1791 = vmatprep.subr.bf16.mxu0 %v1105
    %1792 = vmatpush1.bf16.msra.mxu0 %v1104
    %1793 = vmatprep.subr.bf16.mxu0 %v1109
    %1794 = vmatpush1.bf16.msra.mxu0 %v1108
    %1795 = vmatprep.subr.bf16.mxu0 %v1113
    %1796 = vmatpush1.bf16.msra.mxu0 %v1112
    %1797 = vmatprep.subr.bf16.mxu0 %v1117
    %1798 = vmatpush1.bf16.msra.mxu0 %v1116
    %1799 = vmatprep.subr.bf16.mxu0 %v1121
    %1800 = vmatpush1.bf16.msra.mxu0 %v1120
    %1801 = vmatprep.subr.bf16.mxu0 %v1125
    %1802 = vmatpush1.bf16.msra.mxu0 %v1124
    %1803 = vmatprep.subr.bf16.mxu0 %v1129
    %1804 = vmatpush1.bf16.msra.mxu0 %v1128
    %1805 = vmatprep.subr.bf16.mxu0 %v1133
    %1806 = vmatpush1.bf16.msra.mxu0 %v1132
    %1807 = vmatprep.subr.bf16.mxu0 %v1137
    %1808 = vmatpush1.bf16.msra.mxu0 %v1136
    %1809 = vmatprep.subr.bf16.mxu0 %v1141
    %1810 = vmatpush1.bf16.msra.mxu0 %v1140
    %1811 = vmatprep.subr.bf16.mxu0 %v1145
    %1812 = vmatpush1.bf16.msra.mxu0 %v1144
    %1813 = vmatprep.subr.bf16.mxu0 %v1149
    %1814 = vmatpush1.bf16.msra.mxu0 %v1148
    %1815 = vmatprep.subr.bf16.mxu0 %v1153
    %1816 = vmatpush1.bf16.msra.mxu0 %v1152
    %1817 = vmatprep.mubr.bf16.mxu0 %v1661
    %1818 = vmatmul.mubr.bf16.gmra.mrb[0].mxu0 %v1660
    %v1819 = vpop.f32.mrb[0].mxu0
    %v1820 = vadd.f32 0.0, %v1819
    %v1821 = vpop.f32.mrb[0].mxu0
    %v1822 = vadd.f32 0.0, %v1821
    %v1823 = vpop.f32.mrb[0].mxu0
    %v1824 = vpop.f32.mrb[0].mxu0
    %1825 = vdwg.mxu0
    %v1826 = vadd.f32 %v1697, %v391
    %v1827 = vadd.f32 %v1699, %v392
    %v1828 = vadd.f32 %v1738, %v393
    %v1829 = vadd.f32 %v1740, %v394
    %v1830 = vtanh.pop %v1826
    %v1831 = vtanh.pop %v1827
    %v1832 = vtanh.pop %v1828
    %v1833 = vtanh.pop %v1829
    %v1834 = vmul.f32 %v1830, 0.5
    %v1835 = vadd.f32 %v1834, 0.5
    %v1836 = vmul.f32 %v1831, 0.5
    %v1837 = vadd.f32 %v1836, 0.5
    %v1838 = vmul.f32 %v1833, 0.5
    %v1839 = vadd.f32 %v1838, 0.5
    %v1840 = vmul.f32 %v1837, %v1638
    %v1841 = vmul.f32 %v1835, %v1832
    %v1842 = vadd.f32 %v1840, %v1841
    %v1843 = vtanh.pop %v1842
    %v1844 = vmul.f32 %v1839, %v1843
    %v1845 = vadd.f32 %v1779, %v1424
    %v1846 = vadd.f32 %v1781, %v1428
    %v1847 = vadd.f32 %v1820, %v1432
    %v1848 = vadd.f32 %v1822, %v1436
    %v1849 = vtanh.pop %v1845
    %v1850 = vtanh.pop %v1846
    %v1851 = vtanh.pop %v1847
    %v1852 = vtanh.pop %v1848
    %v1853 = vmul.f32 %v1849, 0.5
    %v1854 = vadd.f32 %v1853, 0.5
    %v1855 = vmul.f32 %v1850, 0.5
    %v1856 = vadd.f32 %v1855, 0.5
    %v1857 = vmul.f32 %v1852, 0.5
    %v1858 = vadd.f32 %v1857, 0.5
    %v1859 = vmul.f32 %v1856, %v1657
    %v1860 = vmul.f32 %v1854, %v1851
    %v1861 = vadd.f32 %v1859, %v1860
    %v1862 = vtanh.pop %v1861
    %v1863 = vmul.f32 %v1858, %v1862
    %v1864 = vpack.c.bf16 %v1844, %v1844
    %v1865 = vpack.c.bf16 %v1863, %v1863
    %1866 = vmatprep.subr.bf16.mxu0 %v669
    %1867 = vmatpush1.bf16.msra.mxu0 %v668
    %1868 = vmatprep.subr.bf16.mxu0 %v673
    %1869 = vmatpush1.bf16.msra.mxu0 %v672
    %1870 = vmatprep.subr.bf16.mxu0 %v677
    %1871 = vmatpush1.bf16.msra.mxu0 %v676
    %1872 = vmatprep.subr.bf16.mxu0 %v681
    %1873 = vmatpush1.bf16.msra.mxu0 %v680
    %1874 = vmatprep.subr.bf16.mxu0 %v685
    %1875 = vmatpush1.bf16.msra.mxu0 %v684
    %1876 = vmatprep.subr.bf16.mxu0 %v689
    %1877 = vmatpush1.bf16.msra.mxu0 %v688
    %1878 = vmatprep.subr.bf16.mxu0 %v693
    %1879 = vmatpush1.bf16.msra.mxu0 %v692
    %1880 = vmatprep.subr.bf16.mxu0 %v697
    %1881 = vmatpush1.bf16.msra.mxu0 %v696
    %1882 = vmatprep.subr.bf16.mxu0 %v701
    %1883 = vmatpush1.bf16.msra.mxu0 %v700
    %1884 = vmatprep.subr.bf16.mxu0 %v705
    %1885 = vmatpush1.bf16.msra.mxu0 %v704
    %1886 = vmatprep.subr.bf16.mxu0 %v709
    %1887 = vmatpush1.bf16.msra.mxu0 %v708
    %1888 = vmatprep.subr.bf16.mxu0 %v713
    %1889 = vmatpush1.bf16.msra.mxu0 %v712
    %1890 = vmatprep.subr.bf16.mxu0 %v717
    %1891 = vmatpush1.bf16.msra.mxu0 %v716
    %1892 = vmatprep.subr.bf16.mxu0 %v721
    %1893 = vmatpush1.bf16.msra.mxu0 %v720
    %1894 = vmatprep.subr.bf16.mxu0 %v725
    %1895 = vmatpush1.bf16.msra.mxu0 %v724
    %1896 = vmatprep.subr.bf16.mxu0 %v729
    %1897 = vmatpush1.bf16.msra.mxu0 %v728
    %1898 = vmatprep.mubr.bf16.mxu0 %v1865
    %1899 = vmatmul.mubr.bf16.gmra.mrb[0].mxu0 %v1864
    %v1900 = vpop.f32.mrb[0].mxu0
    %v1901 = vadd.f32 0.0, %v1900
    %v1902 = vpop.f32.mrb[0].mxu0
    %v1903 = vadd.f32 0.0, %v1902
    %v1904 = vpop.f32.mrb[0].mxu0
    %v1905 = vpop.f32.mrb[0].mxu0
    %1906 = vdwg.mxu0
    %1907 = vmatprep.subr.bf16.mxu0 %v671
    %1908 = vmatpush1.bf16.msra.mxu0 %v670
    %1909 = vmatprep.subr.bf16.mxu0 %v675
    %1910 = vmatpush1.bf16.msra.mxu0 %v674
    %1911 = vmatprep.subr.bf16.mxu0 %v679
    %1912 = vmatpush1.bf16.msra.mxu0 %v678
    %1913 = vmatprep.subr.bf16.mxu0 %v683
    %1914 = vmatpush1.bf16.msra.mxu0 %v682
    %1915 = vmatprep.subr.bf16.mxu0 %v687
    %1916 = vmatpush1.bf16.msra.mxu0 %v686
    %1917 = vmatprep.subr.bf16.mxu0 %v691
    %1918 = vmatpush1.bf16.msra.mxu0 %v690
    %1919 = vmatprep.subr.bf16.mxu0 %v695
    %1920 = vmatpush1.bf16.msra.mxu0 %v694
    %1921 = vmatprep.subr.bf16.mxu0 %v699
    %1922 = vmatpush1.bf16.msra.mxu0 %v698
    %1923 = vmatprep.subr.bf16.mxu0 %v703
    %1924 = vmatpush1.bf16.msra.mxu0 %v702
    %1925 = vmatprep.subr.bf16.mxu0 %v707
    %1926 = vmatpush1.bf16.msra.mxu0 %v706
    %1927 = vmatprep.subr.bf16.mxu0 %v711
    %1928 = vmatpush1.bf16.msra.mxu0 %v710
    %1929 = vmatprep.subr.bf16.mxu0 %v715
    %1930 = vmatpush1.bf16.msra.mxu0 %v714
    %1931 = vmatprep.subr.bf16.mxu0 %v719
    %1932 = vmatpush1.bf16.msra.mxu0 %v718
    %1933 = vmatprep.subr.bf16.mxu0 %v723
    %1934 = vmatpush1.bf16.msra.mxu0 %v722
    %1935 = vmatprep.subr.bf16.mxu0 %v727
    %1936 = vmatpush1.bf16.msra.mxu0 %v726
    %1937 = vmatprep.subr.bf16.mxu0 %v731
    %1938 = vmatpush1.bf16.msra.mxu0 %v730
    %1939 = vmatprep.mubr.bf16.mxu0 %v1865
    %1940 = vmatmul.mubr.bf16.gmra.mrb[0].mxu0 %v1864
    %v1941 = vpop.f32.mrb[0].mxu0
    %v1942 = vadd.f32 0.0, %v1941
    %v1943 = vpop.f32.mrb[0].mxu0
    %v1944 = vadd.f32 0.0, %v1943
    %v1945 = vpop.f32.mrb[0].mxu0
    %v1946 = vpop.f32.mrb[0].mxu0
    %1947 = vdwg.mxu0
    %1948 = vmatprep.subr.bf16.mxu0 %v1091
    %1949 = vmatpush1.bf16.msra.mxu0 %v1090
    %1950 = vmatprep.subr.bf16.mxu0 %v1095
    %1951 = vmatpush1.bf16.msra.mxu0 %v1094
    %1952 = vmatprep.subr.bf16.mxu0 %v1099
    %1953 = vmatpush1.bf16.msra.mxu0 %v1098
    %1954 = vmatprep.subr.bf16.mxu0 %v1103
    %1955 = vmatpush1.bf16.msra.mxu0 %v1102
    %1956 = vmatprep.subr.bf16.mxu0 %v1107
    %1957 = vmatpush1.bf16.msra.mxu0 %v1106
    %1958 = vmatprep.subr.bf16.mxu0 %v1111
    %1959 = vmatpush1.bf16.msra.mxu0 %v1110
    %1960 = vmatprep.subr.bf16.mxu0 %v1115
    %1961 = vmatpush1.bf16.msra.mxu0 %v1114
    %1962 = vmatprep.subr.bf16.mxu0 %v1119
    %1963 = vmatpush1.bf16.msra.mxu0 %v1118
    %1964 = vmatprep.subr.bf16.mxu0 %v1123
    %1965 = vmatpush1.bf16.msra.mxu0 %v1122
    %1966 = vmatprep.subr.bf16.mxu0 %v1127
    %1967 = vmatpush1.bf16.msra.mxu0 %v1126
    %1968 = vmatprep.subr.bf16.mxu0 %v1131
    %1969 = vmatpush1.bf16.msra.mxu0 %v1130
    %1970 = vmatprep.subr.bf16.mxu0 %v1135
    %1971 = vmatpush1.bf16.msra.mxu0 %v1134
    %1972 = vmatprep.subr.bf16.mxu0 %v1139
    %1973 = vmatpush1.bf16.msra.mxu0 %v1138
    %1974 = vmatprep.subr.bf16.mxu0 %v1143
    %1975 = vmatpush1.bf16.msra.mxu0 %v1142
    %1976 = vmatprep.subr.bf16.mxu0 %v1147
    %1977 = vmatpush1.bf16.msra.mxu0 %v1146
    %1978 = vmatprep.subr.bf16.mxu0 %v1151
    %1979 = vmatpush1.bf16.msra.mxu0 %v1150
    %1980 = vmatprep.mubr.bf16.mxu0 %v1865
    %1981 = vmatmul.mubr.bf16.gmra.mrb[0].mxu0 %v1864
    %v1982 = vpop.f32.mrb[0].mxu0
    %v1983 = vadd.f32 0.0, %v1982
    %v1984 = vpop.f32.mrb[0].mxu0
    %v1985 = vadd.f32 0.0, %v1984
    %v1986 = vpop.f32.mrb[0].mxu0
    %v1987 = vpop.f32.mrb[0].mxu0
    %1988 = vdwg.mxu0
    %1989 = vmatprep.subr.bf16.mxu0 %v1093
    %1990 = vmatpush1.bf16.msra.mxu0 %v1092
    %1991 = vmatprep.subr.bf16.mxu0 %v1097
    %1992 = vmatpush1.bf16.msra.mxu0 %v1096
    %1993 = vmatprep.subr.bf16.mxu0 %v1101
    %1994 = vmatpush1.bf16.msra.mxu0 %v1100
    %1995 = vmatprep.subr.bf16.mxu0 %v1105
    %1996 = vmatpush1.bf16.msra.mxu0 %v1104
    %1997 = vmatprep.subr.bf16.mxu0 %v1109
    %1998 = vmatpush1.bf16.msra.mxu0 %v1108
    %1999 = vmatprep.subr.bf16.mxu0 %v1113
    %2000 = vmatpush1.bf16.msra.mxu0 %v1112
    %2001 = vmatprep.subr.bf16.mxu0 %v1117
    %2002 = vmatpush1.bf16.msra.mxu0 %v1116
    %2003 = vmatprep.subr.bf16.mxu0 %v1121
    %2004 = vmatpush1.bf16.msra.mxu0 %v1120
    %2005 = vmatprep.subr.bf16.mxu0 %v1125
    %2006 = vmatpush1.bf16.msra.mxu0 %v1124
    %2007 = vmatprep.subr.bf16.mxu0 %v1129
    %2008 = vmatpush1.bf16.msra.mxu0 %v1128
    %2009 = vmatprep.subr.bf16.mxu0 %v1133
    %2010 = vmatpush1.bf16.msra.mxu0 %v1132
    %2011 = vmatprep.subr.bf16.mxu0 %v1137
    %2012 = vmatpush1.bf16.msra.mxu0 %v1136
    %2013 = vmatprep.subr.bf16.mxu0 %v1141
    %2014 = vmatpush1.bf16.msra.mxu0 %v1140
    %2015 = vmatprep.subr.bf16.mxu0 %v1145
    %2016 = vmatpush1.bf16.msra.mxu0 %v1144
    %2017 = vmatprep.subr.bf16.mxu0 %v1149
    %2018 = vmatpush1.bf16.msra.mxu0 %v1148
    %2019 = vmatprep.subr.bf16.mxu0 %v1153
    %2020 = vmatpush1.bf16.msra.mxu0 %v1152
    %2021 = vmatprep.mubr.bf16.mxu0 %v1865
    %2022 = vmatmul.mubr.bf16.gmra.mrb[0].mxu0 %v1864
    %v2023 = vpop.f32.mrb[0].mxu0
    %v2024 = vadd.f32 0.0, %v2023
    %v2025 = vpop.f32.mrb[0].mxu0
    %v2026 = vadd.f32 0.0, %v2025
    %v2027 = vpop.f32.mrb[0].mxu0
    %v2028 = vpop.f32.mrb[0].mxu0
    %2029 = vdwg.mxu0
    %v2030 = vadd.f32 %v1901, %v411
    %v2031 = vadd.f32 %v1903, %v412
    %v2032 = vadd.f32 %v1942, %v413
    %v2033 = vadd.f32 %v1944, %v414
    %v2034 = vtanh.pop %v2030
    %v2035 = vtanh.pop %v2031
    %v2036 = vtanh.pop %v2032
    %v2037 = vtanh.pop %v2033
    %v2038 = vmul.f32 %v2034, 0.5
    %v2039 = vadd.f32 %v2038, 0.5
    %v2040 = vmul.f32 %v2035, 0.5
    %v2041 = vadd.f32 %v2040, 0.5
    %v2042 = vmul.f32 %v2037, 0.5
    %v2043 = vadd.f32 %v2042, 0.5
    %v2044 = vmul.f32 %v2041, %v1842
    %v2045 = vmul.f32 %v2039, %v2036
    %v2046 = vadd.f32 %v2044, %v2045
    %v2047 = vtanh.pop %v2046
    %v2048 = vmul.f32 %v2043, %v2047
    %v2049 = vadd.f32 %v1983, %v1424
    %v2050 = vadd.f32 %v1985, %v1428
    %v2051 = vadd.f32 %v2024, %v1432
    %v2052 = vadd.f32 %v2026, %v1436
    %v2053 = vtanh.pop %v2049
    %v2054 = vtanh.pop %v2050
    %v2055 = vtanh.pop %v2051
    %v2056 = vtanh.pop %v2052
    %v2057 = vmul.f32 %v2053, 0.5
    %v2058 = vadd.f32 %v2057, 0.5
    %v2059 = vmul.f32 %v2054, 0.5
    %v2060 = vadd.f32 %v2059, 0.5
    %v2061 = vmul.f32 %v2056, 0.5
    %v2062 = vadd.f32 %v2061, 0.5
    %v2063 = vmul.f32 %v2060, %v1861
    %v2064 = vmul.f32 %v2058, %v2055
    %v2065 = vadd.f32 %v2063, %v2064
    %v2066 = vtanh.pop %v2065
    %v2067 = vmul.f32 %v2062, %v2066
    %v2068 = vpack.c.bf16 %v2048, %v2048
    %v2069 = vpack.c.bf16 %v2067, %v2067
    %2070 = vmatprep.subr.bf16.mxu0 %v669
    %2071 = vmatpush1.bf16.msra.mxu0 %v668
    %2072 = vmatprep.subr.bf16.mxu0 %v673
    %2073 = vmatpush1.bf16.msra.mxu0 %v672
    %2074 = vmatprep.subr.bf16.mxu0 %v677
    %2075 = vmatpush1.bf16.msra.mxu0 %v676
    %2076 = vmatprep.subr.bf16.mxu0 %v681
    %2077 = vmatpush1.bf16.msra.mxu0 %v680
    %2078 = vmatprep.subr.bf16.mxu0 %v685
    %2079 = vmatpush1.bf16.msra.mxu0 %v684
    %2080 = vmatprep.subr.bf16.mxu0 %v689
    %2081 = vmatpush1.bf16.msra.mxu0 %v688
    %2082 = vmatprep.subr.bf16.mxu0 %v693
    %2083 = vmatpush1.bf16.msra.mxu0 %v692
    %2084 = vmatprep.subr.bf16.mxu0 %v697
    %2085 = vmatpush1.bf16.msra.mxu0 %v696
    %2086 = vmatprep.subr.bf16.mxu0 %v701
    %2087 = vmatpush1.bf16.msra.mxu0 %v700
    %2088 = vmatprep.subr.bf16.mxu0 %v705
    %2089 = vmatpush1.bf16.msra.mxu0 %v704
    %2090 = vmatprep.subr.bf16.mxu0 %v709
    %2091 = vmatpush1.bf16.msra.mxu0 %v708
    %2092 = vmatprep.subr.bf16.mxu0 %v713
    %2093 = vmatpush1.bf16.msra.mxu0 %v712
    %2094 = vmatprep.subr.bf16.mxu0 %v717
    %2095 = vmatpush1.bf16.msra.mxu0 %v716
    %2096 = vmatprep.subr.bf16.mxu0 %v721
    %2097 = vmatpush1.bf16.msra.mxu0 %v720
    %2098 = vmatprep.subr.bf16.mxu0 %v725
    %2099 = vmatpush1.bf16.msra.mxu0 %v724
    %2100 = vmatprep.subr.bf16.mxu0 %v729
    %2101 = vmatpush1.bf16.msra.mxu0 %v728
    %2102 = vmatprep.mubr.bf16.mxu0 %v2069
    %2103 = vmatmul.mubr.bf16.gmra.mrb[0].mxu0 %v2068
    %v2104 = vpop.f32.mrb[0].mxu0
    %v2105 = vadd.f32 0.0, %v2104
    %v2106 = vpop.f32.mrb[0].mxu0
    %v2107 = vadd.f32 0.0, %v2106
    %v2108 = vpop.f32.mrb[0].mxu0
    %v2109 = vpop.f32.mrb[0].mxu0
    %2110 = vdwg.mxu0
    %2111 = vmatprep.subr.bf16.mxu0 %v671
    %2112 = vmatpush1.bf16.msra.mxu0 %v670
    %2113 = vmatprep.subr.bf16.mxu0 %v675
    %2114 = vmatpush1.bf16.msra.mxu0 %v674
    %2115 = vmatprep.subr.bf16.mxu0 %v679
    %2116 = vmatpush1.bf16.msra.mxu0 %v678
    %2117 = vmatprep.subr.bf16.mxu0 %v683
    %2118 = vmatpush1.bf16.msra.mxu0 %v682
    %2119 = vmatprep.subr.bf16.mxu0 %v687
    %2120 = vmatpush1.bf16.msra.mxu0 %v686
    %2121 = vmatprep.subr.bf16.mxu0 %v691
    %2122 = vmatpush1.bf16.msra.mxu0 %v690
    %2123 = vmatprep.subr.bf16.mxu0 %v695
    %2124 = vmatpush1.bf16.msra.mxu0 %v694
    %2125 = vmatprep.subr.bf16.mxu0 %v699
    %2126 = vmatpush1.bf16.msra.mxu0 %v698
    %2127 = vmatprep.subr.bf16.mxu0 %v703
    %2128 = vmatpush1.bf16.msra.mxu0 %v702
    %2129 = vmatprep.subr.bf16.mxu0 %v707
    %2130 = vmatpush1.bf16.msra.mxu0 %v706
    %2131 = vmatprep.subr.bf16.mxu0 %v711
    %2132 = vmatpush1.bf16.msra.mxu0 %v710
    %2133 = vmatprep.subr.bf16.mxu0 %v715
    %2134 = vmatpush1.bf16.msra.mxu0 %v714
    %2135 = vmatprep.subr.bf16.mxu0 %v719
    %2136 = vmatpush1.bf16.msra.mxu0 %v718
    %2137 = vmatprep.subr.bf16.mxu0 %v723
    %2138 = vmatpush1.bf16.msra.mxu0 %v722
    %2139 = vmatprep.subr.bf16.mxu0 %v727
    %2140 = vmatpush1.bf16.msra.mxu0 %v726
    %2141 = vmatprep.subr.bf16.mxu0 %v731
    %2142 = vmatpush1.bf16.msra.mxu0 %v730
    %2143 = vmatprep.mubr.bf16.mxu0 %v2069
    %2144 = vmatmul.mubr.bf16.gmra.mrb[0].mxu0 %v2068
    %v2145 = vpop.f32.mrb[0].mxu0
    %v2146 = vadd.f32 0.0, %v2145
    %v2147 = vpop.f32.mrb[0].mxu0
    %v2148 = vadd.f32 0.0, %v2147
    %v2149 = vpop.f32.mrb[0].mxu0
    %v2150 = vpop.f32.mrb[0].mxu0
    %2151 = vdwg.mxu0
    %2152 = vmatprep.subr.bf16.mxu0 %v1091
    %2153 = vmatpush1.bf16.msra.mxu0 %v1090
    %2154 = vmatprep.subr.bf16.mxu0 %v1095
    %2155 = vmatpush1.bf16.msra.mxu0 %v1094
    %2156 = vmatprep.subr.bf16.mxu0 %v1099
    %2157 = vmatpush1.bf16.msra.mxu0 %v1098
    %2158 = vmatprep.subr.bf16.mxu0 %v1103
    %2159 = vmatpush1.bf16.msra.mxu0 %v1102
    %2160 = vmatprep.subr.bf16.mxu0 %v1107
    %2161 = vmatpush1.bf16.msra.mxu0 %v1106
    %2162 = vmatprep.subr.bf16.mxu0 %v1111
    %2163 = vmatpush1.bf16.msra.mxu0 %v1110
    %2164 = vmatprep.subr.bf16.mxu0 %v1115
    %2165 = vmatpush1.bf16.msra.mxu0 %v1114
    %2166 = vmatprep.subr.bf16.mxu0 %v1119
    %2167 = vmatpush1.bf16.msra.mxu0 %v1118
    %2168 = vmatprep.subr.bf16.mxu0 %v1123
    %2169 = vmatpush1.bf16.msra.mxu0 %v1122
    %2170 = vmatprep.subr.bf16.mxu0 %v1127
    %2171 = vmatpush1.bf16.msra.mxu0 %v1126
    %2172 = vmatprep.subr.bf16.mxu0 %v1131
    %2173 = vmatpush1.bf16.msra.mxu0 %v1130
    %2174 = vmatprep.subr.bf16.mxu0 %v1135
    %2175 = vmatpush1.bf16.msra.mxu0 %v1134
    %2176 = vmatprep.subr.bf16.mxu0 %v1139
    %2177 = vmatpush1.bf16.msra.mxu0 %v1138
    %2178 = vmatprep.subr.bf16.mxu0 %v1143
    %2179 = vmatpush1.bf16.msra.mxu0 %v1142
    %2180 = vmatprep.subr.bf16.mxu0 %v1147
    %2181 = vmatpush1.bf16.msra.mxu0 %v1146
    %2182 = vmatprep.subr.bf16.mxu0 %v1151
    %2183 = vmatpush1.bf16.msra.mxu0 %v1150
    %2184 = vmatprep.mubr.bf16.mxu0 %v2069
    %2185 = vmatmul.mubr.bf16.gmra.mrb[0].mxu0 %v2068
    %v2186 = vpop.f32.mrb[0].mxu0
    %v2187 = vadd.f32 0.0, %v2186
    %v2188 = vpop.f32.mrb[0].mxu0
    %v2189 = vadd.f32 0.0, %v2188
    %v2190 = vpop.f32.mrb[0].mxu0
    %v2191 = vpop.f32.mrb[0].mxu0
    %2192 = vdwg.mxu0
    %2193 = vmatprep.subr.bf16.mxu0 %v1093
    %2194 = vmatpush1.bf16.msra.mxu0 %v1092
    %2195 = vmatprep.subr.bf16.mxu0 %v1097
    %2196 = vmatpush1.bf16.msra.mxu0 %v1096
    %2197 = vmatprep.subr.bf16.mxu0 %v1101
    %2198 = vmatpush1.bf16.msra.mxu0 %v1100
    %2199 = vmatprep.subr.bf16.mxu0 %v1105
    %2200 = vmatpush1.bf16.msra.mxu0 %v1104
    %2201 = vmatprep.subr.bf16.mxu0 %v1109
    %2202 = vmatpush1.bf16.msra.mxu0 %v1108
    %2203 = vmatprep.subr.bf16.mxu0 %v1113
    %2204 = vmatpush1.bf16.msra.mxu0 %v1112
    %2205 = vmatprep.subr.bf16.mxu0 %v1117
    %2206 = vmatpush1.bf16.msra.mxu0 %v1116
    %2207 = vmatprep.subr.bf16.mxu0 %v1121
    %2208 = vmatpush1.bf16.msra.mxu0 %v1120
    %2209 = vmatprep.subr.bf16.mxu0 %v1125
    %2210 = vmatpush1.bf16.msra.mxu0 %v1124
    %2211 = vmatprep.subr.bf16.mxu0 %v1129
    %2212 = vmatpush1.bf16.msra.mxu0 %v1128
    %2213 = vmatprep.subr.bf16.mxu0 %v1133
    %2214 = vmatpush1.bf16.msra.mxu0 %v1132
    %2215 = vmatprep.subr.bf16.mxu0 %v1137
    %2216 = vmatpush1.bf16.msra.mxu0 %v1136
    %2217 = vmatprep.subr.bf16.mxu0 %v1141
    %2218 = vmatpush1.bf16.msra.mxu0 %v1140
    %2219 = vmatprep.subr.bf16.mxu0 %v1145
    %2220 = vmatpush1.bf16.msra.mxu0 %v1144
    %2221 = vmatprep.subr.bf16.mxu0 %v1149
    %2222 = vmatpush1.bf16.msra.mxu0 %v1148
    %2223 = vmatprep.subr.bf16.mxu0 %v1153
    %2224 = vmatpush1.bf16.msra.mxu0 %v1152
    %2225 = vmatprep.mubr.bf16.mxu0 %v2069
    %2226 = vmatmul.mubr.bf16.gmra.mrb[0].mxu0 %v2068
    %v2227 = vpop.f32.mrb[0].mxu0
    %v2228 = vadd.f32 0.0, %v2227
    %v2229 = vpop.f32.mrb[0].mxu0
    %v2230 = vadd.f32 0.0, %v2229
    %v2231 = vpop.f32.mrb[0].mxu0
    %v2232 = vpop.f32.mrb[0].mxu0
    %2233 = vdwg.mxu0
    %v2234 = vadd.f32 %v2105, %v431
    %v2235 = vadd.f32 %v2107, %v432
    %v2236 = vadd.f32 %v2146, %v433
    %v2237 = vadd.f32 %v2148, %v434
    %v2238 = vtanh.pop %v2234
    %v2239 = vtanh.pop %v2235
    %v2240 = vtanh.pop %v2236
    %v2241 = vtanh.pop %v2237
    %v2242 = vmul.f32 %v2238, 0.5
    %v2243 = vadd.f32 %v2242, 0.5
    %v2244 = vmul.f32 %v2239, 0.5
    %v2245 = vadd.f32 %v2244, 0.5
    %v2246 = vmul.f32 %v2241, 0.5
    %v2247 = vadd.f32 %v2246, 0.5
    %v2248 = vmul.f32 %v2245, %v2046
    %v2249 = vmul.f32 %v2243, %v2240
    %v2250 = vadd.f32 %v2248, %v2249
    %v2251 = vtanh.pop %v2250
    %v2252 = vmul.f32 %v2247, %v2251
    %v2253 = vadd.f32 %v2187, %v1424
    %v2254 = vadd.f32 %v2189, %v1428
    %v2255 = vadd.f32 %v2228, %v1432
    %v2256 = vadd.f32 %v2230, %v1436
    %v2257 = vtanh.pop %v2253
    %v2258 = vtanh.pop %v2254
    %v2259 = vtanh.pop %v2255
    %v2260 = vtanh.pop %v2256
    %v2261 = vmul.f32 %v2257, 0.5
    %v2262 = vadd.f32 %v2261, 0.5
    %v2263 = vmul.f32 %v2258, 0.5
    %v2264 = vadd.f32 %v2263, 0.5
    %v2265 = vmul.f32 %v2260, 0.5
    %v2266 = vadd.f32 %v2265, 0.5
    %v2267 = vmul.f32 %v2264, %v2065
    %v2268 = vmul.f32 %v2262, %v2259
    %v2269 = vadd.f32 %v2267, %v2268
    %v2270 = vtanh.pop %v2269
    %v2271 = vmul.f32 %v2266, %v2270
    %v2272 = vpack.c.bf16 %v2252, %v2252
    %v2273 = vpack.c.bf16 %v2271, %v2271
    %2274 = vmatprep.subr.bf16.mxu0 %v669
    %2275 = vmatpush1.bf16.msra.mxu0 %v668
    %2276 = vmatprep.subr.bf16.mxu0 %v673
    %2277 = vmatpush1.bf16.msra.mxu0 %v672
    %2278 = vmatprep.subr.bf16.mxu0 %v677
    %2279 = vmatpush1.bf16.msra.mxu0 %v676
    %2280 = vmatprep.subr.bf16.mxu0 %v681
    %2281 = vmatpush1.bf16.msra.mxu0 %v680
    %2282 = vmatprep.subr.bf16.mxu0 %v685
    %2283 = vmatpush1.bf16.msra.mxu0 %v684
    %2284 = vmatprep.subr.bf16.mxu0 %v689
    %2285 = vmatpush1.bf16.msra.mxu0 %v688
    %2286 = vmatprep.subr.bf16.mxu0 %v693
    %2287 = vmatpush1.bf16.msra.mxu0 %v692
    %2288 = vmatprep.subr.bf16.mxu0 %v697
    %2289 = vmatpush1.bf16.msra.mxu0 %v696
    %2290 = vmatprep.subr.bf16.mxu0 %v701
    %2291 = vmatpush1.bf16.msra.mxu0 %v700
    %2292 = vmatprep.subr.bf16.mxu0 %v705
    %2293 = vmatpush1.bf16.msra.mxu0 %v704
    %2294 = vmatprep.subr.bf16.mxu0 %v709
    %2295 = vmatpush1.bf16.msra.mxu0 %v708
    %2296 = vmatprep.subr.bf16.mxu0 %v713
    %2297 = vmatpush1.bf16.msra.mxu0 %v712
    %2298 = vmatprep.subr.bf16.mxu0 %v717
    %2299 = vmatpush1.bf16.msra.mxu0 %v716
    %2300 = vmatprep.subr.bf16.mxu0 %v721
    %2301 = vmatpush1.bf16.msra.mxu0 %v720
    %2302 = vmatprep.subr.bf16.mxu0 %v725
    %2303 = vmatpush1.bf16.msra.mxu0 %v724
    %2304 = vmatprep.subr.bf16.mxu0 %v729
    %2305 = vmatpush1.bf16.msra.mxu0 %v728
    %2306 = vmatprep.mubr.bf16.mxu0 %v2273
    %2307 = vmatmul.mubr.bf16.gmra.mrb[0].mxu0 %v2272
    %v2308 = vpop.f32.mrb[0].mxu0
    %v2309 = vadd.f32 0.0, %v2308
    %v2310 = vpop.f32.mrb[0].mxu0
    %v2311 = vadd.f32 0.0, %v2310
    %v2312 = vpop.f32.mrb[0].mxu0
    %v2313 = vpop.f32.mrb[0].mxu0
    %2314 = vdwg.mxu0
    %2315 = vmatprep.subr.bf16.mxu0 %v671
    %2316 = vmatpush1.bf16.msra.mxu0 %v670
    %2317 = vmatprep.subr.bf16.mxu0 %v675
    %2318 = vmatpush1.bf16.msra.mxu0 %v674
    %2319 = vmatprep.subr.bf16.mxu0 %v679
    %2320 = vmatpush1.bf16.msra.mxu0 %v678
    %2321 = vmatprep.subr.bf16.mxu0 %v683
    %2322 = vmatpush1.bf16.msra.mxu0 %v682
    %2323 = vmatprep.subr.bf16.mxu0 %v687
    %2324 = vmatpush1.bf16.msra.mxu0 %v686
    %2325 = vmatprep.subr.bf16.mxu0 %v691
    %2326 = vmatpush1.bf16.msra.mxu0 %v690
    %2327 = vmatprep.subr.bf16.mxu0 %v695
    %2328 = vmatpush1.bf16.msra.mxu0 %v694
    %2329 = vmatprep.subr.bf16.mxu0 %v699
    %2330 = vmatpush1.bf16.msra.mxu0 %v698
    %2331 = vmatprep.subr.bf16.mxu0 %v703
    %2332 = vmatpush1.bf16.msra.mxu0 %v702
    %2333 = vmatprep.subr.bf16.mxu0 %v707
    %2334 = vmatpush1.bf16.msra.mxu0 %v706
    %2335 = vmatprep.subr.bf16.mxu0 %v711
    %2336 = vmatpush1.bf16.msra.mxu0 %v710
    %2337 = vmatprep.subr.bf16.mxu0 %v715
    %2338 = vmatpush1.bf16.msra.mxu0 %v714
    %2339 = vmatprep.subr.bf16.mxu0 %v719
    %2340 = vmatpush1.bf16.msra.mxu0 %v718
    %2341 = vmatprep.subr.bf16.mxu0 %v723
    %2342 = vmatpush1.bf16.msra.mxu0 %v722
    %2343 = vmatprep.subr.bf16.mxu0 %v727
    %2344 = vmatpush1.bf16.msra.mxu0 %v726
    %2345 = vmatprep.subr.bf16.mxu0 %v731
    %2346 = vmatpush1.bf16.msra.mxu0 %v730
    %2347 = vmatprep.mubr.bf16.mxu0 %v2273
    %2348 = vmatmul.mubr.bf16.gmra.mrb[0].mxu0 %v2272
    %v2349 = vpop.f32.mrb[0].mxu0
    %v2350 = vadd.f32 0.0, %v2349
    %v2351 = vpop.f32.mrb[0].mxu0
    %v2352 = vadd.f32 0.0, %v2351
    %v2353 = vpop.f32.mrb[0].mxu0
    %v2354 = vpop.f32.mrb[0].mxu0
    %2355 = vdwg.mxu0
    %2356 = vmatprep.subr.bf16.mxu0 %v1091
    %2357 = vmatpush1.bf16.msra.mxu0 %v1090
    %2358 = vmatprep.subr.bf16.mxu0 %v1095
    %2359 = vmatpush1.bf16.msra.mxu0 %v1094
    %2360 = vmatprep.subr.bf16.mxu0 %v1099
    %2361 = vmatpush1.bf16.msra.mxu0 %v1098
    %2362 = vmatprep.subr.bf16.mxu0 %v1103
    %2363 = vmatpush1.bf16.msra.mxu0 %v1102
    %2364 = vmatprep.subr.bf16.mxu0 %v1107
    %2365 = vmatpush1.bf16.msra.mxu0 %v1106
    %2366 = vmatprep.subr.bf16.mxu0 %v1111
    %2367 = vmatpush1.bf16.msra.mxu0 %v1110
    %2368 = vmatprep.subr.bf16.mxu0 %v1115
    %2369 = vmatpush1.bf16.msra.mxu0 %v1114
    %2370 = vmatprep.subr.bf16.mxu0 %v1119
    %2371 = vmatpush1.bf16.msra.mxu0 %v1118
    %2372 = vmatprep.subr.bf16.mxu0 %v1123
    %2373 = vmatpush1.bf16.msra.mxu0 %v1122
    %2374 = vmatprep.subr.bf16.mxu0 %v1127
    %2375 = vmatpush1.bf16.msra.mxu0 %v1126
    %2376 = vmatprep.subr.bf16.mxu0 %v1131
    %2377 = vmatpush1.bf16.msra.mxu0 %v1130
    %2378 = vmatprep.subr.bf16.mxu0 %v1135
    %2379 = vmatpush1.bf16.msra.mxu0 %v1134
    %2380 = vmatprep.subr.bf16.mxu0 %v1139
    %2381 = vmatpush1.bf16.msra.mxu0 %v1138
    %2382 = vmatprep.subr.bf16.mxu0 %v1143
    %2383 = vmatpush1.bf16.msra.mxu0 %v1142
    %2384 = vmatprep.subr.bf16.mxu0 %v1147
    %2385 = vmatpush1.bf16.msra.mxu0 %v1146
    %2386 = vmatprep.subr.bf16.mxu0 %v1151
    %2387 = vmatpush1.bf16.msra.mxu0 %v1150
    %2388 = vmatprep.mubr.bf16.mxu0 %v2273
    %2389 = vmatmul.mubr.bf16.gmra.mrb[0].mxu0 %v2272
    %v2390 = vpop.f32.mrb[0].mxu0
    %v2391 = vadd.f32 0.0, %v2390
    %v2392 = vpop.f32.mrb[0].mxu0
    %v2393 = vadd.f32 0.0, %v2392
    %v2394 = vpop.f32.mrb[0].mxu0
    %v2395 = vpop.f32.mrb[0].mxu0
    %2396 = vdwg.mxu0
    %2397 = vmatprep.subr.bf16.mxu0 %v1093
    %2398 = vmatpush1.bf16.msra.mxu0 %v1092
    %2399 = vmatprep.subr.bf16.mxu0 %v1097
    %2400 = vmatpush1.bf16.msra.mxu0 %v1096
    %2401 = vmatprep.subr.bf16.mxu0 %v1101
    %2402 = vmatpush1.bf16.msra.mxu0 %v1100
    %2403 = vmatprep.subr.bf16.mxu0 %v1105
    %2404 = vmatpush1.bf16.msra.mxu0 %v1104
    %2405 = vmatprep.subr.bf16.mxu0 %v1109
    %2406 = vmatpush1.bf16.msra.mxu0 %v1108
    %2407 = vmatprep.subr.bf16.mxu0 %v1113
    %2408 = vmatpush1.bf16.msra.mxu0 %v1112
    %2409 = vmatprep.subr.bf16.mxu0 %v1117
    %2410 = vmatpush1.bf16.msra.mxu0 %v1116
    %2411 = vmatprep.subr.bf16.mxu0 %v1121
    %2412 = vmatpush1.bf16.msra.mxu0 %v1120
    %2413 = vmatprep.subr.bf16.mxu0 %v1125
    %2414 = vmatpush1.bf16.msra.mxu0 %v1124
    %2415 = vmatprep.subr.bf16.mxu0 %v1129
    %2416 = vmatpush1.bf16.msra.mxu0 %v1128
    %2417 = vmatprep.subr.bf16.mxu0 %v1133
    %2418 = vmatpush1.bf16.msra.mxu0 %v1132
    %2419 = vmatprep.subr.bf16.mxu0 %v1137
    %2420 = vmatpush1.bf16.msra.mxu0 %v1136
    %2421 = vmatprep.subr.bf16.mxu0 %v1141
    %2422 = vmatpush1.bf16.msra.mxu0 %v1140
    %2423 = vmatprep.subr.bf16.mxu0 %v1145
    %2424 = vmatpush1.bf16.msra.mxu0 %v1144
    %2425 = vmatprep.subr.bf16.mxu0 %v1149
    %2426 = vmatpush1.bf16.msra.mxu0 %v1148
    %2427 = vmatprep.subr.bf16.mxu0 %v1153
    %2428 = vmatpush1.bf16.msra.mxu0 %v1152
    %2429 = vmatprep.mubr.bf16.mxu0 %v2273
    %2430 = vmatmul.mubr.bf16.gmra.mrb[0].mxu0 %v2272
    %v2431 = vpop.f32.mrb[0].mxu0
    %v2432 = vadd.f32 0.0, %v2431
    %v2433 = vpop.f32.mrb[0].mxu0
    %v2434 = vadd.f32 0.0, %v2433
    %v2435 = vpop.f32.mrb[0].mxu0
    %v2436 = vpop.f32.mrb[0].mxu0
    %2437 = vdwg.mxu0
    %v2438 = vadd.f32 %v2309, %v451
    %v2439 = vadd.f32 %v2311, %v452
    %v2440 = vadd.f32 %v2350, %v453
    %v2441 = vadd.f32 %v2352, %v454
    %v2442 = vtanh.pop %v2438
    %v2443 = vtanh.pop %v2439
    %v2444 = vtanh.pop %v2440
    %v2445 = vtanh.pop %v2441
    %v2446 = vmul.f32 %v2442, 0.5
    %v2447 = vadd.f32 %v2446, 0.5
    %v2448 = vmul.f32 %v2443, 0.5
    %v2449 = vadd.f32 %v2448, 0.5
    %v2450 = vmul.f32 %v2445, 0.5
    %v2451 = vadd.f32 %v2450, 0.5
    %v2452 = vmul.f32 %v2449, %v2250
    %v2453 = vmul.f32 %v2447, %v2444
    %v2454 = vadd.f32 %v2452, %v2453
    %v2455 = vtanh.pop %v2454
    %v2456 = vmul.f32 %v2451, %v2455
    %v2457 = vadd.f32 %v2391, %v1424
    %v2458 = vadd.f32 %v2393, %v1428
    %v2459 = vadd.f32 %v2432, %v1432
    %v2460 = vadd.f32 %v2434, %v1436
    %v2461 = vtanh.pop %v2457
    %v2462 = vtanh.pop %v2458
    %v2463 = vtanh.pop %v2459
    %v2464 = vtanh.pop %v2460
    %v2465 = vmul.f32 %v2461, 0.5
    %v2466 = vadd.f32 %v2465, 0.5
    %v2467 = vmul.f32 %v2462, 0.5
    %v2468 = vadd.f32 %v2467, 0.5
    %v2469 = vmul.f32 %v2464, 0.5
    %v2470 = vadd.f32 %v2469, 0.5
    %v2471 = vmul.f32 %v2468, %v2269
    %v2472 = vmul.f32 %v2466, %v2463
    %v2473 = vadd.f32 %v2471, %v2472
    %v2474 = vtanh.pop %v2473
    %v2475 = vmul.f32 %v2470, %v2474
    %v2476 = vpack.c.bf16 %v2456, %v2456
    %v2477 = vpack.c.bf16 %v2475, %v2475
    %2478 = vmatprep.subr.bf16.mxu0 %v669
    %2479 = vmatpush1.bf16.msra.mxu0 %v668
    %2480 = vmatprep.subr.bf16.mxu0 %v673
    %2481 = vmatpush1.bf16.msra.mxu0 %v672
    %2482 = vmatprep.subr.bf16.mxu0 %v677
    %2483 = vmatpush1.bf16.msra.mxu0 %v676
    %2484 = vmatprep.subr.bf16.mxu0 %v681
    %2485 = vmatpush1.bf16.msra.mxu0 %v680
    %2486 = vmatprep.subr.bf16.mxu0 %v685
    %2487 = vmatpush1.bf16.msra.mxu0 %v684
    %2488 = vmatprep.subr.bf16.mxu0 %v689
    %2489 = vmatpush1.bf16.msra.mxu0 %v688
    %2490 = vmatprep.subr.bf16.mxu0 %v693
    %2491 = vmatpush1.bf16.msra.mxu0 %v692
    %2492 = vmatprep.subr.bf16.mxu0 %v697
    %2493 = vmatpush1.bf16.msra.mxu0 %v696
    %2494 = vmatprep.subr.bf16.mxu0 %v701
    %2495 = vmatpush1.bf16.msra.mxu0 %v700
    %2496 = vmatprep.subr.bf16.mxu0 %v705
    %2497 = vmatpush1.bf16.msra.mxu0 %v704
    %2498 = vmatprep.subr.bf16.mxu0 %v709
    %2499 = vmatpush1.bf16.msra.mxu0 %v708
    %2500 = vmatprep.subr.bf16.mxu0 %v713
    %2501 = vmatpush1.bf16.msra.mxu0 %v712
    %2502 = vmatprep.subr.bf16.mxu0 %v717
    %2503 = vmatpush1.bf16.msra.mxu0 %v716
    %2504 = vmatprep.subr.bf16.mxu0 %v721
    %2505 = vmatpush1.bf16.msra.mxu0 %v720
    %2506 = vmatprep.subr.bf16.mxu0 %v725
    %2507 = vmatpush1.bf16.msra.mxu0 %v724
    %2508 = vmatprep.subr.bf16.mxu0 %v729
    %2509 = vmatpush1.bf16.msra.mxu0 %v728
    %2510 = vmatprep.mubr.bf16.mxu0 %v2477
    %2511 = vmatmul.mubr.bf16.gmra.mrb[0].mxu0 %v2476
    %v2512 = vpop.f32.mrb[0].mxu0
    %v2513 = vadd.f32 0.0, %v2512
    %v2514 = vpop.f32.mrb[0].mxu0
    %v2515 = vadd.f32 0.0, %v2514
    %v2516 = vpop.f32.mrb[0].mxu0
    %v2517 = vpop.f32.mrb[0].mxu0
    %2518 = vdwg.mxu0
    %2519 = vmatprep.subr.bf16.mxu0 %v671
    %2520 = vmatpush1.bf16.msra.mxu0 %v670
    %2521 = vmatprep.subr.bf16.mxu0 %v675
    %2522 = vmatpush1.bf16.msra.mxu0 %v674
    %2523 = vmatprep.subr.bf16.mxu0 %v679
    %2524 = vmatpush1.bf16.msra.mxu0 %v678
    %2525 = vmatprep.subr.bf16.mxu0 %v683
    %2526 = vmatpush1.bf16.msra.mxu0 %v682
    %2527 = vmatprep.subr.bf16.mxu0 %v687
    %2528 = vmatpush1.bf16.msra.mxu0 %v686
    %2529 = vmatprep.subr.bf16.mxu0 %v691
    %2530 = vmatpush1.bf16.msra.mxu0 %v690
    %2531 = vmatprep.subr.bf16.mxu0 %v695
    %2532 = vmatpush1.bf16.msra.mxu0 %v694
    %2533 = vmatprep.subr.bf16.mxu0 %v699
    %2534 = vmatpush1.bf16.msra.mxu0 %v698
    %2535 = vmatprep.subr.bf16.mxu0 %v703
    %2536 = vmatpush1.bf16.msra.mxu0 %v702
    %2537 = vmatprep.subr.bf16.mxu0 %v707
    %2538 = vmatpush1.bf16.msra.mxu0 %v706
    %2539 = vmatprep.subr.bf16.mxu0 %v711
    %2540 = vmatpush1.bf16.msra.mxu0 %v710
    %2541 = vmatprep.subr.bf16.mxu0 %v715
    %2542 = vmatpush1.bf16.msra.mxu0 %v714
    %2543 = vmatprep.subr.bf16.mxu0 %v719
    %2544 = vmatpush1.bf16.msra.mxu0 %v718
    %2545 = vmatprep.subr.bf16.mxu0 %v723
    %2546 = vmatpush1.bf16.msra.mxu0 %v722
    %2547 = vmatprep.subr.bf16.mxu0 %v727
    %2548 = vmatpush1.bf16.msra.mxu0 %v726
    %2549 = vmatprep.subr.bf16.mxu0 %v731
    %2550 = vmatpush1.bf16.msra.mxu0 %v730
    %2551 = vmatprep.mubr.bf16.mxu0 %v2477
    %2552 = vmatmul.mubr.bf16.gmra.mrb[0].mxu0 %v2476
    %v2553 = vpop.f32.mrb[0].mxu0
    %v2554 = vadd.f32 0.0, %v2553
    %v2555 = vpop.f32.mrb[0].mxu0
    %v2556 = vadd.f32 0.0, %v2555
    %v2557 = vpop.f32.mrb[0].mxu0
    %v2558 = vpop.f32.mrb[0].mxu0
    %2559 = vdwg.mxu0
    %2560 = vmatprep.subr.bf16.mxu0 %v1091
    %2561 = vmatpush1.bf16.msra.mxu0 %v1090
    %2562 = vmatprep.subr.bf16.mxu0 %v1095
    %2563 = vmatpush1.bf16.msra.mxu0 %v1094
    %2564 = vmatprep.subr.bf16.mxu0 %v1099
    %2565 = vmatpush1.bf16.msra.mxu0 %v1098
    %2566 = vmatprep.subr.bf16.mxu0 %v1103
    %2567 = vmatpush1.bf16.msra.mxu0 %v1102
    %2568 = vmatprep.subr.bf16.mxu0 %v1107
    %2569 = vmatpush1.bf16.msra.mxu0 %v1106
    %2570 = vmatprep.subr.bf16.mxu0 %v1111
    %2571 = vmatpush1.bf16.msra.mxu0 %v1110
    %2572 = vmatprep.subr.bf16.mxu0 %v1115
    %2573 = vmatpush1.bf16.msra.mxu0 %v1114
    %2574 = vmatprep.subr.bf16.mxu0 %v1119
    %2575 = vmatpush1.bf16.msra.mxu0 %v1118
    %2576 = vmatprep.subr.bf16.mxu0 %v1123
    %2577 = vmatpush1.bf16.msra.mxu0 %v1122
    %2578 = vmatprep.subr.bf16.mxu0 %v1127
    %2579 = vmatpush1.bf16.msra.mxu0 %v1126
    %2580 = vmatprep.subr.bf16.mxu0 %v1131
    %2581 = vmatpush1.bf16.msra.mxu0 %v1130
    %2582 = vmatprep.subr.bf16.mxu0 %v1135
    %2583 = vmatpush1.bf16.msra.mxu0 %v1134
    %2584 = vmatprep.subr.bf16.mxu0 %v1139
    %2585 = vmatpush1.bf16.msra.mxu0 %v1138
    %2586 = vmatprep.subr.bf16.mxu0 %v1143
    %2587 = vmatpush1.bf16.msra.mxu0 %v1142
    %2588 = vmatprep.subr.bf16.mxu0 %v1147
    %2589 = vmatpush1.bf16.msra.mxu0 %v1146
    %2590 = vmatprep.subr.bf16.mxu0 %v1151
    %2591 = vmatpush1.bf16.msra.mxu0 %v1150
    %2592 = vmatprep.mubr.bf16.mxu0 %v2477
    %2593 = vmatmul.mubr.bf16.gmra.mrb[0].mxu0 %v2476
    %v2594 = vpop.f32.mrb[0].mxu0
    %v2595 = vadd.f32 0.0, %v2594
    %v2596 = vpop.f32.mrb[0].mxu0
    %v2597 = vadd.f32 0.0, %v2596
    %v2598 = vpop.f32.mrb[0].mxu0
    %v2599 = vpop.f32.mrb[0].mxu0
    %2600 = vdwg.mxu0
    %2601 = vmatprep.subr.bf16.mxu0 %v1093
    %2602 = vmatpush1.bf16.msra.mxu0 %v1092
    %2603 = vmatprep.subr.bf16.mxu0 %v1097
    %2604 = vmatpush1.bf16.msra.mxu0 %v1096
    %2605 = vmatprep.subr.bf16.mxu0 %v1101
    %2606 = vmatpush1.bf16.msra.mxu0 %v1100
    %2607 = vmatprep.subr.bf16.mxu0 %v1105
    %2608 = vmatpush1.bf16.msra.mxu0 %v1104
    %2609 = vmatprep.subr.bf16.mxu0 %v1109
    %2610 = vmatpush1.bf16.msra.mxu0 %v1108
    %2611 = vmatprep.subr.bf16.mxu0 %v1113
    %2612 = vmatpush1.bf16.msra.mxu0 %v1112
    %2613 = vmatprep.subr.bf16.mxu0 %v1117
    %2614 = vmatpush1.bf16.msra.mxu0 %v1116
    %2615 = vmatprep.subr.bf16.mxu0 %v1121
    %2616 = vmatpush1.bf16.msra.mxu0 %v1120
    %2617 = vmatprep.subr.bf16.mxu0 %v1125
    %2618 = vmatpush1.bf16.msra.mxu0 %v1124
    %2619 = vmatprep.subr.bf16.mxu0 %v1129
    %2620 = vmatpush1.bf16.msra.mxu0 %v1128
    %2621 = vmatprep.subr.bf16.mxu0 %v1133
    %2622 = vmatpush1.bf16.msra.mxu0 %v1132
    %2623 = vmatprep.subr.bf16.mxu0 %v1137
    %2624 = vmatpush1.bf16.msra.mxu0 %v1136
    %2625 = vmatprep.subr.bf16.mxu0 %v1141
    %2626 = vmatpush1.bf16.msra.mxu0 %v1140
    %2627 = vmatprep.subr.bf16.mxu0 %v1145
    %2628 = vmatpush1.bf16.msra.mxu0 %v1144
    %2629 = vmatprep.subr.bf16.mxu0 %v1149
    %2630 = vmatpush1.bf16.msra.mxu0 %v1148
    %2631 = vmatprep.subr.bf16.mxu0 %v1153
    %2632 = vmatpush1.bf16.msra.mxu0 %v1152
    %2633 = vmatprep.mubr.bf16.mxu0 %v2477
    %2634 = vmatmul.mubr.bf16.gmra.mrb[0].mxu0 %v2476
    %v2635 = vpop.f32.mrb[0].mxu0
    %v2636 = vadd.f32 0.0, %v2635
    %v2637 = vpop.f32.mrb[0].mxu0
    %v2638 = vadd.f32 0.0, %v2637
    %v2639 = vpop.f32.mrb[0].mxu0
    %v2640 = vpop.f32.mrb[0].mxu0
    %2641 = vdwg.mxu0
    %v2642 = vadd.f32 %v2513, %v471
    %v2643 = vadd.f32 %v2515, %v472
    %v2644 = vadd.f32 %v2554, %v473
    %v2645 = vadd.f32 %v2556, %v474
    %v2646 = vtanh.pop %v2642
    %v2647 = vtanh.pop %v2643
    %v2648 = vtanh.pop %v2644
    %v2649 = vtanh.pop %v2645
    %v2650 = vmul.f32 %v2646, 0.5
    %v2651 = vadd.f32 %v2650, 0.5
    %v2652 = vmul.f32 %v2647, 0.5
    %v2653 = vadd.f32 %v2652, 0.5
    %v2654 = vmul.f32 %v2649, 0.5
    %v2655 = vadd.f32 %v2654, 0.5
    %v2656 = vmul.f32 %v2653, %v2454
    %v2657 = vmul.f32 %v2651, %v2648
    %v2658 = vadd.f32 %v2656, %v2657
    %v2659 = vtanh.pop %v2658
    %v2660 = vmul.f32 %v2655, %v2659
    %v2661 = vadd.f32 %v2595, %v1424
    %v2662 = vadd.f32 %v2597, %v1428
    %v2663 = vadd.f32 %v2636, %v1432
    %v2664 = vadd.f32 %v2638, %v1436
    %v2665 = vtanh.pop %v2661
    %v2666 = vtanh.pop %v2662
    %v2667 = vtanh.pop %v2663
    %v2668 = vtanh.pop %v2664
    %v2669 = vmul.f32 %v2665, 0.5
    %v2670 = vadd.f32 %v2669, 0.5
    %v2671 = vmul.f32 %v2666, 0.5
    %v2672 = vadd.f32 %v2671, 0.5
    %v2673 = vmul.f32 %v2668, 0.5
    %v2674 = vadd.f32 %v2673, 0.5
    %v2675 = vmul.f32 %v2672, %v2473
    %v2676 = vmul.f32 %v2670, %v2667
    %v2677 = vadd.f32 %v2675, %v2676
    %v2678 = vtanh.pop %v2677
    %v2679 = vmul.f32 %v2674, %v2678
    %v2680 = vpack.c.bf16 %v2660, %v2660
    %v2681 = vpack.c.bf16 %v2679, %v2679
    %2682 = vmatprep.subr.bf16.mxu0 %v1091
    %2683 = vmatpush1.bf16.msra.mxu0 %v1090
    %2684 = vmatprep.subr.bf16.mxu0 %v1095
    %2685 = vmatpush1.bf16.msra.mxu0 %v1094
    %2686 = vmatprep.subr.bf16.mxu0 %v1099
    %2687 = vmatpush1.bf16.msra.mxu0 %v1098
    %2688 = vmatprep.subr.bf16.mxu0 %v1103
    %2689 = vmatpush1.bf16.msra.mxu0 %v1102
    %2690 = vmatprep.subr.bf16.mxu0 %v1107
    %2691 = vmatpush1.bf16.msra.mxu0 %v1106
    %2692 = vmatprep.subr.bf16.mxu0 %v1111
    %2693 = vmatpush1.bf16.msra.mxu0 %v1110
    %2694 = vmatprep.subr.bf16.mxu0 %v1115
    %2695 = vmatpush1.bf16.msra.mxu0 %v1114
    %2696 = vmatprep.subr.bf16.mxu0 %v1119
    %2697 = vmatpush1.bf16.msra.mxu0 %v1118
    %2698 = vmatprep.subr.bf16.mxu0 %v1123
    %2699 = vmatpush1.bf16.msra.mxu0 %v1122
    %2700 = vmatprep.subr.bf16.mxu0 %v1127
    %2701 = vmatpush1.bf16.msra.mxu0 %v1126
    %2702 = vmatprep.subr.bf16.mxu0 %v1131
    %2703 = vmatpush1.bf16.msra.mxu0 %v1130
    %2704 = vmatprep.subr.bf16.mxu0 %v1135
    %2705 = vmatpush1.bf16.msra.mxu0 %v1134
    %2706 = vmatprep.subr.bf16.mxu0 %v1139
    %2707 = vmatpush1.bf16.msra.mxu0 %v1138
    %2708 = vmatprep.subr.bf16.mxu0 %v1143
    %2709 = vmatpush1.bf16.msra.mxu0 %v1142
    %2710 = vmatprep.subr.bf16.mxu0 %v1147
    %2711 = vmatpush1.bf16.msra.mxu0 %v1146
    %2712 = vmatprep.subr.bf16.mxu0 %v1151
    %2713 = vmatpush1.bf16.msra.mxu0 %v1150
    %2714 = vmatprep.mubr.bf16.mxu0 %v2681
    %2715 = vmatmul.mubr.bf16.gmra.mrb[0].mxu0 %v2680
    %v2716 = vpop.f32.mrb[0].mxu0
    %v2717 = vadd.f32 0.0, %v2716
    %v2718 = vpop.f32.mrb[0].mxu0
    %v2719 = vadd.f32 0.0, %v2718
    %v2720 = vpop.f32.mrb[0].mxu0
    %v2721 = vpop.f32.mrb[0].mxu0
    %2722 = vdwg.mxu0
    %2723 = vmatprep.subr.bf16.mxu0 %v1093
    %2724 = vmatpush1.bf16.msra.mxu0 %v1092
    %2725 = vmatprep.subr.bf16.mxu0 %v1097
    %2726 = vmatpush1.bf16.msra.mxu0 %v1096
    %2727 = vmatprep.subr.bf16.mxu0 %v1101
    %2728 = vmatpush1.bf16.msra.mxu0 %v1100
    %2729 = vmatprep.subr.bf16.mxu0 %v1105
    %2730 = vmatpush1.bf16.msra.mxu0 %v1104
    %2731 = vmatprep.subr.bf16.mxu0 %v1109
    %2732 = vmatpush1.bf16.msra.mxu0 %v1108
    %2733 = vmatprep.subr.bf16.mxu0 %v1113
    %2734 = vmatpush1.bf16.msra.mxu0 %v1112
    %2735 = vmatprep.subr.bf16.mxu0 %v1117
    %2736 = vmatpush1.bf16.msra.mxu0 %v1116
    %2737 = vmatprep.subr.bf16.mxu0 %v1121
    %2738 = vmatpush1.bf16.msra.mxu0 %v1120
    %2739 = vmatprep.subr.bf16.mxu0 %v1125
    %2740 = vmatpush1.bf16.msra.mxu0 %v1124
    %2741 = vmatprep.subr.bf16.mxu0 %v1129
    %2742 = vmatpush1.bf16.msra.mxu0 %v1128
    %2743 = vmatprep.subr.bf16.mxu0 %v1133
    %2744 = vmatpush1.bf16.msra.mxu0 %v1132
    %2745 = vmatprep.subr.bf16.mxu0 %v1137
    %2746 = vmatpush1.bf16.msra.mxu0 %v1136
    %2747 = vmatprep.subr.bf16.mxu0 %v1141
    %2748 = vmatpush1.bf16.msra.mxu0 %v1140
    %2749 = vmatprep.subr.bf16.mxu0 %v1145
    %2750 = vmatpush1.bf16.msra.mxu0 %v1144
    %2751 = vmatprep.subr.bf16.mxu0 %v1149
    %2752 = vmatpush1.bf16.msra.mxu0 %v1148
    %2753 = vmatprep.subr.bf16.mxu0 %v1153
    %2754 = vmatpush1.bf16.msra.mxu0 %v1152
    %2755 = vmatprep.mubr.bf16.mxu0 %v2681
    %2756 = vmatmul.mubr.bf16.gmra.mrb[0].mxu0 %v2680
    %v2757 = vpop.f32.mrb[0].mxu0
    %v2758 = vadd.f32 0.0, %v2757
    %v2759 = vpop.f32.mrb[0].mxu0
    %v2760 = vadd.f32 0.0, %v2759
    %v2761 = vpop.f32.mrb[0].mxu0
    %v2762 = vpop.f32.mrb[0].mxu0
    %2763 = vdwg.mxu0
    %v2764 = vadd.f32 %v2717, %v1424
    %v2765 = vadd.f32 %v2719, %v1428
    %v2766 = vadd.f32 %v2758, %v1432
    %v2767 = vadd.f32 %v2760, %v1436
    %v2768 = vtanh.pop %v2764
    %v2769 = vtanh.pop %v2765
    %v2770 = vtanh.pop %v2766
    %v2771 = vtanh.pop %v2767
    %v2772 = vmul.f32 %v2768, 0.5
    %v2773 = vadd.f32 %v2772, 0.5
    %v2774 = vmul.f32 %v2769, 0.5
    %v2775 = vadd.f32 %v2774, 0.5
    %v2776 = vmul.f32 %v2771, 0.5
    %v2777 = vadd.f32 %v2776, 0.5
    %v2778 = vmul.f32 %v2775, %v2677
    %v2779 = vmul.f32 %v2773, %v2770
    %v2780 = vadd.f32 %v2778, %v2779
    %v2781 = vtanh.pop %v2780
    %v2782 = vmul.f32 %v2777, %v2781
    %v2783 = vpack.c.bf16 %v2782, %v2782
    %v2784 = vld [vmem:[%s4] sm:$0xf]
    %v2785 = vld [vmem:[%s4 + $0x4] sm:$0xf]
    %v2786 = vld [vmem:[%s4 + $0x8] sm:$0xf]
    %v2787 = vld [vmem:[%s4 + $0xc] sm:$0xf]
    %v2788 = vld [vmem:[%s4 + $0x10] sm:$0xf]
    %v2789 = vld [vmem:[%s4 + $0x14] sm:$0xf]
    %v2790 = vld [vmem:[%s4 + $0x18] sm:$0xf]
    %v2791 = vld [vmem:[%s4 + $0x1c] sm:$0xf]
    %v2792 = vld [vmem:[%s4 + $0x20] sm:$0xf]
    %v2793 = vld [vmem:[%s4 + $0x24] sm:$0xf]
    %v2794 = vld [vmem:[%s4 + $0x28] sm:$0xf]
    %v2795 = vld [vmem:[%s4 + $0x2c] sm:$0xf]
    %v2796 = vld [vmem:[%s4 + $0x30] sm:$0xf]
    %v2797 = vld [vmem:[%s4 + $0x34] sm:$0xf]
    %v2798 = vld [vmem:[%s4 + $0x38] sm:$0xf]
    %v2799 = vld [vmem:[%s4 + $0x3c] sm:$0xf]
    %v2800 = vld [vmem:[%s5] sm:$0x1]
    %v2802 = vlaneseq
    %v2803 = vshrl.u32 %v2802, 7
    %v2804 = vsub.s32 0, %v2803
    %v2805 = vrot.slane %v2800, %v2804
    %v2823 = vunpack.c.l.b16 %v2784
    %v2824 = vunpack.c.l.b16 %v2785
    %v2825 = vunpack.c.l.b16 %v2786
    %v2826 = vunpack.c.l.b16 %v2787
    %v2827 = vunpack.c.l.b16 %v2788
    %v2828 = vunpack.c.l.b16 %v2789
    %v2829 = vunpack.c.l.b16 %v2790
    %v2830 = vunpack.c.l.b16 %v2791
    %v2831 = vunpack.c.l.b16 %v2792
    %v2832 = vunpack.c.l.b16 %v2793
    %v2833 = vunpack.c.l.b16 %v2794
    %v2834 = vunpack.c.l.b16 %v2795
    %v2835 = vunpack.c.l.b16 %v2796
    %v2836 = vunpack.c.l.b16 %v2797
    %v2837 = vunpack.c.l.b16 %v2798
    %v2838 = vunpack.c.l.b16 %v2799
    %v2839 = vpack.c.b16 %v2824, %v2823
    %v2840 = vpack.c.b16 %v2826, %v2825
    %v2841 = vpack.c.b16 %v2828, %v2827
    %v2842 = vpack.c.b16 %v2830, %v2829
    %v2843 = vpack.c.b16 %v2832, %v2831
    %v2844 = vpack.c.b16 %v2834, %v2833
    %v2845 = vpack.c.b16 %v2836, %v2835
    %v2846 = vpack.c.b16 %v2838, %v2837
    %2855 = vmatprep.subr.bf16.mxu0 0
    %2856 = vmatpush1.bf16.msra.mxu0 %v2839
    %2857 = vmatprep.subr.bf16.mxu0 0
    %2858 = vmatpush1.bf16.msra.mxu0 %v2840
    %2859 = vmatprep.subr.bf16.mxu0 0
    %2860 = vmatpush1.bf16.msra.mxu0 %v2841
    %2861 = vmatprep.subr.bf16.mxu0 0
    %2862 = vmatpush1.bf16.msra.mxu0 %v2842
    %2863 = vmatprep.subr.bf16.mxu0 0
    %2864 = vmatpush1.bf16.msra.mxu0 %v2843
    %2865 = vmatprep.subr.bf16.mxu0 0
    %2866 = vmatpush1.bf16.msra.mxu0 %v2844
    %2867 = vmatprep.subr.bf16.mxu0 0
    %2868 = vmatpush1.bf16.msra.mxu0 %v2845
    %2869 = vmatprep.subr.bf16.mxu0 0
    %2870 = vmatpush1.bf16.msra.mxu0 %v2846
    %2871 = vmatprep.subr.bf16.mxu0 0
    %2872 = vmatpush1.bf16.msra.mxu0 0
    %2873 = vmatprep.subr.bf16.mxu0 0
    %2874 = vmatpush1.bf16.msra.mxu0 0
    %2875 = vmatprep.subr.bf16.mxu0 0
    %2876 = vmatpush1.bf16.msra.mxu0 0
    %2877 = vmatprep.subr.bf16.mxu0 0
    %2878 = vmatpush1.bf16.msra.mxu0 0
    %2879 = vmatprep.subr.bf16.mxu0 0
    %2880 = vmatpush1.bf16.msra.mxu0 0
    %2881 = vmatprep.subr.bf16.mxu0 0
    %2882 = vmatpush1.bf16.msra.mxu0 0
    %2883 = vmatprep.subr.bf16.mxu0 0
    %2884 = vmatpush1.bf16.msra.mxu0 0
    %2885 = vmatprep.subr.bf16.mxu0 0
    %2886 = vmatpush1.bf16.msra.mxu0 0
    %2887 = vmatprep.mubr.bf16.mxu0 0
    %2888 = vmatmul.mubr.bf16.gmra.mrb[0].mxu0 %v2783
    %v2889 = vpop.f32.mrb[0].mxu0
    %v2890 = vadd.f32 %v2805, %v2889
    %v2891 = vpop.f32.mrb[0].mxu0
    %v2892 = vpop.f32.mrb[0].mxu0
    %v2893 = vpop.f32.mrb[0].mxu0
    %2894 = vdwg.mxu0
    %vm2895 = vcmask 58368
    %2896 = vst.msk [vmem:[#allocation5] sm:$0x3] %vm2895, %v2890
    // Predicated region
    $region30: #{tpu_custom_call.1} parent=1 // pred_check
      _
    $region31: #{tpu_custom_call.1} parent=1 // pred_check_branch
      %2898 = sbr.rel (0) target = $region33
    $region32: #{tpu_custom_call.1} parent=1 // pred_region
      %s2900 = ssub.s32 32, 32
      %2901 = vsyncadd [#allocation4], %s2900
      %s2903 = sshll.u32 [#allocation5], 4
      %s2904 = int_to_ptr.vmem [resolvable:$true] %s2903
      %2906 = dma.vmem_to_hbm [thread:$0]  %s2904, 32, %s6, [#allocation4]
    $region33: #{tpu_custom_call.1} parent=1 // pred_fallthru
      _
    // Predicated region
    $region34: #{tpu_custom_call.1} parent=1 // pred_check
      _
    $region35: #{tpu_custom_call.1} parent=1 // pred_check_branch
      %2908 = sbr.rel (0) target = $region37
    $region36: #{tpu_custom_call.1} parent=1 // pred_region
      %2909 = dma.done [#allocation4], 32
    $region37: #{tpu_custom_call.1} parent=1 // pred_fallthru
      _
    %2910 = vsyncpa [#allocation3], 1
    %2911 = vsyncpa [#allocation4], 1

</llo_original>
